<compile_context>
chip_gen: v7x
topology: tpu7x:2x2x1
jax: 0.10.0
libtpu: 0.0.40
codegen_flags: <defaults>
</compile_context>

<pallas_src>
import jax
import jax.numpy as jnp
from jax import lax
from jax.experimental import pallas as pl
from jax.experimental.pallas import tpu as pltpu

EPS = 1e-5
_KS = 3                             # 3x3 convs
_MM_DTYPE = jnp.bfloat16            # MXU operand / intermediate-activation dtype
_TILE_PIXELS = 512                  # output pixels per grid step (was 128)
_KCONCAT_MAX_C = 128                # below this, concat the 9 taps into one K=9*C dot
_VMEM_LIMIT_BYTES = 48 * 1024 * 1024


# --------------------- feature probe: minor-dim concatenation ----------------

def _probe_kconcat():
    """Feature-detect lane-dim (axis=-1) concatenation lowering in Mosaic."""
    def kern(a_ref, w_ref, o_ref):
        a = a_ref[...]
        cat = jnp.concatenate([a] * 9, axis=-1)
        o_ref[...] = jnp.dot(cat, w_ref[...], preferred_element_type=jnp.float32)

    try:
        a = jnp.ones((256, 8), _MM_DTYPE)
        w = jnp.ones((72, 16), _MM_DTYPE)
        out = pl.pallas_call(
            kern, out_shape=jax.ShapeDtypeStruct((256, 16), jnp.float32))(a, w)
        out = jax.block_until_ready(out)
        return bool(jnp.allclose(out, 72.0))
    except Exception:
        return False


_KCONCAT_OK = _probe_kconcat()


# ------------------------------ in-kernel conv --------------------------------

def _conv_taps(src, w_ref, taps, th, wo, use_kconcat):
    """3x3 conv as MXU dots over shifted in-VMEM windows.

    src         : (RT, Wq, C) bf16 value (already loaded from the block).
    w_ref       : (9, C, Cout) ref, or (9*C, Cout) ref when use_kconcat.
    taps        : static (row_offset, col_offset) per tap.
    Returns (th*wo, Cout) float32.

    Column-shifted views are hoisted (<= 3 second-minor-dim slices instead of
    9).  For small C the 9 taps are concatenated along K and issued as a single
    K=9*C dot; otherwise 9 dots seeded with the first tap (no zeros + add).
    """
    c = src.shape[-1]
    p = th * wo
    cols = {c0: src[:, c0:c0 + wo, :] for c0 in sorted({c0 for _, c0 in taps})}
    wins = [cols[c0][r0:r0 + th].reshape(p, c) for r0, c0 in taps]
    if use_kconcat:
        lhs = jnp.concatenate(wins, axis=-1)                      # (p, 9*C)
        return jnp.dot(lhs, w_ref[...], preferred_element_type=jnp.float32)
    acc = jnp.dot(wins[0], w_ref[0], preferred_element_type=jnp.float32)
    for t in range(1, len(taps)):
        acc = acc + jnp.dot(wins[t], w_ref[t],
                            preferred_element_type=jnp.float32)
    return acc


# ------------------- kernels for the two-call (stride=2) path -----------------

def _make_conv_bias_prelu_kernel(taps, th, wo, use_kc):
    def kernel(ph_ref, w_ref, b_ref, a_ref, o_ref):
        y = _conv_taps(ph_ref[0], w_ref, taps, th, wo, use_kc) + b_ref[...]
        o_ref[0] = jnp.where(y >= 0.0, y, y * a_ref[...]).astype(o_ref.dtype)
    return kernel


def _make_conv_bias_add_kernel(taps, th, wo, use_kc):
    def kernel(ph_ref, w_ref, b_ref, res_ref, o_ref):
        y = _conv_taps(ph_ref[0], w_ref, taps, th, wo, use_kc) + b_ref[...]
        o_ref[0] = (y + res_ref[0].astype(jnp.float32)).astype(o_ref.dtype)
    return kernel


def _make_conv_bias_down_add_kernel(taps, th, wo, use_kc):
    def kernel(ph_ref, w_ref, b_ref, xs_ref, wd_ref, bd_ref, o_ref):
        y = _conv_taps(ph_ref[0], w_ref, taps, th, wo, use_kc) + b_ref[...]
        res = jnp.dot(xs_ref[0], wd_ref[...],
                      preferred_element_type=jnp.float32) + bd_ref[...]
        o_ref[0] = (y + res).astype(o_ref.dtype)
    return kernel


def _conv3x3_pallas(ph, w, bias, *, mode, taps, th, wo, out_dtype, use_kc,
                    alpha=None, res=None, xs=None, wd=None, bd=None):
    g, rt, wq, cin = ph.shape
    cout = w.shape[-1]
    p = th * wo

    ph_spec = pl.BlockSpec((1, rt, wq, cin), lambda i: (i, 0, 0, 0))
    w_spec = pl.BlockSpec(w.shape, lambda i: (0,) * w.ndim)
    cvec_spec = pl.BlockSpec((1, cout), lambda i: (0, 0))

    if mode == "prelu":
        kernel = _make_conv_bias_prelu_kernel(taps, th, wo, use_kc)
        operands = (ph, w, bias, alpha)
        in_specs = [ph_spec, w_spec, cvec_spec, cvec_spec]
    elif mode == "add":
        kernel = _make_conv_bias_add_kernel(taps, th, wo, use_kc)
        operands = (ph, w, bias, res)
        in_specs = [ph_spec, w_spec, cvec_spec,
                    pl.BlockSpec((1, p, res.shape[-1]), lambda i: (i, 0, 0))]
    elif mode == "down_add":
        kernel = _make_conv_bias_down_add_kernel(taps, th, wo, use_kc)
        operands = (ph, w, bias, xs, wd, bd)
        in_specs = [ph_spec, w_spec, cvec_spec,
                    pl.BlockSpec((1, p, xs.shape[-1]), lambda i: (i, 0, 0)),
                    pl.BlockSpec(wd.shape, lambda i: (0, 0)),
                    cvec_spec]
    else:
        raise ValueError(mode)

    return pl.pallas_call(
        kernel,
        out_shape=jax.ShapeDtypeStruct((g, p, cout), out_dtype),
        grid=(g,),
        in_specs=in_specs,
        out_specs=pl.BlockSpec((1, p, cout), lambda i: (i, 0, 0)),
        compiler_params=pltpu.CompilerParams(
            dimension_semantics=("parallel",),
            vmem_limit_bytes=_VMEM_LIMIT_BYTES),
    )(*operands)


# ------------------------ fully fused stride-1 kernel -------------------------

def _make_fused_stride1_kernel(taps, th, wo1, H, W, NT, planes,
                               use_kc1, use_kc2, has_down):
    th1 = th + 2                       # conv1 output rows per tile (1-pixel halo)

    def kernel(x_ref, w1_ref, b1_ref, a_ref, w2_ref, b2_ref, *rest):
        if has_down:
            xs_ref, wd_ref, bd_ref, o_ref = rest
        else:
            res_ref, o_ref = rest
        row0 = (pl.program_id(0) % NT) * th          # first output row of this tile
        xin = x_ref[0]                                # (th+4, wo1+2, Cin) bf16

        # conv1 (bn2 folded) + bias + PReLU over the tile incl. the 1-pixel halo.
        h = _conv_taps(xin, w1_ref, taps, th1, wo1, use_kc1) + b1_ref[...]
        h = jnp.where(h >= 0.0, h, h * a_ref[...])
        h = h.reshape(th1, wo1, planes)

        # conv2's zero padding / tile halo: zero every h position that lies
        # outside the real (H, W) activation.
        rid = lax.broadcasted_iota(jnp.int32, (th1, wo1), 0) + (row0 - 1)
        cid = lax.broadcasted_iota(jnp.int32, (th1, wo1), 1) - 1
        valid = (rid >= 0) & (rid < H) & (cid >= 0) & (cid < W)
        h = (h * valid.astype(h.dtype)[:, :, None]).astype(_MM_DTYPE)

        # conv2 (bn3 folded) + residual (identity or fused 1x1-conv+BN).
        y = _conv_taps(h, w2_ref, taps, th, W, use_kc2) + b2_ref[...]
        if has_down:
            res = jnp.dot(xs_ref[0], wd_ref[...],
                          preferred_element_type=jnp.float32) + bd_ref[...]
        else:
            res = res_ref[0].astype(jnp.float32)
        o_ref[0] = (y + res).astype(o_ref.dtype)

    return kernel


def _fused_stride1_pallas(xt, w1, b1, alpha, w2, b2, *, th, wo1, H, W, NT,
                          planes, use_kc1, use_kc2, out_dtype,
                          res=None, xs=None, wd=None, bd=None):
    g = xt.shape[0]
    cin = xt.shape[-1]
    p = th * W
    taps = tuple((dy, dx) for dy in range(_KS) for dx in range(_KS))

    x_spec = pl.BlockSpec((1, th + 4, wo1 + 2, cin), lambda i: (i, 0, 0, 0))
    w1_spec = pl.BlockSpec(w1.shape, lambda i: (0,) * w1.ndim)
    w2_spec = pl.BlockSpec(w2.shape, lambda i: (0,) * w2.ndim)

    def vec(v):
        return pl.BlockSpec(v.shape, lambda i: (0, 0))

    has_down = res is None
    kernel = _make_fused_stride1_kernel(taps, th, wo1, H, W, NT, planes,
                                        use_kc1, use_kc2, has_down)
    if has_down:
        operands = (xt, w1, b1, alpha, w2, b2, xs, wd, bd)
        in_specs = [x_spec, w1_spec, vec(b1), vec(alpha), w2_spec, vec(b2),
                    pl.BlockSpec((1, p, xs.shape[-1]), lambda i: (i, 0, 0)),
                    pl.BlockSpec(wd.shape, lambda i: (0, 0)), vec(bd)]
    else:
        operands = (xt, w1, b1, alpha, w2, b2, res)
        in_specs = [x_spec, w1_spec, vec(b1), vec(alpha), w2_spec, vec(b2),
                    pl.BlockSpec((1, p, res.shape[-1]), lambda i: (i, 0, 0))]

    return pl.pallas_call(
        kernel,
        out_shape=jax.ShapeDtypeStruct((g, p, planes), out_dtype),
        grid=(g,),
        in_specs=in_specs,
        out_specs=pl.BlockSpec((1, p, planes), lambda i: (i, 0, 0)),
        compiler_params=pltpu.CompilerParams(
            dimension_semantics=("parallel",),
            vmem_limit_bytes=_VMEM_LIMIT_BYTES),
    )(*operands)


# --------------------------------- host glue ----------------------------------

def _bn_fold(bn):
    s = bn['gamma'] / jnp.sqrt(bn['var'] + EPS)
    t = bn['beta'] - bn['mean'] * s
    return s, t


def _pick_row_tile(ho, wo, max_pixels):
    """Largest row tile within the pixel budget, preferring P = th*wo % 8 == 0."""
    th = max(1, min(ho, max_pixels // max(wo, 1)))
    for cand in range(th, 0, -1):
        if (cand * wo) % 8 == 0:
            return cand
    return th


def _flat_taps(stride, th_in):
    """Static (row_offset, col_offset) per 3x3 tap into the flattened phase tensor."""
    taps = []
    for dy in range(_KS):
        for dx in range(_KS):
            pidx = (dy % stride) * stride + (dx % stride)
            taps.append((pidx * th_in + dy // stride, dx // stride))
    return tuple(taps)


def _phase_tiles(x, stride, max_pixels):
    """Zero-pad (pad=1), phase-decompose (stride x stride grids) and row-tile
    with halo, entirely in bf16.  Ragged row counts are handled with a padded
    tail tile (the caller crops output rows past Ho).

    x: (B, H, W, C).  Returns a (B*NT, S*S*TH_in, Wq, C) bf16 tensor plus the
    tiling geometry.  Total HBM footprint stays ~1x the activation.
    """
    B, H, W, C = x.shape
    pad = 1
    Hp, Wp = H + 2 * pad, W + 2 * pad
    Ho = (Hp - _KS) // stride + 1
    Wo = (Wp - _KS) // stride + 1
    o_max = (_KS - 1) // stride
    th = _pick_row_tile(Ho, Wo, max_pixels)
    NT = -(-Ho // th)                         # ceil-div (padded tail tile)
    th_in = th + o_max
    Hq = NT * th + o_max
    Wq = Wo + o_max

    xb = x.astype(_MM_DTYPE)
    xp = jnp.pad(xb, ((0, 0), (pad, stride * Hq - H - pad),
                      (pad, stride * Wq - W - pad), (0, 0)))
    phases = []
    for py in range(stride):
        for px in range(stride):
            phases.append(xp[:, py::stride, px::stride, :][:, :Hq, :Wq, :])
    ph = jnp.stack(phases, axis=1)            # (B, S*S, Hq, Wq, C)

    # TODO(synk): the halo row-tiling below duplicates ~(th_in/th)x rows in HBM;
    # for large maps fetch the window in-kernel (memory_space=pl.ANY + DMA).
    tiles = [ph[:, :, t * th: t * th + th_in] for t in range(NT)]
    pht = jnp.stack(tiles, axis=1)            # (B, NT, S*S, th_in, Wq, C)
    pht = pht.reshape(B * NT, stride * stride * th_in, Wq, C)
    return pht, dict(Ho=Ho, Wo=Wo, th=th, NT=NT, TH_in=th_in, Wq=Wq)


def init_params(key, inplanes, planes, dim_match):
    ks = jax.random.split(key, 8)

    def bn(k, c):
        k1, k2, k3, k4 = jax.random.split(k, 4)
        return dict(gamma=1.0 + 0.1 * jax.random.normal(k1, (c,), jnp.float32),
                    beta=0.1 * jax.random.normal(k2, (c,), jnp.float32),
                    mean=0.1 * jax.random.normal(k3, (c,), jnp.float32),
                    var=1.0 + 0.1 * jax.random.uniform(k4, (c,), jnp.float32))

    p = dict(
        bn1=bn(ks[0], inplanes),
        conv1=0.1 * jax.random.normal(ks[1], (planes, inplanes, 3, 3), jnp.float32),
        bn2=bn(ks[2], planes),
        alpha=0.25 * jnp.ones((planes,), jnp.float32),    # nn.PReLU(planes) default
        conv2=0.1 * jax.random.normal(ks[3], (planes, planes, 3, 3), jnp.float32),
        bn3=bn(ks[4], planes),
    )
    if not dim_match:
        p['convd'] = 0.1 * jax.random.normal(ks[5], (planes, inplanes, 1, 1),
                                             jnp.float32)
        p['bnd'] = bn(ks[6], planes)
    return p


def block_ir_forward(x_nchw, params, stride, dim_match,
                     tile_pixels=_TILE_PIXELS, fuse_stride1=True):
    # NCHW in/out (PyTorch convention); NHWC (channels on lanes) inside.
    x = jnp.transpose(x_nchw, (0, 2, 3, 1)).astype(jnp.float32)   # (B, H, W, Cin)
    B, H, W, Cin = x.shape
    planes = params['conv1'].shape[0]

    s1, t1 = _bn_fold(params['bn1'])
    s2, t2 = _bn_fold(params['bn2'])
    s3, t3 = _bn_fold(params['bn3'])

    # bn1 applied as a host-side affine (fused by XLA into the bf16 pad/tile
    # repack); avoids folding it into a pad value (-t1/s1 -> inf when gamma~0).
    y1 = x * s1 + t1

    w1 = params['conv1'].transpose(2, 3, 1, 0).reshape(_KS * _KS, Cin, planes)
    w1f = w1 * s2[None, None, :]                                   # fold bn2
    w2 = params['conv2'].transpose(2, 3, 1, 0).reshape(_KS * _KS, planes, planes)
    w2f = w2 * s3[None, None, :]                                   # fold bn3

    use_kc1 = _KCONCAT_OK and Cin < _KCONCAT_MAX_C
    use_kc2 = _KCONCAT_OK and planes < _KCONCAT_MAX_C
    if use_kc1:
        w1f = w1f.reshape(_KS * _KS * Cin, planes)
    if use_kc2:
        w2f = w2f.reshape(_KS * _KS * planes, planes)
    w1f = w1f.astype(_MM_DTYPE)
    w2f = w2f.astype(_MM_DTYPE)
    b1 = t2[None, :].astype(jnp.float32)
    b2 = t3[None, :].astype(jnp.float32)
    alpha = params['alpha'][None, :].astype(jnp.float32)

    if not dim_match:
        sd, td = _bn_fold(params['bnd'])
        wd = (params['convd'][:, :, 0, 0].T * sd[None, :]).astype(_MM_DTYPE)
        bd = td[None, :].astype(jnp.float32)

    if stride == 1 and fuse_stride1:
        # ------- fully fused path: one pallas_call for the whole block -------
        th = _pick_row_tile(H, W, tile_pixels)
        NT = -(-H // th)
        Hpad = NT * th
        wo1 = -(-(W + 2) // 8) * 8          # conv1 tile width, 8-aligned reshape
        y1b = y1.astype(_MM_DTYPE)
        yp = jnp.pad(y1b, ((0, 0), (2, Hpad - H + 2), (2, wo1 - W), (0, 0)))
        xt = jnp.stack([yp[:, t * th: t * th + th + 4] for t in range(NT)],
                       axis=1)
        xt = xt.reshape(B * NT, th + 4, wo1 + 2, Cin)

        if dim_match:
            assert Cin == planes, "dim_match=True requires inplanes == planes"
            res = jnp.pad(x, ((0, 0), (0, Hpad - H), (0, 0), (0, 0)))
            res = res.reshape(B * NT, th * W, Cin)
            out = _fused_stride1_pallas(
                xt, w1f, b1, alpha, w2f, b2, th=th, wo1=wo1, H=H, W=W, NT=NT,
                planes=planes, use_kc1=use_kc1, use_kc2=use_kc2,
                out_dtype=jnp.float32, res=res)
        else:
            xs = jnp.pad(x, ((0, 0), (0, Hpad - H), (0, 0), (0, 0)))
            xs = xs.reshape(B * NT, th * W, Cin).astype(_MM_DTYPE)
            out = _fused_stride1_pallas(
                xt, w1f, b1, alpha, w2f, b2, th=th, wo1=wo1, H=H, W=W, NT=NT,
                planes=planes, use_kc1=use_kc1, use_kc2=use_kc2,
                out_dtype=jnp.float32, xs=xs, wd=wd, bd=bd)
        out = out.reshape(B, Hpad, W, planes)[:, :H]
        return jnp.transpose(out, (0, 3, 1, 2))

    # ------- stride > 1 (or unfused): two pallas_calls ------------------------
    ph1, g1 = _phase_tiles(y1, 1, tile_pixels)
    taps1 = _flat_taps(1, g1['TH_in'])
    h = _conv3x3_pallas(ph1, w1f, b1, mode="prelu", taps=taps1, th=g1['th'],
                        wo=g1['Wo'], out_dtype=_MM_DTYPE, use_kc=use_kc1,
                        alpha=alpha)
    h = h.reshape(B, g1['NT'] * g1['th'], g1['Wo'], planes)[:, :g1['Ho']]

    ph2, g2 = _phase_tiles(h, stride, tile_pixels)
    taps2 = _flat_taps(stride, g2['TH_in'])
    Ho2, Wo2, th2, NT2 = g2['Ho'], g2['Wo'], g2['th'], g2['NT']
    G2, P2 = B * NT2, th2 * Wo2

    if dim_match:
        assert stride == 1 and Cin == planes, (
            "dim_match=True requires stride == 1 and inplanes == planes")
        res = jnp.pad(x, ((0, 0), (0, NT2 * th2 - Ho2), (0, 0), (0, 0)))
        res = res.reshape(G2, P2, Cin)
        out = _conv3x3_pallas(ph2, w2f, b2, mode="add", taps=taps2, th=th2,
                              wo=Wo2, out_dtype=jnp.float32, use_kc=use_kc2,
                              res=res)
    else:
        xs = x[:, ::stride, ::stride, :]
        xs = jnp.pad(xs, ((0, 0), (0, NT2 * th2 - Ho2), (0, 0), (0, 0)))
        xs = xs.reshape(G2, P2, Cin).astype(_MM_DTYPE)
        out = _conv3x3_pallas(ph2, w2f, b2, mode="down_add", taps=taps2, th=th2,
                              wo=Wo2, out_dtype=jnp.float32, use_kc=use_kc2,
                              xs=xs, wd=wd, bd=bd)

    out = out.reshape(B, NT2 * th2, Wo2, planes)[:, :Ho2]
    return jnp.transpose(out, (0, 3, 1, 2))


# ------------------------- pure-JAX reference (check) -------------------------

def ref_forward(x, params, stride, dim_match):
    def bn(z, p):
        s = p['gamma'] / jnp.sqrt(p['var'] + EPS)
        t = p['beta'] - p['mean'] * s
        return z * s[None, :, None, None] + t[None, :, None, None]

    def conv(z, w, st, pad):
        return jax.lax.conv_general_dilated(
            z, w, (st, st), ((pad, pad), (pad, pad)),
            dimension_numbers=('NCHW', 'OIHW', 'NCHW'),
            precision=jax.lax.Precision.HIGHEST)

    out = bn(x, params['bn1'])
    out = conv(out, params['conv1'], 1, 1)
    out = bn(out, params['bn2'])
    a = params['alpha'][None, :, None, None]
    out = jnp.where(out >= 0, out, a * out)
    out = conv(out, params['conv2'], stride, 1)
    out = bn(out, params['bn3'])
    if dim_match:
        res = x
    else:
        res = bn(conv(x, params['convd'], stride, 0), params['bnd'])
    return out + res


# ------------------------------------ main ------------------------------------

if __name__ == "__main__":
    key = jax.random.PRNGKey(0)
    kx, kp1, kp2 = jax.random.split(key, 3)

    x = jax.random.normal(kx, (2, 8, 16, 16), jnp.float32)    # NCHW, like PyTorch

    configs = [
        dict(inplanes=8, planes=16, stride=2, dim_match=False, pkey=kp1),
        dict(inplanes=8, planes=8, stride=1, dim_match=True, pkey=kp2),
    ]

    for cfg in configs:
        params = init_params(cfg['pkey'], cfg['inplanes'], cfg['planes'],
                             cfg['dim_match'])
        fwd = jax.jit(lambda xx, pp, s=cfg['stride'], d=cfg['dim_match']:
                      block_ir_forward(xx, pp, s, d))
        out = jax.block_until_ready(fwd(x, params))
        ref = ref_forward(x, params, cfg['stride'], cfg['dim_match'])
        assert out.shape == ref.shape, (out.shape, ref.shape)
        max_err = float(jnp.max(jnp.abs(out - ref)))
        # bf16 MXU operands (f32 accumulation) vs the f32 HIGHEST reference:
        # operand quantization bounds the deviation to a few 1e-3; 3e-2 gives
        # comfortable headroom while still catching real bugs.
        assert jnp.allclose(out, ref, atol=3e-2, rtol=3e-2), f"max abs err {max_err}"

    print("KERNEL_OK")
</pallas_src>

<mosaic_0001>
module attributes {stable_mosaic.version = 11 : i64} {
  func.func @kern(%arg0: memref<256x8xbf16, #tpu.memory_space<vmem>>, %arg1: memref<72x16xbf16, #tpu.memory_space<vmem>>, %arg2: memref<256x16xf32, #tpu.memory_space<vmem>>) attributes {dimension_semantics = [], scalar_prefetch = 0 : i64, scratch_operands = 0 : i64, tpu.core_type = #tpu.core_type<tc>} {
    %c0 = arith.constant 0 : index
    %c0_0 = arith.constant 0 : index
    %0 = vector.load %arg0[%c0, %c0_0] : memref<256x8xbf16, #tpu.memory_space<vmem>>, vector<256x8xbf16>
    %1 = tpu.concatenate %0, %0, %0, %0, %0, %0, %0, %0, %0 in 1 : vector<256x8xbf16>, vector<256x8xbf16>, vector<256x8xbf16>, vector<256x8xbf16>, vector<256x8xbf16>, vector<256x8xbf16>, vector<256x8xbf16>, vector<256x8xbf16>, vector<256x8xbf16> -> vector<256x72xbf16>
    %c0_1 = arith.constant 0 : index
    %c0_2 = arith.constant 0 : index
    %2 = vector.load %arg1[%c0_1, %c0_2] : memref<72x16xbf16, #tpu.memory_space<vmem>>, vector<72x16xbf16>
    %cst = arith.constant dense<0.000000e+00> : vector<256x16xf32>
    %3 = tpu.matmul %1, %2, %cst {dimension_numbers = #tpu.dot_dimension_numbers<[1], [0], [0], [1], [0, 0, 1, 1], [], []>} : vector<256x72xbf16>, vector<72x16xbf16>, vector<256x16xf32> -> vector<256x16xf32>
    %c0_3 = arith.constant 0 : index
    %c0_4 = arith.constant 0 : index
    %4 = vector.load %arg2[%c0_3, %c0_4] : memref<256x16xf32, #tpu.memory_space<vmem>>, vector<256x16xf32>
    tpu.vector_store %arg2[%c0_3, %c0_4], %3 {strides = array<i32>} : memref<256x16xf32, #tpu.memory_space<vmem>>, vector<256x16xf32>,
    return
  }
}

module attributes {stable_mosaic.version = 11 : i64} {
  func.func @kernel(%arg0: i32, %arg1: memref<1x18x18x8xbf16, #tpu.memory_space<vmem>>, %arg2: memref<9x8x16xbf16, #tpu.memory_space<vmem>>, %arg3: memref<1x16xf32, #tpu.memory_space<vmem>>, %arg4: memref<1x16xf32, #tpu.memory_space<vmem>>, %arg5: memref<1x256x16xbf16, #tpu.memory_space<vmem>>) attributes {dimension_semantics = [#tpu.dimension_semantics<parallel>], iteration_bounds = array<i64: 2>, scalar_prefetch = 0 : i64, scratch_operands = 0 : i64, tpu.core_type = #tpu.core_type<tc>, window_params = [{transform_indices = @transform_0, window_bounds = array<i64: 1, 18, 18, 8>}, {pipeline_mode = #tpu.pipeline_mode<synchronous>, transform_indices = @transform_1, window_bounds = array<i64: 9, 8, 16>}, {pipeline_mode = #tpu.pipeline_mode<synchronous>, transform_indices = @transform_2, window_bounds = array<i64: 1, 16>}, {pipeline_mode = #tpu.pipeline_mode<synchronous>, transform_indices = @transform_3, window_bounds = array<i64: 1, 16>}, {transform_indices = @transform_4, window_bounds = array<i64: 1, 256, 16>}]} {
    %c0 = arith.constant 0 : index
    %c0_0 = arith.constant 0 : index
    %c0_1 = arith.constant 0 : index
    %c0_2 = arith.constant 0 : index
    %0 = vector.load %arg1[%c0, %c0_0, %c0_1, %c0_2] : memref<1x18x18x8xbf16, #tpu.memory_space<vmem>>, vector<1x18x18x8xbf16>
    %1 = vector.shape_cast %0 : vector<1x18x18x8xbf16> to vector<18x18x8xbf16>
    %2 = vector.extract_strided_slice %1 {offsets = [0, 0, 0], sizes = [18, 16, 8], strides = [1, 1, 1]} : vector<18x18x8xbf16> to vector<18x16x8xbf16>
    %3 = vector.extract_strided_slice %1 {offsets = [0, 1, 0], sizes = [18, 16, 8], strides = [1, 1, 1]} : vector<18x18x8xbf16> to vector<18x16x8xbf16>
    %4 = vector.extract_strided_slice %1 {offsets = [0, 2, 0], sizes = [18, 16, 8], strides = [1, 1, 1]} : vector<18x18x8xbf16> to vector<18x16x8xbf16>
    %5 = vector.extract_strided_slice %2 {offsets = [0, 0, 0], sizes = [16, 16, 8], strides = [1, 1, 1]} : vector<18x16x8xbf16> to vector<16x16x8xbf16>
    %6 = vector.shape_cast %5 : vector<16x16x8xbf16> to vector<256x8xbf16>
    %7 = vector.extract_strided_slice %3 {offsets = [0, 0, 0], sizes = [16, 16, 8], strides = [1, 1, 1]} : vector<18x16x8xbf16> to vector<16x16x8xbf16>
    %8 = vector.shape_cast %7 : vector<16x16x8xbf16> to vector<256x8xbf16>
    %9 = vector.extract_strided_slice %4 {offsets = [0, 0, 0], sizes = [16, 16, 8], strides = [1, 1, 1]} : vector<18x16x8xbf16> to vector<16x16x8xbf16>
    %10 = vector.shape_cast %9 : vector<16x16x8xbf16> to vector<256x8xbf16>
    %11 = vector.extract_strided_slice %2 {offsets = [1, 0, 0], sizes = [16, 16, 8], strides = [1, 1, 1]} : vector<18x16x8xbf16> to vector<16x16x8xbf16>
    %12 = vector.shape_cast %11 : vector<16x16x8xbf16> to vector<256x8xbf16>
    %13 = vector.extract_strided_slice %3 {offsets = [1, 0, 0], sizes = [16, 16, 8], strides = [1, 1, 1]} : vector<18x16x8xbf16> to vector<16x16x8xbf16>
    %14 = vector.shape_cast %13 : vector<16x16x8xbf16> to vector<256x8xbf16>
    %15 = vector.extract_strided_slice %4 {offsets = [1, 0, 0], sizes = [16, 16, 8], strides = [1, 1, 1]} : vector<18x16x8xbf16> to vector<16x16x8xbf16>
    %16 = vector.shape_cast %15 : vector<16x16x8xbf16> to vector<256x8xbf16>
    %17 = vector.extract_strided_slice %2 {offsets = [2, 0, 0], sizes = [16, 16, 8], strides = [1, 1, 1]} : vector<18x16x8xbf16> to vector<16x16x8xbf16>
    %18 = vector.shape_cast %17 : vector<16x16x8xbf16> to vector<256x8xbf16>
    %19 = vector.extract_strided_slice %3 {offsets = [2, 0, 0], sizes = [16, 16, 8], strides = [1, 1, 1]} : vector<18x16x8xbf16> to vector<16x16x8xbf16>
    %20 = vector.shape_cast %19 : vector<16x16x8xbf16> to vector<256x8xbf16>
    %21 = vector.extract_strided_slice %4 {offsets = [2, 0, 0], sizes = [16, 16, 8], strides = [1, 1, 1]} : vector<18x16x8xbf16> to vector<16x16x8xbf16>
    %22 = vector.shape_cast %21 : vector<16x16x8xbf16> to vector<256x8xbf16>
    %c0_3 = arith.constant 0 : index
    %c0_4 = arith.constant 0 : index
    %c0_5 = arith.constant 0 : index
    %23 = vector.load %arg2[%c0_3, %c0_4, %c0_5] : memref<9x8x16xbf16, #tpu.memory_space<vmem>>, vector<1x8x16xbf16>
    %24 = vector.shape_cast %23 : vector<1x8x16xbf16> to vector<8x16xbf16>
    %cst = arith.constant dense<0.000000e+00> : vector<256x16xf32>
    %25 = tpu.matmul %6, %24, %cst {dimension_numbers = #tpu.dot_dimension_numbers<[1], [0], [0], [1], [0, 0, 1, 1], [], []>} : vector<256x8xbf16>, vector<8x16xbf16>, vector<256x16xf32> -> vector<256x16xf32>
    %c1 = arith.constant 1 : index
    %c0_6 = arith.constant 0 : index
    %c0_7 = arith.constant 0 : index
    %26 = vector.load %arg2[%c1, %c0_6, %c0_7] : memref<9x8x16xbf16, #tpu.memory_space<vmem>>, vector<1x8x16xbf16>
    %27 = vector.shape_cast %26 : vector<1x8x16xbf16> to vector<8x16xbf16>
    %cst_8 = arith.constant dense<0.000000e+00> : vector<256x16xf32>
    %28 = tpu.matmul %8, %27, %cst_8 {dimension_numbers = #tpu.dot_dimension_numbers<[1], [0], [0], [1], [0, 0, 1, 1], [], []>} : vector<256x8xbf16>, vector<8x16xbf16>, vector<256x16xf32> -> vector<256x16xf32>
    %29 = arith.addf %25, %28 : vector<256x16xf32>
    %c2 = arith.constant 2 : index
    %c0_9 = arith.constant 0 : index
    %c0_10 = arith.constant 0 : index
    %30 = vector.load %arg2[%c2, %c0_9, %c0_10] : memref<9x8x16xbf16, #tpu.memory_space<vmem>>, vector<1x8x16xbf16>
    %31 = vector.shape_cast %30 : vector<1x8x16xbf16> to vector<8x16xbf16>
    %cst_11 = arith.constant dense<0.000000e+00> : vector<256x16xf32>
    %32 = tpu.matmul %10, %31, %cst_11 {dimension_numbers = #tpu.dot_dimension_numbers<[1], [0], [0], [1], [0, 0, 1, 1], [], []>} : vector<256x8xbf16>, vector<8x16xbf16>, vector<256x16xf32> -> vector<256x16xf32>
    %33 = arith.addf %29, %32 : vector<256x16xf32>
    %c3 = arith.constant 3 : index
    %c0_12 = arith.constant 0 : index
    %c0_13 = arith.constant 0 : index
    %34 = vector.load %arg2[%c3, %c0_12, %c0_13] : memref<9x8x16xbf16, #tpu.memory_space<vmem>>, vector<1x8x16xbf16>
    %35 = vector.shape_cast %34 : vector<1x8x16xbf16> to vector<8x16xbf16>
    %cst_14 = arith.constant dense<0.000000e+00> : vector<256x16xf32>
    %36 = tpu.matmul %12, %35, %cst_14 {dimension_numbers = #tpu.dot_dimension_numbers<[1], [0], [0], [1], [0, 0, 1, 1], [], []>} : vector<256x8xbf16>, vector<8x16xbf16>, vector<256x16xf32> -> vector<256x16xf32>
    %37 = arith.addf %33, %36 : vector<256x16xf32>
    %c4 = arith.constant 4 : index
    %c0_15 = arith.constant 0 : index
    %c0_16 = arith.constant 0 : index
    %38 = vector.load %arg2[%c4, %c0_15, %c0_16] : memref<9x8x16xbf16, #tpu.memory_space<vmem>>, vector<1x8x16xbf16>
    %39 = vector.shape_cast %38 : vector<1x8x16xbf16> to vector<8x16xbf16>
    %cst_17 = arith.constant dense<0.000000e+00> : vector<256x16xf32>
    %40 = tpu.matmul %14, %39, %cst_17 {dimension_numbers = #tpu.dot_dimension_numbers<[1], [0], [0], [1], [0, 0, 1, 1], [], []>} : vector<256x8xbf16>, vector<8x16xbf16>, vector<256x16xf32> -> vector<256x16xf32>
    %41 = arith.addf %37, %40 : vector<256x16xf32>
    %c5 = arith.constant 5 : index
    %c0_18 = arith.constant 0 : index
    %c0_19 = arith.constant 0 : index
    %42 = vector.load %arg2[%c5, %c0_18, %c0_19] : memref<9x8x16xbf16, #tpu.memory_space<vmem>>, vector<1x8x16xbf16>
    %43 = vector.shape_cast %42 : vector<1x8x16xbf16> to vector<8x16xbf16>
    %cst_20 = arith.constant dense<0.000000e+00> : vector<256x16xf32>
    %44 = tpu.matmul %16, %43, %cst_20 {dimension_numbers = #tpu.dot_dimension_numbers<[1], [0], [0], [1], [0, 0, 1, 1], [], []>} : vector<256x8xbf16>, vector<8x16xbf16>, vector<256x16xf32> -> vector<256x16xf32>
    %45 = arith.addf %41, %44 : vector<256x16xf32>
    %c6 = arith.constant 6 : index
    %c0_21 = arith.constant 0 : index
    %c0_22 = arith.constant 0 : index
    %46 = vector.load %arg2[%c6, %c0_21, %c0_22] : memref<9x8x16xbf16, #tpu.memory_space<vmem>>, vector<1x8x16xbf16>
    %47 = vector.shape_cast %46 : vector<1x8x16xbf16> to vector<8x16xbf16>
    %cst_23 = arith.constant dense<0.000000e+00> : vector<256x16xf32>
    %48 = tpu.matmul %18, %47, %cst_23 {dimension_numbers = #tpu.dot_dimension_numbers<[1], [0], [0], [1], [0, 0, 1, 1], [], []>} : vector<256x8xbf16>, vector<8x16xbf16>, vector<256x16xf32> -> vector<256x16xf32>
    %49 = arith.addf %45, %48 : vector<256x16xf32>
    %c7 = arith.constant 7 : index
    %c0_24 = arith.constant 0 : index
    %c0_25 = arith.constant 0 : index
    %50 = vector.load %arg2[%c7, %c0_24, %c0_25] : memref<9x8x16xbf16, #tpu.memory_space<vmem>>, vector<1x8x16xbf16>
    %51 = vector.shape_cast %50 : vector<1x8x16xbf16> to vector<8x16xbf16>
    %cst_26 = arith.constant dense<0.000000e+00> : vector<256x16xf32>
    %52 = tpu.matmul %20, %51, %cst_26 {dimension_numbers = #tpu.dot_dimension_numbers<[1], [0], [0], [1], [0, 0, 1, 1], [], []>} : vector<256x8xbf16>, vector<8x16xbf16>, vector<256x16xf32> -> vector<256x16xf32>
    %53 = arith.addf %49, %52 : vector<256x16xf32>
    %c8 = arith.constant 8 : index
    %c0_27 = arith.constant 0 : index
    %c0_28 = arith.constant 0 : index
    %54 = vector.load %arg2[%c8, %c0_27, %c0_28] : memref<9x8x16xbf16, #tpu.memory_space<vmem>>, vector<1x8x16xbf16>
    %55 = vector.shape_cast %54 : vector<1x8x16xbf16> to vector<8x16xbf16>
    %cst_29 = arith.constant dense<0.000000e+00> : vector<256x16xf32>
    %56 = tpu.matmul %22, %55, %cst_29 {dimension_numbers = #tpu.dot_dimension_numbers<[1], [0], [0], [1], [0, 0, 1, 1], [], []>} : vector<256x8xbf16>, vector<8x16xbf16>, vector<256x16xf32> -> vector<256x16xf32>
    %57 = arith.addf %53, %56 : vector<256x16xf32>
    %c0_30 = arith.constant 0 : index
    %c0_31 = arith.constant 0 : index
    %58 = vector.load %arg3[%c0_30, %c0_31] : memref<1x16xf32, #tpu.memory_space<vmem>>, vector<1x16xf32>
    %59 = vector.broadcast %58 : vector<1x16xf32> to vector<256x16xf32>
    %60 = arith.addf %57, %59 : vector<256x16xf32>
    %cst_32 = arith.constant 0.000000e+00 : f32
    %61 = vector.broadcast %cst_32 : f32 to vector<256x16xf32>
    %62 = arith.cmpf oge, %60, %61 : vector<256x16xf32>
    %c0_33 = arith.constant 0 : index
    %c0_34 = arith.constant 0 : index
    %63 = vector.load %arg4[%c0_33, %c0_34] : memref<1x16xf32, #tpu.memory_space<vmem>>, vector<1x16xf32>
    %64 = vector.broadcast %63 : vector<1x16xf32> to vector<256x16xf32>
    %65 = arith.mulf %60, %64 : vector<256x16xf32>
    %66 = arith.select %62, %60, %65 : vector<256x16xi1>, vector<256x16xf32>
    %67 = arith.truncf %66 : vector<256x16xf32> to vector<256x16xbf16>
    %c0_35 = arith.constant 0 : index
    %c0_36 = arith.constant 0 : index
    %c0_37 = arith.constant 0 : index
    %68 = vector.load %arg5[%c0_35, %c0_36, %c0_37] : memref<1x256x16xbf16, #tpu.memory_space<vmem>>, vector<1x256x16xbf16>
    %69 = vector.shape_cast %68 : vector<1x256x16xbf16> to vector<256x16xbf16>
    %70 = vector.shape_cast %67 : vector<256x16xbf16> to vector<1x256x16xbf16>
    tpu.vector_store %arg5[%c0_35, %c0_36, %c0_37], %70 {strides = array<i32>} : memref<1x256x16xbf16, #tpu.memory_space<vmem>>, vector<1x256x16xbf16>,
    return
  }
  func.func @transform_0(%arg0: i32) -> (i32, i32, i32, i32) {
    %c0_i32 = arith.constant 0 : i32
    %c0_i32_0 = arith.constant 0 : i32
    %c0_i32_1 = arith.constant 0 : i32
    %c0_i32_2 = arith.constant 0 : i32
    return %arg0, %c0_i32, %c0_i32_0, %c0_i32_1 : i32, i32, i32, i32
  }
  func.func @transform_1(%arg0: i32) -> (i32, i32, i32) {
    %c0_i32 = arith.constant 0 : i32
    %c0_i32_0 = arith.constant 0 : i32
    %c0_i32_1 = arith.constant 0 : i32
    %c0_i32_2 = arith.constant 0 : i32
    return %c0_i32, %c0_i32_0, %c0_i32_1 : i32, i32, i32
  }
  func.func @transform_2(%arg0: i32) -> (i32, i32) {
    %c0_i32 = arith.constant 0 : i32
    %c0_i32_0 = arith.constant 0 : i32
    %c0_i32_1 = arith.constant 0 : i32
    return %c0_i32, %c0_i32_0 : i32, i32
  }
  func.func @transform_3(%arg0: i32) -> (i32, i32) {
    %c0_i32 = arith.constant 0 : i32
    %c0_i32_0 = arith.constant 0 : i32
    %c0_i32_1 = arith.constant 0 : i32
    return %c0_i32, %c0_i32_0 : i32, i32
  }
  func.func @transform_4(%arg0: i32) -> (i32, i32, i32) {
    %c0_i32 = arith.constant 0 : i32
    %c0_i32_0 = arith.constant 0 : i32
    %c0_i32_1 = arith.constant 0 : i32
    return %arg0, %c0_i32, %c0_i32_0 : i32, i32, i32
  }
}

module attributes {stable_mosaic.version = 11 : i64} {
  func.func @kernel(%arg0: i32, %arg1: memref<1x36x9x16xbf16, #tpu.memory_space<vmem>>, %arg2: memref<9x16x16xbf16, #tpu.memory_space<vmem>>, %arg3: memref<1x16xf32, #tpu.memory_space<vmem>>, %arg4: memref<1x64x8xbf16, #tpu.memory_space<vmem>>, %arg5: memref<8x16xbf16, #tpu.memory_space<vmem>>, %arg6: memref<1x16xf32, #tpu.memory_space<vmem>>, %arg7: memref<1x64x16xf32, #tpu.memory_space<vmem>>) attributes {dimension_semantics = [#tpu.dimension_semantics<parallel>], iteration_bounds = array<i64: 2>, scalar_prefetch = 0 : i64, scratch_operands = 0 : i64, tpu.core_type = #tpu.core_type<tc>, window_params = [{transform_indices = @transform_0, window_bounds = array<i64: 1, 36, 9, 16>}, {pipeline_mode = #tpu.pipeline_mode<synchronous>, transform_indices = @transform_1, window_bounds = array<i64: 9, 16, 16>}, {pipeline_mode = #tpu.pipeline_mode<synchronous>, transform_indices = @transform_2, window_bounds = array<i64: 1, 16>}, {transform_indices = @transform_3, window_bounds = array<i64: 1, 64, 8>}, {pipeline_mode = #tpu.pipeline_mode<synchronous>, transform_indices = @transform_4, window_bounds = array<i64: 8, 16>}, {pipeline_mode = #tpu.pipeline_mode<synchronous>, transform_indices = @transform_5, window_bounds = array<i64: 1, 16>}, {transform_indices = @transform_6, window_bounds = array<i64: 1, 64, 16>}]} {
    %c0 = arith.constant 0 : index
    %c0_0 = arith.constant 0 : index
    %c0_1 = arith.constant 0 : index
    %c0_2 = arith.constant 0 : index
    %0 = vector.load %arg1[%c0, %c0_0, %c0_1, %c0_2] : memref<1x36x9x16xbf16, #tpu.memory_space<vmem>>, vector<1x36x9x16xbf16>
    %1 = vector.shape_cast %0 : vector<1x36x9x16xbf16> to vector<36x9x16xbf16>
    %2 = vector.extract_strided_slice %1 {offsets = [0, 0, 0], sizes = [36, 8, 16], strides = [1, 1, 1]} : vector<36x9x16xbf16> to vector<36x8x16xbf16>
    %3 = vector.extract_strided_slice %1 {offsets = [0, 1, 0], sizes = [36, 8, 16], strides = [1, 1, 1]} : vector<36x9x16xbf16> to vector<36x8x16xbf16>
    %4 = vector.extract_strided_slice %2 {offsets = [0, 0, 0], sizes = [8, 8, 16], strides = [1, 1, 1]} : vector<36x8x16xbf16> to vector<8x8x16xbf16>
    %5 = vector.shape_cast %4 : vector<8x8x16xbf16> to vector<64x16xbf16>
    %6 = vector.extract_strided_slice %2 {offsets = [9, 0, 0], sizes = [8, 8, 16], strides = [1, 1, 1]} : vector<36x8x16xbf16> to vector<8x8x16xbf16>
    %7 = vector.shape_cast %6 : vector<8x8x16xbf16> to vector<64x16xbf16>
    %8 = vector.extract_strided_slice %3 {offsets = [0, 0, 0], sizes = [8, 8, 16], strides = [1, 1, 1]} : vector<36x8x16xbf16> to vector<8x8x16xbf16>
    %9 = vector.shape_cast %8 : vector<8x8x16xbf16> to vector<64x16xbf16>
    %10 = vector.extract_strided_slice %2 {offsets = [18, 0, 0], sizes = [8, 8, 16], strides = [1, 1, 1]} : vector<36x8x16xbf16> to vector<8x8x16xbf16>
    %11 = vector.shape_cast %10 : vector<8x8x16xbf16> to vector<64x16xbf16>
    %12 = vector.extract_strided_slice %2 {offsets = [27, 0, 0], sizes = [8, 8, 16], strides = [1, 1, 1]} : vector<36x8x16xbf16> to vector<8x8x16xbf16>
    %13 = vector.shape_cast %12 : vector<8x8x16xbf16> to vector<64x16xbf16>
    %14 = vector.extract_strided_slice %3 {offsets = [18, 0, 0], sizes = [8, 8, 16], strides = [1, 1, 1]} : vector<36x8x16xbf16> to vector<8x8x16xbf16>
    %15 = vector.shape_cast %14 : vector<8x8x16xbf16> to vector<64x16xbf16>
    %16 = vector.extract_strided_slice %2 {offsets = [1, 0, 0], sizes = [8, 8, 16], strides = [1, 1, 1]} : vector<36x8x16xbf16> to vector<8x8x16xbf16>
    %17 = vector.shape_cast %16 : vector<8x8x16xbf16> to vector<64x16xbf16>
    %18 = vector.extract_strided_slice %2 {offsets = [10, 0, 0], sizes = [8, 8, 16], strides = [1, 1, 1]} : vector<36x8x16xbf16> to vector<8x8x16xbf16>
    %19 = vector.shape_cast %18 : vector<8x8x16xbf16> to vector<64x16xbf16>
    %20 = vector.extract_strided_slice %3 {offsets = [1, 0, 0], sizes = [8, 8, 16], strides = [1, 1, 1]} : vector<36x8x16xbf16> to vector<8x8x16xbf16>
    %21 = vector.shape_cast %20 : vector<8x8x16xbf16> to vector<64x16xbf16>
    %c0_3 = arith.constant 0 : index
    %c0_4 = arith.constant 0 : index
    %c0_5 = arith.constant 0 : index
    %22 = vector.load %arg2[%c0_3, %c0_4, %c0_5] : memref<9x16x16xbf16, #tpu.memory_space<vmem>>, vector<1x16x16xbf16>
    %23 = vector.shape_cast %22 : vector<1x16x16xbf16> to vector<16x16xbf16>
    %cst = arith.constant dense<0.000000e+00> : vector<64x16xf32>
    %24 = tpu.matmul %5, %23, %cst {dimension_numbers = #tpu.dot_dimension_numbers<[1], [0], [0], [1], [0, 0, 1, 1], [], []>} : vector<64x16xbf16>, vector<16x16xbf16>, vector<64x16xf32> -> vector<64x16xf32>
    %c1 = arith.constant 1 : index
    %c0_6 = arith.constant 0 : index
    %c0_7 = arith.constant 0 : index
    %25 = vector.load %arg2[%c1, %c0_6, %c0_7] : memref<9x16x16xbf16, #tpu.memory_space<vmem>>, vector<1x16x16xbf16>
    %26 = vector.shape_cast %25 : vector<1x16x16xbf16> to vector<16x16xbf16>
    %cst_8 = arith.constant dense<0.000000e+00> : vector<64x16xf32>
    %27 = tpu.matmul %7, %26, %cst_8 {dimension_numbers = #tpu.dot_dimension_numbers<[1], [0], [0], [1], [0, 0, 1, 1], [], []>} : vector<64x16xbf16>, vector<16x16xbf16>, vector<64x16xf32> -> vector<64x16xf32>
    %28 = arith.addf %24, %27 : vector<64x16xf32>
    %c2 = arith.constant 2 : index
    %c0_9 = arith.constant 0 : index
    %c0_10 = arith.constant 0 : index
    %29 = vector.load %arg2[%c2, %c0_9, %c0_10] : memref<9x16x16xbf16, #tpu.memory_space<vmem>>, vector<1x16x16xbf16>
    %30 = vector.shape_cast %29 : vector<1x16x16xbf16> to vector<16x16xbf16>
    %cst_11 = arith.constant dense<0.000000e+00> : vector<64x16xf32>
    %31 = tpu.matmul %9, %30, %cst_11 {dimension_numbers = #tpu.dot_dimension_numbers<[1], [0], [0], [1], [0, 0, 1, 1], [], []>} : vector<64x16xbf16>, vector<16x16xbf16>, vector<64x16xf32> -> vector<64x16xf32>
    %32 = arith.addf %28, %31 : vector<64x16xf32>
    %c3 = arith.constant 3 : index
    %c0_12 = arith.constant 0 : index
    %c0_13 = arith.constant 0 : index
    %33 = vector.load %arg2[%c3, %c0_12, %c0_13] : memref<9x16x16xbf16, #tpu.memory_space<vmem>>, vector<1x16x16xbf16>
    %34 = vector.shape_cast %33 : vector<1x16x16xbf16> to vector<16x16xbf16>
    %cst_14 = arith.constant dense<0.000000e+00> : vector<64x16xf32>
    %35 = tpu.matmul %11, %34, %cst_14 {dimension_numbers = #tpu.dot_dimension_numbers<[1], [0], [0], [1], [0, 0, 1, 1], [], []>} : vector<64x16xbf16>, vector<16x16xbf16>, vector<64x16xf32> -> vector<64x16xf32>
    %36 = arith.addf %32, %35 : vector<64x16xf32>
    %c4 = arith.constant 4 : index
    %c0_15 = arith.constant 0 : index
    %c0_16 = arith.constant 0 : index
    %37 = vector.load %arg2[%c4, %c0_15, %c0_16] : memref<9x16x16xbf16, #tpu.memory_space<vmem>>, vector<1x16x16xbf16>
    %38 = vector.shape_cast %37 : vector<1x16x16xbf16> to vector<16x16xbf16>
    %cst_17 = arith.constant dense<0.000000e+00> : vector<64x16xf32>
    %39 = tpu.matmul %13, %38, %cst_17 {dimension_numbers = #tpu.dot_dimension_numbers<[1], [0], [0], [1], [0, 0, 1, 1], [], []>} : vector<64x16xbf16>, vector<16x16xbf16>, vector<64x16xf32> -> vector<64x16xf32>
    %40 = arith.addf %36, %39 : vector<64x16xf32>
    %c5 = arith.constant 5 : index
    %c0_18 = arith.constant 0 : index
    %c0_19 = arith.constant 0 : index
    %41 = vector.load %arg2[%c5, %c0_18, %c0_19] : memref<9x16x16xbf16, #tpu.memory_space<vmem>>, vector<1x16x16xbf16>
    %42 = vector.shape_cast %41 : vector<1x16x16xbf16> to vector<16x16xbf16>
    %cst_20 = arith.constant dense<0.000000e+00> : vector<64x16xf32>
    %43 = tpu.matmul %15, %42, %cst_20 {dimension_numbers = #tpu.dot_dimension_numbers<[1], [0], [0], [1], [0, 0, 1, 1], [], []>} : vector<64x16xbf16>, vector<16x16xbf16>, vector<64x16xf32> -> vector<64x16xf32>
    %44 = arith.addf %40, %43 : vector<64x16xf32>
    %c6 = arith.constant 6 : index
    %c0_21 = arith.constant 0 : index
    %c0_22 = arith.constant 0 : index
    %45 = vector.load %arg2[%c6, %c0_21, %c0_22] : memref<9x16x16xbf16, #tpu.memory_space<vmem>>, vector<1x16x16xbf16>
    %46 = vector.shape_cast %45 : vector<1x16x16xbf16> to vector<16x16xbf16>
    %cst_23 = arith.constant dense<0.000000e+00> : vector<64x16xf32>
    %47 = tpu.matmul %17, %46, %cst_23 {dimension_numbers = #tpu.dot_dimension_numbers<[1], [0], [0], [1], [0, 0, 1, 1], [], []>} : vector<64x16xbf16>, vector<16x16xbf16>, vector<64x16xf32> -> vector<64x16xf32>
    %48 = arith.addf %44, %47 : vector<64x16xf32>
    %c7 = arith.constant 7 : index
    %c0_24 = arith.constant 0 : index
    %c0_25 = arith.constant 0 : index
    %49 = vector.load %arg2[%c7, %c0_24, %c0_25] : memref<9x16x16xbf16, #tpu.memory_space<vmem>>, vector<1x16x16xbf16>
    %50 = vector.shape_cast %49 : vector<1x16x16xbf16> to vector<16x16xbf16>
    %cst_26 = arith.constant dense<0.000000e+00> : vector<64x16xf32>
    %51 = tpu.matmul %19, %50, %cst_26 {dimension_numbers = #tpu.dot_dimension_numbers<[1], [0], [0], [1], [0, 0, 1, 1], [], []>} : vector<64x16xbf16>, vector<16x16xbf16>, vector<64x16xf32> -> vector<64x16xf32>
    %52 = arith.addf %48, %51 : vector<64x16xf32>
    %c8 = arith.constant 8 : index
    %c0_27 = arith.constant 0 : index
    %c0_28 = arith.constant 0 : index
    %53 = vector.load %arg2[%c8, %c0_27, %c0_28] : memref<9x16x16xbf16, #tpu.memory_space<vmem>>, vector<1x16x16xbf16>
    %54 = vector.shape_cast %53 : vector<1x16x16xbf16> to vector<16x16xbf16>
    %cst_29 = arith.constant dense<0.000000e+00> : vector<64x16xf32>
    %55 = tpu.matmul %21, %54, %cst_29 {dimension_numbers = #tpu.dot_dimension_numbers<[1], [0], [0], [1], [0, 0, 1, 1], [], []>} : vector<64x16xbf16>, vector<16x16xbf16>, vector<64x16xf32> -> vector<64x16xf32>
    %56 = arith.addf %52, %55 : vector<64x16xf32>
    %c0_30 = arith.constant 0 : index
    %c0_31 = arith.constant 0 : index
    %57 = vector.load %arg3[%c0_30, %c0_31] : memref<1x16xf32, #tpu.memory_space<vmem>>, vector<1x16xf32>
    %58 = vector.broadcast %57 : vector<1x16xf32> to vector<64x16xf32>
    %59 = arith.addf %56, %58 : vector<64x16xf32>
    %c0_32 = arith.constant 0 : index
    %c0_33 = arith.constant 0 : index
    %c0_34 = arith.constant 0 : index
    %60 = vector.load %arg4[%c0_32, %c0_33, %c0_34] : memref<1x64x8xbf16, #tpu.memory_space<vmem>>, vector<1x64x8xbf16>
    %61 = vector.shape_cast %60 : vector<1x64x8xbf16> to vector<64x8xbf16>
    %c0_35 = arith.constant 0 : index
    %c0_36 = arith.constant 0 : index
    %62 = vector.load %arg5[%c0_35, %c0_36] : memref<8x16xbf16, #tpu.memory_space<vmem>>, vector<8x16xbf16>
    %cst_37 = arith.constant dense<0.000000e+00> : vector<64x16xf32>
    %63 = tpu.matmul %61, %62, %cst_37 {dimension_numbers = #tpu.dot_dimension_numbers<[1], [0], [0], [1], [0, 0, 1, 1], [], []>} : vector<64x8xbf16>, vector<8x16xbf16>, vector<64x16xf32> -> vector<64x16xf32>
    %c0_38 = arith.constant 0 : index
    %c0_39 = arith.constant 0 : index
    %64 = vector.load %arg6[%c0_38, %c0_39] : memref<1x16xf32, #tpu.memory_space<vmem>>, vector<1x16xf32>
    %65 = vector.broadcast %64 : vector<1x16xf32> to vector<64x16xf32>
    %66 = arith.addf %63, %65 : vector<64x16xf32>
    %67 = arith.addf %59, %66 : vector<64x16xf32>
    %c0_40 = arith.constant 0 : index
    %c0_41 = arith.constant 0 : index
    %c0_42 = arith.constant 0 : index
    %68 = vector.load %arg7[%c0_40, %c0_41, %c0_42] : memref<1x64x16xf32, #tpu.memory_space<vmem>>, vector<1x64x16xf32>
    %69 = vector.shape_cast %68 : vector<1x64x16xf32> to vector<64x16xf32>
    %70 = vector.shape_cast %67 : vector<64x16xf32> to vector<1x64x16xf32>
    tpu.vector_store %arg7[%c0_40, %c0_41, %c0_42], %70 {strides = array<i32>} : memref<1x64x16xf32, #tpu.memory_space<vmem>>, vector<1x64x16xf32>,
    return
  }
  func.func @transform_0(%arg0: i32) -> (i32, i32, i32, i32) {
    %c0_i32 = arith.constant 0 : i32
    %c0_i32_0 = arith.constant 0 : i32
    %c0_i32_1 = arith.constant 0 : i32
    %c0_i32_2 = arith.constant 0 : i32
    return %arg0, %c0_i32, %c0_i32_0, %c0_i32_1 : i32, i32, i32, i32
  }
  func.func @transform_1(%arg0: i32) -> (i32, i32, i32) {
    %c0_i32 = arith.constant 0 : i32
    %c0_i32_0 = arith.constant 0 : i32
    %c0_i32_1 = arith.constant 0 : i32
    %c0_i32_2 = arith.constant 0 : i32
    return %c0_i32, %c0_i32_0, %c0_i32_1 : i32, i32, i32
  }
  func.func @transform_2(%arg0: i32) -> (i32, i32) {
    %c0_i32 = arith.constant 0 : i32
    %c0_i32_0 = arith.constant 0 : i32
    %c0_i32_1 = arith.constant 0 : i32
    return %c0_i32, %c0_i32_0 : i32, i32
  }
  func.func @transform_3(%arg0: i32) -> (i32, i32, i32) {
    %c0_i32 = arith.constant 0 : i32
    %c0_i32_0 = arith.constant 0 : i32
    %c0_i32_1 = arith.constant 0 : i32
    return %arg0, %c0_i32, %c0_i32_0 : i32, i32, i32
  }
  func.func @transform_4(%arg0: i32) -> (i32, i32) {
    %c0_i32 = arith.constant 0 : i32
    %c0_i32_0 = arith.constant 0 : i32
    %c0_i32_1 = arith.constant 0 : i32
    return %c0_i32, %c0_i32_0 : i32, i32
  }
  func.func @transform_5(%arg0: i32) -> (i32, i32) {
    %c0_i32 = arith.constant 0 : i32
    %c0_i32_0 = arith.constant 0 : i32
    %c0_i32_1 = arith.constant 0 : i32
    return %c0_i32, %c0_i32_0 : i32, i32
  }
  func.func @transform_6(%arg0: i32) -> (i32, i32, i32) {
    %c0_i32 = arith.constant 0 : i32
    %c0_i32_0 = arith.constant 0 : i32
    %c0_i32_1 = arith.constant 0 : i32
    return %arg0, %c0_i32, %c0_i32_0 : i32, i32, i32
  }
}

</mosaic_0001>

<llo_original>
// kernel: tpu_custom_call.1
$region0: #{tpu_custom_call.1}
  #allocation0 [shape = 'u32[]', space=smem, size = 0x4, offset = 0x4, fixed_abs, tag = 'smem constant byte address 0x4 - core index']
  #allocation1 [shape = 'u32[144,128]{1,0:T(1,128)}', space=vmem, size = 0x12000, scoped, tag = 'internal scratch']
  %s0 = inlined_call_operand.vmem [shape: bf16[256,8], index: 0, kind: input, shape index: {}]
  %s1 = inlined_call_operand.vmem [shape: bf16[72,16], index: 1, kind: input, shape index: {}]
  %s2 = inlined_call_operand.vmem [shape: f32[256,16], index: 2, kind: output, shape index: {}]
  %s3 = sld [smem:[#allocation0]]
  $region18: #{tpu_custom_call.1} parent=0
    _
  %s5 = ssub.s32 1, %s3
  %s6 = scalar_select 0, %s5, %s3
  // Predicated region
  $region2: #{tpu_custom_call.1} parent=0 // pred_check
    _
  $region3: #{tpu_custom_call.1} parent=0 // pred_check_branch
    %8 = sbr.rel (0) target = $region5
  $region4: #{tpu_custom_call.1} parent=0 // pred_region
    _
  $region5: #{tpu_custom_call.1} parent=0 // pred_fallthru
    _
  // Predicated region
  $region6: #{tpu_custom_call.1} parent=0 // pred_check
    _
  $region7: #{tpu_custom_call.1} parent=0 // pred_check_branch
    %10 = sbr.rel (0) target = $region9
  $region8: #{tpu_custom_call.1} parent=0 // pred_region
    _
  $region9: #{tpu_custom_call.1} parent=0 // pred_fallthru
    _
  %v12 = vld [vmem:[%s0] sm:$0xf]
  %v13 = vld [vmem:[%s0 + $0x4] sm:$0xf]
  %v14 = vld [vmem:[%s0 + $0x8] sm:$0xf]
  %v15 = vld [vmem:[%s0 + $0xc] sm:$0xf]
  %v16 = vld [vmem:[%s0 + $0x10] sm:$0xf]
  %v17 = vld [vmem:[%s0 + $0x14] sm:$0xf]
  %v18 = vld [vmem:[%s0 + $0x18] sm:$0xf]
  %v19 = vld [vmem:[%s0 + $0x1c] sm:$0xf]
  %v20 = vld [vmem:[%s0 + $0x20] sm:$0xf]
  %v21 = vld [vmem:[%s0 + $0x24] sm:$0xf]
  %v22 = vld [vmem:[%s0 + $0x28] sm:$0xf]
  %v23 = vld [vmem:[%s0 + $0x2c] sm:$0xf]
  %v24 = vld [vmem:[%s0 + $0x30] sm:$0xf]
  %v25 = vld [vmem:[%s0 + $0x34] sm:$0xf]
  %v26 = vld [vmem:[%s0 + $0x38] sm:$0xf]
  %v27 = vld [vmem:[%s0 + $0x3c] sm:$0xf]
  %v28 = vld [vmem:[%s0 + $0x40] sm:$0xf]
  %v29 = vld [vmem:[%s0 + $0x44] sm:$0xf]
  %v30 = vld [vmem:[%s0 + $0x48] sm:$0xf]
  %v31 = vld [vmem:[%s0 + $0x4c] sm:$0xf]
  %v32 = vld [vmem:[%s0 + $0x50] sm:$0xf]
  %v33 = vld [vmem:[%s0 + $0x54] sm:$0xf]
  %v34 = vld [vmem:[%s0 + $0x58] sm:$0xf]
  %v35 = vld [vmem:[%s0 + $0x5c] sm:$0xf]
  %v36 = vld [vmem:[%s0 + $0x60] sm:$0xf]
  %v37 = vld [vmem:[%s0 + $0x64] sm:$0xf]
  %v38 = vld [vmem:[%s0 + $0x68] sm:$0xf]
  %v39 = vld [vmem:[%s0 + $0x6c] sm:$0xf]
  %v40 = vld [vmem:[%s0 + $0x70] sm:$0xf]
  %v41 = vld [vmem:[%s0 + $0x74] sm:$0xf]
  %v42 = vld [vmem:[%s0 + $0x78] sm:$0xf]
  %v43 = vld [vmem:[%s0 + $0x7c] sm:$0xf]
  %v76 = vunpack.c.l.b16 %v12
  %v77 = vunpack.c.l.b16 %v13
  %v78 = vunpack.c.l.b16 %v14
  %v79 = vunpack.c.l.b16 %v15
  %v80 = vunpack.c.l.b16 %v16
  %v81 = vunpack.c.l.b16 %v17
  %v82 = vunpack.c.l.b16 %v18
  %v83 = vunpack.c.l.b16 %v19
  %v84 = vunpack.c.l.b16 %v20
  %v85 = vunpack.c.l.b16 %v21
  %v86 = vunpack.c.l.b16 %v22
  %v87 = vunpack.c.l.b16 %v23
  %v88 = vunpack.c.l.b16 %v24
  %v89 = vunpack.c.l.b16 %v25
  %v90 = vunpack.c.l.b16 %v26
  %v91 = vunpack.c.l.b16 %v27
  %v92 = vunpack.c.l.b16 %v28
  %v93 = vunpack.c.l.b16 %v29
  %v94 = vunpack.c.l.b16 %v30
  %v95 = vunpack.c.l.b16 %v31
  %v96 = vunpack.c.l.b16 %v32
  %v97 = vunpack.c.l.b16 %v33
  %v98 = vunpack.c.l.b16 %v34
  %v99 = vunpack.c.l.b16 %v35
  %v100 = vunpack.c.l.b16 %v36
  %v101 = vunpack.c.l.b16 %v37
  %v102 = vunpack.c.l.b16 %v38
  %v103 = vunpack.c.l.b16 %v39
  %v104 = vunpack.c.l.b16 %v40
  %v105 = vunpack.c.l.b16 %v41
  %v106 = vunpack.c.l.b16 %v42
  %v107 = vunpack.c.l.b16 %v43
  %v108 = vpack.c.b16 %v77, %v76
  %v109 = vpack.c.b16 %v79, %v78
  %v110 = vpack.c.b16 %v81, %v80
  %v111 = vpack.c.b16 %v83, %v82
  %v112 = vpack.c.b16 %v85, %v84
  %v113 = vpack.c.b16 %v87, %v86
  %v114 = vpack.c.b16 %v89, %v88
  %v115 = vpack.c.b16 %v91, %v90
  %v116 = vpack.c.b16 %v93, %v92
  %v117 = vpack.c.b16 %v95, %v94
  %v118 = vpack.c.b16 %v97, %v96
  %v119 = vpack.c.b16 %v99, %v98
  %v120 = vpack.c.b16 %v101, %v100
  %v121 = vpack.c.b16 %v103, %v102
  %v122 = vpack.c.b16 %v105, %v104
  %v123 = vpack.c.b16 %v107, %v106
  %124 = vrot.lane.b32.xlu0 %v108, 8
  %v125 = vpop.permute.xlu0 %124
  %126 = vrot.lane.b32.xlu0 %v109, 8
  %v127 = vpop.permute.xlu0 %126
  %128 = vrot.lane.b32.xlu0 %v110, 8
  %v129 = vpop.permute.xlu0 %128
  %130 = vrot.lane.b32.xlu0 %v111, 8
  %v131 = vpop.permute.xlu0 %130
  %132 = vrot.lane.b32.xlu0 %v112, 8
  %v133 = vpop.permute.xlu0 %132
  %134 = vrot.lane.b32.xlu0 %v113, 8
  %v135 = vpop.permute.xlu0 %134
  %136 = vrot.lane.b32.xlu0 %v114, 8
  %v137 = vpop.permute.xlu0 %136
  %138 = vrot.lane.b32.xlu0 %v115, 8
  %v139 = vpop.permute.xlu0 %138
  %140 = vrot.lane.b32.xlu0 %v116, 8
  %v141 = vpop.permute.xlu0 %140
  %142 = vrot.lane.b32.xlu0 %v117, 8
  %v143 = vpop.permute.xlu0 %142
  %144 = vrot.lane.b32.xlu0 %v118, 8
  %v145 = vpop.permute.xlu0 %144
  %146 = vrot.lane.b32.xlu0 %v119, 8
  %v147 = vpop.permute.xlu0 %146
  %148 = vrot.lane.b32.xlu0 %v120, 8
  %v149 = vpop.permute.xlu0 %148
  %150 = vrot.lane.b32.xlu0 %v121, 8
  %v151 = vpop.permute.xlu0 %150
  %152 = vrot.lane.b32.xlu0 %v122, 8
  %v153 = vpop.permute.xlu0 %152
  %154 = vrot.lane.b32.xlu0 %v123, 8
  %v155 = vpop.permute.xlu0 %154
  %156 = vrot.lane.b32.xlu0 %v108, 16
  %v157 = vpop.permute.xlu0 %156
  %158 = vrot.lane.b32.xlu0 %v109, 16
  %v159 = vpop.permute.xlu0 %158
  %160 = vrot.lane.b32.xlu0 %v110, 16
  %v161 = vpop.permute.xlu0 %160
  %162 = vrot.lane.b32.xlu0 %v111, 16
  %v163 = vpop.permute.xlu0 %162
  %164 = vrot.lane.b32.xlu0 %v112, 16
  %v165 = vpop.permute.xlu0 %164
  %166 = vrot.lane.b32.xlu0 %v113, 16
  %v167 = vpop.permute.xlu0 %166
  %168 = vrot.lane.b32.xlu0 %v114, 16
  %v169 = vpop.permute.xlu0 %168
  %170 = vrot.lane.b32.xlu0 %v115, 16
  %v171 = vpop.permute.xlu0 %170
  %172 = vrot.lane.b32.xlu0 %v116, 16
  %v173 = vpop.permute.xlu0 %172
  %174 = vrot.lane.b32.xlu0 %v117, 16
  %v175 = vpop.permute.xlu0 %174
  %176 = vrot.lane.b32.xlu0 %v118, 16
  %v177 = vpop.permute.xlu0 %176
  %178 = vrot.lane.b32.xlu0 %v119, 16
  %v179 = vpop.permute.xlu0 %178
  %180 = vrot.lane.b32.xlu0 %v120, 16
  %v181 = vpop.permute.xlu0 %180
  %182 = vrot.lane.b32.xlu0 %v121, 16
  %v183 = vpop.permute.xlu0 %182
  %184 = vrot.lane.b32.xlu0 %v122, 16
  %v185 = vpop.permute.xlu0 %184
  %186 = vrot.lane.b32.xlu0 %v123, 16
  %v187 = vpop.permute.xlu0 %186
  %188 = vrot.lane.b32.xlu0 %v108, 24
  %v189 = vpop.permute.xlu0 %188
  %190 = vrot.lane.b32.xlu0 %v109, 24
  %v191 = vpop.permute.xlu0 %190
  %192 = vrot.lane.b32.xlu0 %v110, 24
  %v193 = vpop.permute.xlu0 %192
  %194 = vrot.lane.b32.xlu0 %v111, 24
  %v195 = vpop.permute.xlu0 %194
  %196 = vrot.lane.b32.xlu0 %v112, 24
  %v197 = vpop.permute.xlu0 %196
  %198 = vrot.lane.b32.xlu0 %v113, 24
  %v199 = vpop.permute.xlu0 %198
  %200 = vrot.lane.b32.xlu0 %v114, 24
  %v201 = vpop.permute.xlu0 %200
  %202 = vrot.lane.b32.xlu0 %v115, 24
  %v203 = vpop.permute.xlu0 %202
  %204 = vrot.lane.b32.xlu0 %v116, 24
  %v205 = vpop.permute.xlu0 %204
  %206 = vrot.lane.b32.xlu0 %v117, 24
  %v207 = vpop.permute.xlu0 %206
  %208 = vrot.lane.b32.xlu0 %v118, 24
  %v209 = vpop.permute.xlu0 %208
  %210 = vrot.lane.b32.xlu0 %v119, 24
  %v211 = vpop.permute.xlu0 %210
  %212 = vrot.lane.b32.xlu0 %v120, 24
  %v213 = vpop.permute.xlu0 %212
  %214 = vrot.lane.b32.xlu0 %v121, 24
  %v215 = vpop.permute.xlu0 %214
  %216 = vrot.lane.b32.xlu0 %v122, 24
  %v217 = vpop.permute.xlu0 %216
  %218 = vrot.lane.b32.xlu0 %v123, 24
  %v219 = vpop.permute.xlu0 %218
  %220 = vrot.lane.b32.xlu0 %v108, 32
  %v221 = vpop.permute.xlu0 %220
  %222 = vrot.lane.b32.xlu0 %v109, 32
  %v223 = vpop.permute.xlu0 %222
  %224 = vrot.lane.b32.xlu0 %v110, 32
  %v225 = vpop.permute.xlu0 %224
  %226 = vrot.lane.b32.xlu0 %v111, 32
  %v227 = vpop.permute.xlu0 %226
  %228 = vrot.lane.b32.xlu0 %v112, 32
  %v229 = vpop.permute.xlu0 %228
  %230 = vrot.lane.b32.xlu0 %v113, 32
  %v231 = vpop.permute.xlu0 %230
  %232 = vrot.lane.b32.xlu0 %v114, 32
  %v233 = vpop.permute.xlu0 %232
  %234 = vrot.lane.b32.xlu0 %v115, 32
  %v235 = vpop.permute.xlu0 %234
  %236 = vrot.lane.b32.xlu0 %v116, 32
  %v237 = vpop.permute.xlu0 %236
  %238 = vrot.lane.b32.xlu0 %v117, 32
  %v239 = vpop.permute.xlu0 %238
  %240 = vrot.lane.b32.xlu0 %v118, 32
  %v241 = vpop.permute.xlu0 %240
  %242 = vrot.lane.b32.xlu0 %v119, 32
  %v243 = vpop.permute.xlu0 %242
  %244 = vrot.lane.b32.xlu0 %v120, 32
  %v245 = vpop.permute.xlu0 %244
  %246 = vrot.lane.b32.xlu0 %v121, 32
  %v247 = vpop.permute.xlu0 %246
  %248 = vrot.lane.b32.xlu0 %v122, 32
  %v249 = vpop.permute.xlu0 %248
  %250 = vrot.lane.b32.xlu0 %v123, 32
  %v251 = vpop.permute.xlu0 %250
  %252 = vrot.lane.b32.xlu0 %v108, 40
  %v253 = vpop.permute.xlu0 %252
  %254 = vrot.lane.b32.xlu0 %v109, 40
  %v255 = vpop.permute.xlu0 %254
  %256 = vrot.lane.b32.xlu0 %v110, 40
  %v257 = vpop.permute.xlu0 %256
  %258 = vrot.lane.b32.xlu0 %v111, 40
  %v259 = vpop.permute.xlu0 %258
  %260 = vrot.lane.b32.xlu0 %v112, 40
  %v261 = vpop.permute.xlu0 %260
  %262 = vrot.lane.b32.xlu0 %v113, 40
  %v263 = vpop.permute.xlu0 %262
  %264 = vrot.lane.b32.xlu0 %v114, 40
  %v265 = vpop.permute.xlu0 %264
  %266 = vrot.lane.b32.xlu0 %v115, 40
  %v267 = vpop.permute.xlu0 %266
  %268 = vrot.lane.b32.xlu0 %v116, 40
  %v269 = vpop.permute.xlu0 %268
  %270 = vrot.lane.b32.xlu0 %v117, 40
  %v271 = vpop.permute.xlu0 %270
  %272 = vrot.lane.b32.xlu0 %v118, 40
  %v273 = vpop.permute.xlu0 %272
  %274 = vrot.lane.b32.xlu0 %v119, 40
  %v275 = vpop.permute.xlu0 %274
  %276 = vrot.lane.b32.xlu0 %v120, 40
  %v277 = vpop.permute.xlu0 %276
  %278 = vrot.lane.b32.xlu0 %v121, 40
  %v279 = vpop.permute.xlu0 %278
  %280 = vrot.lane.b32.xlu0 %v122, 40
  %v281 = vpop.permute.xlu0 %280
  %282 = vrot.lane.b32.xlu0 %v123, 40
  %v283 = vpop.permute.xlu0 %282
  %284 = vrot.lane.b32.xlu0 %v108, 48
  %v285 = vpop.permute.xlu0 %284
  %286 = vrot.lane.b32.xlu0 %v109, 48
  %v287 = vpop.permute.xlu0 %286
  %288 = vrot.lane.b32.xlu0 %v110, 48
  %v289 = vpop.permute.xlu0 %288
  %290 = vrot.lane.b32.xlu0 %v111, 48
  %v291 = vpop.permute.xlu0 %290
  %292 = vrot.lane.b32.xlu0 %v112, 48
  %v293 = vpop.permute.xlu0 %292
  %294 = vrot.lane.b32.xlu0 %v113, 48
  %v295 = vpop.permute.xlu0 %294
  %296 = vrot.lane.b32.xlu0 %v114, 48
  %v297 = vpop.permute.xlu0 %296
  %298 = vrot.lane.b32.xlu0 %v115, 48
  %v299 = vpop.permute.xlu0 %298
  %300 = vrot.lane.b32.xlu0 %v116, 48
  %v301 = vpop.permute.xlu0 %300
  %302 = vrot.lane.b32.xlu0 %v117, 48
  %v303 = vpop.permute.xlu0 %302
  %304 = vrot.lane.b32.xlu0 %v118, 48
  %v305 = vpop.permute.xlu0 %304
  %306 = vrot.lane.b32.xlu0 %v119, 48
  %v307 = vpop.permute.xlu0 %306
  %308 = vrot.lane.b32.xlu0 %v120, 48
  %v309 = vpop.permute.xlu0 %308
  %310 = vrot.lane.b32.xlu0 %v121, 48
  %v311 = vpop.permute.xlu0 %310
  %312 = vrot.lane.b32.xlu0 %v122, 48
  %v313 = vpop.permute.xlu0 %312
  %314 = vrot.lane.b32.xlu0 %v123, 48
  %v315 = vpop.permute.xlu0 %314
  %316 = vrot.lane.b32.xlu0 %v108, 56
  %v317 = vpop.permute.xlu0 %316
  %318 = vrot.lane.b32.xlu0 %v109, 56
  %v319 = vpop.permute.xlu0 %318
  %320 = vrot.lane.b32.xlu0 %v110, 56
  %v321 = vpop.permute.xlu0 %320
  %322 = vrot.lane.b32.xlu0 %v111, 56
  %v323 = vpop.permute.xlu0 %322
  %324 = vrot.lane.b32.xlu0 %v112, 56
  %v325 = vpop.permute.xlu0 %324
  %326 = vrot.lane.b32.xlu0 %v113, 56
  %v327 = vpop.permute.xlu0 %326
  %328 = vrot.lane.b32.xlu0 %v114, 56
  %v329 = vpop.permute.xlu0 %328
  %330 = vrot.lane.b32.xlu0 %v115, 56
  %v331 = vpop.permute.xlu0 %330
  %332 = vrot.lane.b32.xlu0 %v116, 56
  %v333 = vpop.permute.xlu0 %332
  %334 = vrot.lane.b32.xlu0 %v117, 56
  %v335 = vpop.permute.xlu0 %334
  %336 = vrot.lane.b32.xlu0 %v118, 56
  %v337 = vpop.permute.xlu0 %336
  %338 = vrot.lane.b32.xlu0 %v119, 56
  %v339 = vpop.permute.xlu0 %338
  %340 = vrot.lane.b32.xlu0 %v120, 56
  %v341 = vpop.permute.xlu0 %340
  %342 = vrot.lane.b32.xlu0 %v121, 56
  %v343 = vpop.permute.xlu0 %342
  %344 = vrot.lane.b32.xlu0 %v122, 56
  %v345 = vpop.permute.xlu0 %344
  %346 = vrot.lane.b32.xlu0 %v123, 56
  %v347 = vpop.permute.xlu0 %346
  %348 = vrot.lane.b32.xlu0 %v108, 64
  %v349 = vpop.permute.xlu0 %348
  %350 = vrot.lane.b32.xlu0 %v109, 64
  %v351 = vpop.permute.xlu0 %350
  %352 = vrot.lane.b32.xlu0 %v110, 64
  %v353 = vpop.permute.xlu0 %352
  %354 = vrot.lane.b32.xlu0 %v111, 64
  %v355 = vpop.permute.xlu0 %354
  %356 = vrot.lane.b32.xlu0 %v112, 64
  %v357 = vpop.permute.xlu0 %356
  %358 = vrot.lane.b32.xlu0 %v113, 64
  %v359 = vpop.permute.xlu0 %358
  %360 = vrot.lane.b32.xlu0 %v114, 64
  %v361 = vpop.permute.xlu0 %360
  %362 = vrot.lane.b32.xlu0 %v115, 64
  %v363 = vpop.permute.xlu0 %362
  %364 = vrot.lane.b32.xlu0 %v116, 64
  %v365 = vpop.permute.xlu0 %364
  %366 = vrot.lane.b32.xlu0 %v117, 64
  %v367 = vpop.permute.xlu0 %366
  %368 = vrot.lane.b32.xlu0 %v118, 64
  %v369 = vpop.permute.xlu0 %368
  %370 = vrot.lane.b32.xlu0 %v119, 64
  %v371 = vpop.permute.xlu0 %370
  %372 = vrot.lane.b32.xlu0 %v120, 64
  %v373 = vpop.permute.xlu0 %372
  %374 = vrot.lane.b32.xlu0 %v121, 64
  %v375 = vpop.permute.xlu0 %374
  %376 = vrot.lane.b32.xlu0 %v122, 64
  %v377 = vpop.permute.xlu0 %376
  %378 = vrot.lane.b32.xlu0 %v123, 64
  %v379 = vpop.permute.xlu0 %378
  %vm380 = vcmask 64512
  %v383 = vsel %vm380, %v108, %v125
  %v386 = vsel %vm380, %v109, %v127
  %v389 = vsel %vm380, %v110, %v129
  %v392 = vsel %vm380, %v111, %v131
  %v395 = vsel %vm380, %v112, %v133
  %v398 = vsel %vm380, %v113, %v135
  %v401 = vsel %vm380, %v114, %v137
  %v404 = vsel %vm380, %v115, %v139
  %v407 = vsel %vm380, %v116, %v141
  %v410 = vsel %vm380, %v117, %v143
  %v413 = vsel %vm380, %v118, %v145
  %v416 = vsel %vm380, %v119, %v147
  %v419 = vsel %vm380, %v120, %v149
  %v422 = vsel %vm380, %v121, %v151
  %v425 = vsel %vm380, %v122, %v153
  %v428 = vsel %vm380, %v123, %v155
  %vm429 = vcmask 130048
  %v431 = vsel %vm429, %v383, %v157
  %v433 = vsel %vm429, %v386, %v159
  %v435 = vsel %vm429, %v389, %v161
  %v437 = vsel %vm429, %v392, %v163
  %v439 = vsel %vm429, %v395, %v165
  %v441 = vsel %vm429, %v398, %v167
  %v443 = vsel %vm429, %v401, %v169
  %v445 = vsel %vm429, %v404, %v171
  %v447 = vsel %vm429, %v407, %v173
  %v449 = vsel %vm429, %v410, %v175
  %v451 = vsel %vm429, %v413, %v177
  %v453 = vsel %vm429, %v416, %v179
  %v455 = vsel %vm429, %v419, %v181
  %v457 = vsel %vm429, %v422, %v183
  %v459 = vsel %vm429, %v425, %v185
  %v461 = vsel %vm429, %v428, %v187
  %vm462 = vcmask 195584
  %v464 = vsel %vm462, %v431, %v189
  %v466 = vsel %vm462, %v433, %v191
  %v468 = vsel %vm462, %v435, %v193
  %v470 = vsel %vm462, %v437, %v195
  %v472 = vsel %vm462, %v439, %v197
  %v474 = vsel %vm462, %v441, %v199
  %v476 = vsel %vm462, %v443, %v201
  %v478 = vsel %vm462, %v445, %v203
  %v480 = vsel %vm462, %v447, %v205
  %v482 = vsel %vm462, %v449, %v207
  %v484 = vsel %vm462, %v451, %v209
  %v486 = vsel %vm462, %v453, %v211
  %v488 = vsel %vm462, %v455, %v213
  %v490 = vsel %vm462, %v457, %v215
  %v492 = vsel %vm462, %v459, %v217
  %v494 = vsel %vm462, %v461, %v219
  %vm495 = vcmask 261120
  %v497 = vsel %vm495, %v464, %v221
  %v499 = vsel %vm495, %v466, %v223
  %v501 = vsel %vm495, %v468, %v225
  %v503 = vsel %vm495, %v470, %v227
  %v505 = vsel %vm495, %v472, %v229
  %v507 = vsel %vm495, %v474, %v231
  %v509 = vsel %vm495, %v476, %v233
  %v511 = vsel %vm495, %v478, %v235
  %v513 = vsel %vm495, %v480, %v237
  %v515 = vsel %vm495, %v482, %v239
  %v517 = vsel %vm495, %v484, %v241
  %v519 = vsel %vm495, %v486, %v243
  %v521 = vsel %vm495, %v488, %v245
  %v523 = vsel %vm495, %v490, %v247
  %v525 = vsel %vm495, %v492, %v249
  %v527 = vsel %vm495, %v494, %v251
  %vm528 = vcmask 326656
  %v530 = vsel %vm528, %v497, %v253
  %v532 = vsel %vm528, %v499, %v255
  %v534 = vsel %vm528, %v501, %v257
  %v536 = vsel %vm528, %v503, %v259
  %v538 = vsel %vm528, %v505, %v261
  %v540 = vsel %vm528, %v507, %v263
  %v542 = vsel %vm528, %v509, %v265
  %v544 = vsel %vm528, %v511, %v267
  %v546 = vsel %vm528, %v513, %v269
  %v548 = vsel %vm528, %v515, %v271
  %v550 = vsel %vm528, %v517, %v273
  %v552 = vsel %vm528, %v519, %v275
  %v554 = vsel %vm528, %v521, %v277
  %v556 = vsel %vm528, %v523, %v279
  %v558 = vsel %vm528, %v525, %v281
  %v560 = vsel %vm528, %v527, %v283
  %vm561 = vcmask 392192
  %v563 = vsel %vm561, %v530, %v285
  %v565 = vsel %vm561, %v532, %v287
  %v567 = vsel %vm561, %v534, %v289
  %v569 = vsel %vm561, %v536, %v291
  %v571 = vsel %vm561, %v538, %v293
  %v573 = vsel %vm561, %v540, %v295
  %v575 = vsel %vm561, %v542, %v297
  %v577 = vsel %vm561, %v544, %v299
  %v579 = vsel %vm561, %v546, %v301
  %v581 = vsel %vm561, %v548, %v303
  %v583 = vsel %vm561, %v550, %v305
  %v585 = vsel %vm561, %v552, %v307
  %v587 = vsel %vm561, %v554, %v309
  %v589 = vsel %vm561, %v556, %v311
  %v591 = vsel %vm561, %v558, %v313
  %v593 = vsel %vm561, %v560, %v315
  %vm594 = vcmask 457728
  %v596 = vsel %vm594, %v563, %v317
  %v598 = vsel %vm594, %v565, %v319
  %v600 = vsel %vm594, %v567, %v321
  %v602 = vsel %vm594, %v569, %v323
  %v604 = vsel %vm594, %v571, %v325
  %v606 = vsel %vm594, %v573, %v327
  %v608 = vsel %vm594, %v575, %v329
  %v610 = vsel %vm594, %v577, %v331
  %v612 = vsel %vm594, %v579, %v333
  %v614 = vsel %vm594, %v581, %v335
  %v616 = vsel %vm594, %v583, %v337
  %v618 = vsel %vm594, %v585, %v339
  %v620 = vsel %vm594, %v587, %v341
  %v622 = vsel %vm594, %v589, %v343
  %v624 = vsel %vm594, %v591, %v345
  %v626 = vsel %vm594, %v593, %v347
  %vm627 = vcmask 523264
  %v629 = vsel %vm627, %v596, %v349
  %v631 = vsel %vm627, %v598, %v351
  %v633 = vsel %vm627, %v600, %v353
  %v635 = vsel %vm627, %v602, %v355
  %v637 = vsel %vm627, %v604, %v357
  %v639 = vsel %vm627, %v606, %v359
  %v641 = vsel %vm627, %v608, %v361
  %v643 = vsel %vm627, %v610, %v363
  %v645 = vsel %vm627, %v612, %v365
  %v647 = vsel %vm627, %v614, %v367
  %v649 = vsel %vm627, %v616, %v369
  %v651 = vsel %vm627, %v618, %v371
  %v653 = vsel %vm627, %v620, %v373
  %v655 = vsel %vm627, %v622, %v375
  %v657 = vsel %vm627, %v624, %v377
  %v659 = vsel %vm627, %v626, %v379
  %v660 = vld [vmem:[%s1] sm:$0xf]
  %v661 = vld [vmem:[%s1 + $0x4] sm:$0xf]
  %v662 = vld [vmem:[%s1 + $0x8] sm:$0xf]
  %v663 = vld [vmem:[%s1 + $0xc] sm:$0xf]
  %v664 = vld [vmem:[%s1 + $0x10] sm:$0xf]
  %v665 = vld [vmem:[%s1 + $0x14] sm:$0xf]
  %v666 = vld [vmem:[%s1 + $0x18] sm:$0xf]
  %v667 = vld [vmem:[%s1 + $0x1c] sm:$0xf]
  %v668 = vld [vmem:[%s1 + $0x20] sm:$0xf]
  %v678 = vunpack.c.l.b16 %v660
  %v679 = vunpack.c.l.b16 %v661
  %v680 = vunpack.c.l.b16 %v662
  %v681 = vunpack.c.l.b16 %v663
  %v682 = vunpack.c.l.b16 %v664
  %v683 = vunpack.c.l.b16 %v665
  %v684 = vunpack.c.l.b16 %v666
  %v685 = vunpack.c.l.b16 %v667
  %v686 = vunpack.c.l.b16 %v668
  %v687 = vpack.c.b16 %v679, %v678
  %v688 = vpack.c.b16 %v681, %v680
  %v689 = vpack.c.b16 %v683, %v682
  %v690 = vpack.c.b16 %v685, %v684
  %v691 = vpack.c.b16 %v686, %v686
  %vm696 = vcmask 588800
  %v697 = vsel %vm696, %v629, 0
  %v699 = vsel %vm696, %v631, 0
  %v701 = vsel %vm696, %v633, 0
  %v703 = vsel %vm696, %v635, 0
  %v705 = vsel %vm696, %v637, 0
  %v707 = vsel %vm696, %v639, 0
  %v709 = vsel %vm696, %v641, 0
  %v711 = vsel %vm696, %v643, 0
  %v713 = vsel %vm696, %v645, 0
  %v715 = vsel %vm696, %v647, 0
  %v717 = vsel %vm696, %v649, 0
  %v719 = vsel %vm696, %v651, 0
  %v721 = vsel %vm696, %v653, 0
  %v723 = vsel %vm696, %v655, 0
  %v725 = vsel %vm696, %v657, 0
  %v727 = vsel %vm696, %v659, 0
  %vm729 = vcmask 1043456
  %v731 = vsel %vm729, %v691, 0
  %733 = vmatprep.subr.bf16.mxu0 0
  %734 = vmatpush1.bf16.msra.mxu0 %v687
  %735 = vmatprep.subr.bf16.mxu0 0
  %736 = vmatpush1.bf16.msra.mxu0 %v688
  %737 = vmatprep.subr.bf16.mxu0 0
  %738 = vmatpush1.bf16.msra.mxu0 %v689
  %739 = vmatprep.subr.bf16.mxu0 0
  %740 = vmatpush1.bf16.msra.mxu0 %v690
  %741 = vmatprep.subr.bf16.mxu0 0
  %742 = vmatpush1.bf16.msra.mxu0 %v731
  %743 = vmatprep.subr.bf16.mxu0 0
  %744 = vmatpush1.bf16.msra.mxu0 0
  %745 = vmatprep.subr.bf16.mxu0 0
  %746 = vmatpush1.bf16.msra.mxu0 0
  %747 = vmatprep.subr.bf16.mxu0 0
  %748 = vmatpush1.bf16.msra.mxu0 0
  %749 = vmatprep.subr.bf16.mxu0 0
  %750 = vmatpush1.bf16.msra.mxu0 0
  %751 = vmatprep.subr.bf16.mxu0 0
  %752 = vmatpush1.bf16.msra.mxu0 0
  %753 = vmatprep.subr.bf16.mxu0 0
  %754 = vmatpush1.bf16.msra.mxu0 0
  %755 = vmatprep.subr.bf16.mxu0 0
  %756 = vmatpush1.bf16.msra.mxu0 0
  %757 = vmatprep.subr.bf16.mxu0 0
  %758 = vmatpush1.bf16.msra.mxu0 0
  %759 = vmatprep.subr.bf16.mxu0 0
  %760 = vmatpush1.bf16.msra.mxu0 0
  %761 = vmatprep.subr.bf16.mxu0 0
  %762 = vmatpush1.bf16.msra.mxu0 0
  %763 = vmatprep.subr.bf16.mxu0 0
  %764 = vmatpush1.bf16.msra.mxu0 0
  %765 = vmatprep.mubr.bf16.mxu0 0
  %766 = vmatmul.mubr.bf16.gmra.mrb[0].mxu0 %v697
  %v767 = vpop.f32.mrb[0].mxu0
  %v768 = vadd.f32 0.0, %v767
  %v769 = vpop.f32.mrb[0].mxu0
  %v770 = vpop.f32.mrb[0].mxu0
  %v771 = vadd.f32 0.0, %v770
  %v772 = vpop.f32.mrb[0].mxu0
  %773 = vmatprep.mubr.bf16.mxu0 0
  %774 = vmatmul.mubr.bf16.gmra.mrb[0].mxu0 %v699
  %v775 = vpop.f32.mrb[0].mxu0
  %v776 = vadd.f32 0.0, %v775
  %v777 = vpop.f32.mrb[0].mxu0
  %v778 = vpop.f32.mrb[0].mxu0
  %v779 = vadd.f32 0.0, %v778
  %v780 = vpop.f32.mrb[0].mxu0
  %781 = vmatprep.mubr.bf16.mxu0 0
  %782 = vmatmul.mubr.bf16.gmra.mrb[0].mxu0 %v701
  %v783 = vpop.f32.mrb[0].mxu0
  %v784 = vadd.f32 0.0, %v783
  %v785 = vpop.f32.mrb[0].mxu0
  %v786 = vpop.f32.mrb[0].mxu0
  %v787 = vadd.f32 0.0, %v786
  %v788 = vpop.f32.mrb[0].mxu0
  %789 = vmatprep.mubr.bf16.mxu0 0
  %790 = vmatmul.mubr.bf16.gmra.mrb[0].mxu0 %v703
  %v791 = vpop.f32.mrb[0].mxu0
  %v792 = vadd.f32 0.0, %v791
  %v793 = vpop.f32.mrb[0].mxu0
  %v794 = vpop.f32.mrb[0].mxu0
  %v795 = vadd.f32 0.0, %v794
  %v796 = vpop.f32.mrb[0].mxu0
  %797 = vmatprep.mubr.bf16.mxu0 0
  %798 = vmatmul.mubr.bf16.gmra.mrb[0].mxu0 %v705
  %v799 = vpop.f32.mrb[0].mxu0
  %v800 = vadd.f32 0.0, %v799
  %v801 = vpop.f32.mrb[0].mxu0
  %v802 = vpop.f32.mrb[0].mxu0
  %v803 = vadd.f32 0.0, %v802
  %v804 = vpop.f32.mrb[0].mxu0
  %805 = vmatprep.mubr.bf16.mxu0 0
  %806 = vmatmul.mubr.bf16.gmra.mrb[0].mxu0 %v707
  %v807 = vpop.f32.mrb[0].mxu0
  %v808 = vadd.f32 0.0, %v807
  %v809 = vpop.f32.mrb[0].mxu0
  %v810 = vpop.f32.mrb[0].mxu0
  %v811 = vadd.f32 0.0, %v810
  %v812 = vpop.f32.mrb[0].mxu0
  %813 = vmatprep.mubr.bf16.mxu0 0
  %814 = vmatmul.mubr.bf16.gmra.mrb[0].mxu0 %v709
  %v815 = vpop.f32.mrb[0].mxu0
  %v816 = vadd.f32 0.0, %v815
  %v817 = vpop.f32.mrb[0].mxu0
  %v818 = vpop.f32.mrb[0].mxu0
  %v819 = vadd.f32 0.0, %v818
  %v820 = vpop.f32.mrb[0].mxu0
  %821 = vmatprep.mubr.bf16.mxu0 0
  %822 = vmatmul.mubr.bf16.gmra.mrb[0].mxu0 %v711
  %v823 = vpop.f32.mrb[0].mxu0
  %v824 = vadd.f32 0.0, %v823
  %v825 = vpop.f32.mrb[0].mxu0
  %v826 = vpop.f32.mrb[0].mxu0
  %v827 = vadd.f32 0.0, %v826
  %v828 = vpop.f32.mrb[0].mxu0
  %829 = vmatprep.mubr.bf16.mxu0 0
  %830 = vmatmul.mubr.bf16.gmra.mrb[0].mxu0 %v713
  %v831 = vpop.f32.mrb[0].mxu0
  %v832 = vadd.f32 0.0, %v831
  %v833 = vpop.f32.mrb[0].mxu0
  %v834 = vpop.f32.mrb[0].mxu0
  %v835 = vadd.f32 0.0, %v834
  %v836 = vpop.f32.mrb[0].mxu0
  %837 = vmatprep.mubr.bf16.mxu0 0
  %838 = vmatmul.mubr.bf16.gmra.mrb[0].mxu0 %v715
  %v839 = vpop.f32.mrb[0].mxu0
  %v840 = vadd.f32 0.0, %v839
  %v841 = vpop.f32.mrb[0].mxu0
  %v842 = vpop.f32.mrb[0].mxu0
  %v843 = vadd.f32 0.0, %v842
  %v844 = vpop.f32.mrb[0].mxu0
  %845 = vmatprep.mubr.bf16.mxu0 0
  %846 = vmatmul.mubr.bf16.gmra.mrb[0].mxu0 %v717
  %v847 = vpop.f32.mrb[0].mxu0
  %v848 = vadd.f32 0.0, %v847
  %v849 = vpop.f32.mrb[0].mxu0
  %v850 = vpop.f32.mrb[0].mxu0
  %v851 = vadd.f32 0.0, %v850
  %v852 = vpop.f32.mrb[0].mxu0
  %853 = vmatprep.mubr.bf16.mxu0 0
  %854 = vmatmul.mubr.bf16.gmra.mrb[0].mxu0 %v719
  %v855 = vpop.f32.mrb[0].mxu0
  %v856 = vadd.f32 0.0, %v855
  %v857 = vpop.f32.mrb[0].mxu0
  %v858 = vpop.f32.mrb[0].mxu0
  %v859 = vadd.f32 0.0, %v858
  %v860 = vpop.f32.mrb[0].mxu0
  %861 = vmatprep.mubr.bf16.mxu0 0
  %862 = vmatmul.mubr.bf16.gmra.mrb[0].mxu0 %v721
  %v863 = vpop.f32.mrb[0].mxu0
  %v864 = vadd.f32 0.0, %v863
  %v865 = vpop.f32.mrb[0].mxu0
  %v866 = vpop.f32.mrb[0].mxu0
  %v867 = vadd.f32 0.0, %v866
  %v868 = vpop.f32.mrb[0].mxu0
  %869 = vmatprep.mubr.bf16.mxu0 0
  %870 = vmatmul.mubr.bf16.gmra.mrb[0].mxu0 %v723
  %v871 = vpop.f32.mrb[0].mxu0
  %v872 = vadd.f32 0.0, %v871
  %v873 = vpop.f32.mrb[0].mxu0
  %v874 = vpop.f32.mrb[0].mxu0
  %v875 = vadd.f32 0.0, %v874
  %v876 = vpop.f32.mrb[0].mxu0
  %877 = vmatprep.mubr.bf16.mxu0 0
  %878 = vmatmul.mubr.bf16.gmra.mrb[0].mxu0 %v725
  %v879 = vpop.f32.mrb[0].mxu0
  %v880 = vadd.f32 0.0, %v879
  %v881 = vpop.f32.mrb[0].mxu0
  %v882 = vpop.f32.mrb[0].mxu0
  %v883 = vadd.f32 0.0, %v882
  %v884 = vpop.f32.mrb[0].mxu0
  %885 = vmatprep.mubr.bf16.mxu0 0
  %886 = vmatmul.mubr.bf16.gmra.mrb[0].mxu0 %v727
  %v887 = vpop.f32.mrb[0].mxu0
  %v888 = vadd.f32 0.0, %v887
  %v889 = vpop.f32.mrb[0].mxu0
  %v890 = vpop.f32.mrb[0].mxu0
  %v891 = vadd.f32 0.0, %v890
  %v892 = vpop.f32.mrb[0].mxu0
  %893 = vdwg.mxu0
  %894 = vst.msk [vmem:[%s2] sm:$0xff] %vm429, %v768
  %895 = vst.msk [vmem:[%s2 + $0x8] sm:$0xff] %vm429, %v771
  %896 = vst.msk [vmem:[%s2 + $0x10] sm:$0xff] %vm429, %v776
  %897 = vst.msk [vmem:[%s2 + $0x18] sm:$0xff] %vm429, %v779
  %898 = vst.msk [vmem:[%s2 + $0x20] sm:$0xff] %vm429, %v784
  %899 = vst.msk [vmem:[%s2 + $0x28] sm:$0xff] %vm429, %v787
  %900 = vst.msk [vmem:[%s2 + $0x30] sm:$0xff] %vm429, %v792
  %901 = vst.msk [vmem:[%s2 + $0x38] sm:$0xff] %vm429, %v795
  %902 = vst.msk [vmem:[%s2 + $0x40] sm:$0xff] %vm429, %v800
  %903 = vst.msk [vmem:[%s2 + $0x48] sm:$0xff] %vm429, %v803
  %904 = vst.msk [vmem:[%s2 + $0x50] sm:$0xff] %vm429, %v808
  %905 = vst.msk [vmem:[%s2 + $0x58] sm:$0xff] %vm429, %v811
  %906 = vst.msk [vmem:[%s2 + $0x60] sm:$0xff] %vm429, %v816
  %907 = vst.msk [vmem:[%s2 + $0x68] sm:$0xff] %vm429, %v819
  %908 = vst.msk [vmem:[%s2 + $0x70] sm:$0xff] %vm429, %v824
  %909 = vst.msk [vmem:[%s2 + $0x78] sm:$0xff] %vm429, %v827
  %910 = vst.msk [vmem:[%s2 + $0x80] sm:$0xff] %vm429, %v832
  %911 = vst.msk [vmem:[%s2 + $0x88] sm:$0xff] %vm429, %v835
  %912 = vst.msk [vmem:[%s2 + $0x90] sm:$0xff] %vm429, %v840
  %913 = vst.msk [vmem:[%s2 + $0x98] sm:$0xff] %vm429, %v843
  %914 = vst.msk [vmem:[%s2 + $0xa0] sm:$0xff] %vm429, %v848
  %915 = vst.msk [vmem:[%s2 + $0xa8] sm:$0xff] %vm429, %v851
  %916 = vst.msk [vmem:[%s2 + $0xb0] sm:$0xff] %vm429, %v856
  %917 = vst.msk [vmem:[%s2 + $0xb8] sm:$0xff] %vm429, %v859
  %918 = vst.msk [vmem:[%s2 + $0xc0] sm:$0xff] %vm429, %v864
  %919 = vst.msk [vmem:[%s2 + $0xc8] sm:$0xff] %vm429, %v867
  %920 = vst.msk [vmem:[%s2 + $0xd0] sm:$0xff] %vm429, %v872
  %921 = vst.msk [vmem:[%s2 + $0xd8] sm:$0xff] %vm429, %v875
  %922 = vst.msk [vmem:[%s2 + $0xe0] sm:$0xff] %vm429, %v880
  %923 = vst.msk [vmem:[%s2 + $0xe8] sm:$0xff] %vm429, %v883
  %924 = vst.msk [vmem:[%s2 + $0xf0] sm:$0xff] %vm429, %v888
  %925 = vst.msk [vmem:[%s2 + $0xf8] sm:$0xff] %vm429, %v891
  // Predicated region
  $region10: #{tpu_custom_call.1} parent=0 // pred_check
    _
  $region11: #{tpu_custom_call.1} parent=0 // pred_check_branch
    %927 = sbr.rel (0) target = $region13
  $region12: #{tpu_custom_call.1} parent=0 // pred_region
    _
  $region13: #{tpu_custom_call.1} parent=0 // pred_fallthru
    _
  // Predicated region
  $region14: #{tpu_custom_call.1} parent=0 // pred_check
    _
  $region15: #{tpu_custom_call.1} parent=0 // pred_check_branch
    %929 = sbr.rel (0) target = $region17
  $region16: #{tpu_custom_call.1} parent=0 // pred_region
    _
  $region17: #{tpu_custom_call.1} parent=0 // pred_fallthru
    _

// kernel: _lambda_.3
$region0: #{_lambda_.3}
  #allocation0 [shape = 'u32[]', space=smem, size = 0x4, offset = 0x4, fixed_abs, tag = 'smem constant byte address 0x4 - core index']
  #allocation1 [shape = 'u32[144,128]{1,0:T(1,128)}', space=vmem, size = 0x12000, scoped, tag = 'internal scratch']
  %s0 = inlined_call_operand.vmem [shape: bf16[2,36,9,16], index: 0, kind: input, shape index: {}]
  %s1 = inlined_call_operand.vmem [shape: bf16[9,16,16], index: 1, kind: input, shape index: {}]
  %s2 = inlined_call_operand.vmem [shape: f32[1,16], index: 2, kind: input, shape index: {}]
  %s3 = inlined_call_operand.vmem [shape: bf16[2,64,8], index: 3, kind: input, shape index: {}]
  %s4 = inlined_call_operand.vmem [shape: bf16[8,16], index: 4, kind: input, shape index: {}]
  %s5 = inlined_call_operand.vmem [shape: f32[1,16], index: 5, kind: input, shape index: {}]
  %s6 = inlined_call_operand.hbm [shape: f32[2,64,16], index: 6, kind: output, shape index: {}]
  %s7 = sld [smem:[#allocation0]]
  $region57: #{_lambda_.3} parent=0
    _
  %s9 = ssub.s32 1, %s7
  %s10 = scalar_select 0, %s9, %s7
  $region1: #{_lambda_.3} parent=0
    #allocation2 [shape = 'u8[65536]{0}', space=vmem, size = 0x10000, scoped, tag = 'output window, operand 0']
    #allocation3 [shape = 's32[2]{0}', space=sflag, size = 0x8, scoped, tag = 'scoped memory for _lambda_.3']
    %11 = vsyncpa [#allocation3], 0
    %s12 = scalar_lea.sflag [#allocation3], 1
    %13 = vsyncpa %s12, 0
    loop: start=0, step=1, limit=4
    $region2: #{_lambda_.3} parent=1 // loop_pre_header
      _
    $region3: #{_lambda_.3} parent=1 // loop_header
      %s15 = sphi 0, %s19
      %p16 = scmp.ge.s32.totalorder %s15, 4
      %s25 = sphi 0, %s27
      %s28 = sphi 0, %s25
      %s29 = sphi 0, %s28
      %s45 = sphi 0, %s29
      %s49 = sphi 0, %s49
      %s51 = sphi 0, %s49
      %s52 = sphi 0, %s51
      %s66 = sphi 0, %s52
      %s70 = sphi 0, %s70
      %s72 = sphi 0, %s70
      %s73 = sphi 0, %s72
      %s87 = sphi 0, %s73
      %s93 = sphi 0, %s95
      %s96 = sphi 0, %s93
      %s97 = sphi 0, %s96
      %s113 = sphi 0, %s97
      %s117 = sphi 0, %s117
      %s119 = sphi 0, %s117
      %s120 = sphi 0, %s119
      %s134 = sphi 0, %s120
      %s138 = sphi 0, %s138
      %s140 = sphi 0, %s138
      %s141 = sphi 0, %s140
      %s155 = sphi 0, %s141
      %s161 = sphi 0, %s163
      %s164 = sphi 0, %s161
      %s165 = sphi 0, %s164
      %s181 = sphi 0, %s165
    $region4: #{_lambda_.3} parent=1 // loop_header_branch
      %18 = sbr.rel (%p16) target = $region8
    $region5: #{_lambda_.3} parent=1 // loop_body
      %s20 = ssub.s32 %s15, 1
      %s21 = ssub.s32 %s15, 2
      %s22 = sadd.s32 %s15, 1
      %s23 = ssub.s32 %s15, %s22
      %p24 = scmp.eq.s32.totalorder %s23, 0
      %s26 = sadd.s32 %s25, 1
      %s27 = scalar_select %p24, %s25, %s26
      %p30 = pneg %p24
      %p31 = scmp.eq.s32.totalorder %s15, 1
      %p32 = por %p30, %p31
      %p33 = scmp.ne.s32.totalorder %s25, %s28
      %p34 = scmp.eq.s32.totalorder %s15, 0
      %p35 = por %p33, %p34
      %p36 = scmp.ne.s32.totalorder %s25, %s28
      %p37 = scmp.eq.s32.totalorder %s20, 1
      %p38 = por %p36, %p37
      %p39 = scmp.ne.s32.totalorder %s28, %s29
      %p40 = scmp.eq.s32.totalorder %s20, 0
      %p41 = por %p39, %p40
      %p42 = scmp.ne.s32.totalorder %s28, %s29
      %p43 = scmp.eq.s32.totalorder %s21, 1
      %p44 = por %p42, %p43
      %p46 = scmp.ne.s32.totalorder %s29, %s45
      %p47 = scmp.eq.s32.totalorder %s21, 0
      %p48 = por %p46, %p47
      %s50 = sadd.s32 %s49, 1
      %p53 = scmp.eq.s32.totalorder %s15, 1
      %p54 = scmp.ne.s32.totalorder %s49, %s51
      %p55 = scmp.eq.s32.totalorder %s15, 0
      %p56 = por %p54, %p55
      %p57 = scmp.ne.s32.totalorder %s49, %s51
      %p58 = scmp.eq.s32.totalorder %s20, 1
      %p59 = por %p57, %p58
      %p60 = scmp.ne.s32.totalorder %s51, %s52
      %p61 = scmp.eq.s32.totalorder %s20, 0
      %p62 = por %p60, %p61
      %p63 = scmp.ne.s32.totalorder %s51, %s52
      %p64 = scmp.eq.s32.totalorder %s21, 1
      %p65 = por %p63, %p64
      %p67 = scmp.ne.s32.totalorder %s52, %s66
      %p68 = scmp.eq.s32.totalorder %s21, 0
      %p69 = por %p67, %p68
      %s71 = sadd.s32 %s70, 1
      %p74 = scmp.eq.s32.totalorder %s15, 1
      %p75 = scmp.ne.s32.totalorder %s70, %s72
      %p76 = scmp.eq.s32.totalorder %s15, 0
      %p77 = por %p75, %p76
      %p78 = scmp.ne.s32.totalorder %s70, %s72
      %p79 = scmp.eq.s32.totalorder %s20, 1
      %p80 = por %p78, %p79
      %p81 = scmp.ne.s32.totalorder %s72, %s73
      %p82 = scmp.eq.s32.totalorder %s20, 0
      %p83 = por %p81, %p82
      %p84 = scmp.ne.s32.totalorder %s72, %s73
      %p85 = scmp.eq.s32.totalorder %s21, 1
      %p86 = por %p84, %p85
      %p88 = scmp.ne.s32.totalorder %s73, %s87
      %p89 = scmp.eq.s32.totalorder %s21, 0
      %p90 = por %p88, %p89
      %s91 = ssub.s32 %s15, %s22
      %p92 = scmp.eq.s32.totalorder %s91, 0
      %s94 = sadd.s32 %s93, 1
      %s95 = scalar_select %p92, %s93, %s94
      %p98 = pneg %p92
      %p99 = scmp.eq.s32.totalorder %s15, 1
      %p100 = por %p98, %p99
      %p101 = scmp.ne.s32.totalorder %s93, %s96
      %p102 = scmp.eq.s32.totalorder %s15, 0
      %p103 = por %p101, %p102
      %p104 = scmp.ne.s32.totalorder %s93, %s96
      %p105 = scmp.eq.s32.totalorder %s20, 1
      %p106 = por %p104, %p105
      %p107 = scmp.ne.s32.totalorder %s96, %s97
      %p108 = scmp.eq.s32.totalorder %s20, 0
      %p109 = por %p107, %p108
      %p110 = scmp.ne.s32.totalorder %s96, %s97
      %p111 = scmp.eq.s32.totalorder %s21, 1
      %p112 = por %p110, %p111
      %p114 = scmp.ne.s32.totalorder %s97, %s113
      %p115 = scmp.eq.s32.totalorder %s21, 0
      %p116 = por %p114, %p115
      %s118 = sadd.s32 %s117, 1
      %p121 = scmp.eq.s32.totalorder %s15, 1
      %p122 = scmp.ne.s32.totalorder %s117, %s119
      %p123 = scmp.eq.s32.totalorder %s15, 0
      %p124 = por %p122, %p123
      %p125 = scmp.ne.s32.totalorder %s117, %s119
      %p126 = scmp.eq.s32.totalorder %s20, 1
      %p127 = por %p125, %p126
      %p128 = scmp.ne.s32.totalorder %s119, %s120
      %p129 = scmp.eq.s32.totalorder %s20, 0
      %p130 = por %p128, %p129
      %p131 = scmp.ne.s32.totalorder %s119, %s120
      %p132 = scmp.eq.s32.totalorder %s21, 1
      %p133 = por %p131, %p132
      %p135 = scmp.ne.s32.totalorder %s120, %s134
      %p136 = scmp.eq.s32.totalorder %s21, 0
      %p137 = por %p135, %p136
      %s139 = sadd.s32 %s138, 1
      %p142 = scmp.eq.s32.totalorder %s15, 1
      %p143 = scmp.ne.s32.totalorder %s138, %s140
      %p144 = scmp.eq.s32.totalorder %s15, 0
      %p145 = por %p143, %p144
      %p146 = scmp.ne.s32.totalorder %s138, %s140
      %p147 = scmp.eq.s32.totalorder %s20, 1
      %p148 = por %p146, %p147
      %p149 = scmp.ne.s32.totalorder %s140, %s141
      %p150 = scmp.eq.s32.totalorder %s20, 0
      %p151 = por %p149, %p150
      %p152 = scmp.ne.s32.totalorder %s140, %s141
      %p153 = scmp.eq.s32.totalorder %s21, 1
      %p154 = por %p152, %p153
      %p156 = scmp.ne.s32.totalorder %s141, %s155
      %p157 = scmp.eq.s32.totalorder %s21, 0
      %p158 = por %p156, %p157
      %s159 = ssub.s32 %s15, %s22
      %p160 = scmp.eq.s32.totalorder %s159, 0
      %s162 = sadd.s32 %s161, 1
      %s163 = scalar_select %p160, %s161, %s162
      %p166 = pneg %p160
      %p167 = scmp.eq.s32.totalorder %s15, 1
      %p168 = por %p166, %p167
      %p169 = scmp.ne.s32.totalorder %s161, %s164
      %p170 = scmp.eq.s32.totalorder %s15, 0
      %p171 = por %p169, %p170
      %p172 = scmp.ne.s32.totalorder %s161, %s164
      %p173 = scmp.eq.s32.totalorder %s20, 1
      %p174 = por %p172, %p173
      %p175 = scmp.ne.s32.totalorder %s164, %s165
      %p176 = scmp.eq.s32.totalorder %s20, 0
      %p177 = por %p175, %p176
      %p178 = scmp.ne.s32.totalorder %s164, %s165
      %p179 = scmp.eq.s32.totalorder %s21, 1
      %p180 = por %p178, %p179
      %p182 = scmp.ne.s32.totalorder %s165, %s181
      %p183 = scmp.eq.s32.totalorder %s21, 0
      %p184 = por %p182, %p183
      %p185 = scmp.le.s32.totalorder 1, %s15
      %p186 = scmp.lt.s32.totalorder %s15, 3
      %p187 = pnand %p185, %p186
      %p188 = pneg %p187
      // Predicated region
      $region9: #{_lambda_.3} parent=5 // pred_check
        _
      $region10: #{_lambda_.3} parent=5 // pred_check_branch
        %190 = sbr.rel (%p187) target = $region12
      $region11: #{_lambda_.3} parent=5 // pred_region
        %s191 = ssub.s32 %s15, 1
        // Predicated region
        $region13: #{_lambda_.3} parent=11 // pred_check
          %p192 = pneg %p62
        $region14: #{_lambda_.3} parent=11 // pred_check_branch
          %194 = sbr.rel (%p192) target = $region16
        $region15: #{_lambda_.3} parent=11 // pred_region
          _
        $region16: #{_lambda_.3} parent=11 // pred_fallthru
          _
        // Predicated region
        $region17: #{_lambda_.3} parent=11 // pred_check
          %p195 = pneg %p83
        $region18: #{_lambda_.3} parent=11 // pred_check_branch
          %197 = sbr.rel (%p195) target = $region20
        $region19: #{_lambda_.3} parent=11 // pred_region
          _
        $region20: #{_lambda_.3} parent=11 // pred_fallthru
          _
        // Predicated region
        $region21: #{_lambda_.3} parent=11 // pred_check
          %p198 = pneg %p130
        $region22: #{_lambda_.3} parent=11 // pred_check_branch
          %200 = sbr.rel (%p198) target = $region24
        $region23: #{_lambda_.3} parent=11 // pred_region
          _
        $region24: #{_lambda_.3} parent=11 // pred_fallthru
          _
        // Predicated region
        $region25: #{_lambda_.3} parent=11 // pred_check
          %p201 = pneg %p151
        $region26: #{_lambda_.3} parent=11 // pred_check_branch
          %203 = sbr.rel (%p201) target = $region28
        $region27: #{_lambda_.3} parent=11 // pred_region
          _
        $region28: #{_lambda_.3} parent=11 // pred_fallthru
          _
      $region12: #{_lambda_.3} parent=5 // pred_fallthru
        _
      %p204 = scmp.lt.s32.totalorder %s15, 2
      // Predicated region
      $region29: #{_lambda_.3} parent=5 // pred_check
        %p205 = pneg %p204
      $region30: #{_lambda_.3} parent=5 // pred_check_branch
        %207 = sbr.rel (%p205) target = $region32
      $region31: #{_lambda_.3} parent=5 // pred_region
        // Predicated region
        $region33: #{_lambda_.3} parent=31 // pred_check
          %p208 = pneg %p35
        $region34: #{_lambda_.3} parent=31 // pred_check_branch
          %210 = sbr.rel (%p208) target = $region36
        $region35: #{_lambda_.3} parent=31 // pred_region
          %p211 = scmp.lt.s32.totalorder %s15, 1
          %s212 = scalar_select %p211, %s15, 1
          %s213 = smul.addr %s212, 72
          %s214 = smul.addr %s213, 4
          %s215 = scalar_lea.vmem %s0, %s214
        $region36: #{_lambda_.3} parent=31 // pred_fallthru
          _
        // Predicated region
        $region37: #{_lambda_.3} parent=31 // pred_check
          %p216 = pneg %p103
        $region38: #{_lambda_.3} parent=31 // pred_check_branch
          %218 = sbr.rel (%p216) target = $region40
        $region39: #{_lambda_.3} parent=31 // pred_region
          %p219 = scmp.lt.s32.totalorder %s15, 1
          %s220 = scalar_select %p219, %s15, 1
          %s221 = smul.addr %s220, 8
          %s222 = smul.addr %s221, 4
          %s223 = scalar_lea.vmem %s3, %s222
        $region40: #{_lambda_.3} parent=31 // pred_fallthru
          _
      $region32: #{_lambda_.3} parent=5 // pred_fallthru
        _
      %p224 = scmp.le.s32.totalorder 1, %s15
      %p225 = scmp.lt.s32.totalorder %s15, 3
      %p226 = pnand %p224, %p225
      %p227 = pneg %p226
      // Predicated region
      $region41: #{_lambda_.3} parent=5 // pred_check
        _
      $region42: #{_lambda_.3} parent=5 // pred_check_branch
        %229 = sbr.rel (%p226) target = $region44
      $region43: #{_lambda_.3} parent=5 // pred_region
        %s230 = ssub.s32 %s15, 1
        %p231 = scmp.lt.s32.totalorder %s20, 1
        %s232 = scalar_select %p231, %s20, 1
        %s233 = smul.addr %s232, 72
        %s234 = smul.addr %s233, 4
        %s235 = scalar_lea.vmem %s0, %s234
        %p236 = pneg %p41
        %p237 = pneg %p38
        %p238 = pneg %p62
        %p239 = pneg %p59
        %p240 = pneg %p83
        %p241 = pneg %p80
        %p242 = scmp.lt.s32.totalorder %s20, 1
        %s243 = scalar_select %p242, %s20, 1
        %s244 = smul.addr %s243, 8
        %s245 = smul.addr %s244, 4
        %s246 = scalar_lea.vmem %s3, %s245
        %p247 = pneg %p109
        %p248 = pneg %p106
        %p249 = pneg %p130
        %p250 = pneg %p127
        %p251 = pneg %p151
        %p252 = pneg %p148
        %p253 = pneg %p177
        %p254 = pneg %p174
        %s255 = sand.u32 %s164, 1
        %s256 = scalar_lea.sflag [#allocation3], %s255
        %s257 = sand.u32 %s164, 1
        %s258 = smul.addr %s257, 64
        %s259 = scalar_lea.vmem [#allocation2], %s258
        %p260 = scmp.lt.s32.totalorder %s20, 1
        %s261 = scalar_select %p260, %s20, 1
        %s262 = smul.addr %s261, 72
        %s263 = smul.addr %s262, 4
        %s264 = scalar_lea.vmem %s0, %s263
        %p265 = scmp.lt.s32.totalorder %s20, 1
        %s266 = scalar_select %p265, %s20, 1
        %s267 = smul.addr %s266, 8
        %s268 = smul.addr %s267, 4
        %s269 = scalar_lea.vmem %s3, %s268
        %v271 = vld [vmem:[%s264] sm:$0xf]
        %v272 = vld [vmem:[%s264 + $0x4] sm:$0x1]
        %v273 = vld [vmem:[%s264 + $0x8] sm:$0xf]
        %v274 = vld [vmem:[%s264 + $0xc] sm:$0x1]
        %v275 = vld [vmem:[%s264 + $0x10] sm:$0xf]
        %v276 = vld [vmem:[%s264 + $0x14] sm:$0x1]
        %v277 = vld [vmem:[%s264 + $0x18] sm:$0xf]
        %v278 = vld [vmem:[%s264 + $0x1c] sm:$0x1]
        %v279 = vld [vmem:[%s264 + $0x20] sm:$0xf]
        %v280 = vld [vmem:[%s264 + $0x24] sm:$0x1]
        %v281 = vld [vmem:[%s264 + $0x28] sm:$0xf]
        %v282 = vld [vmem:[%s264 + $0x2c] sm:$0x1]
        %v283 = vld [vmem:[%s264 + $0x30] sm:$0xf]
        %v284 = vld [vmem:[%s264 + $0x34] sm:$0x1]
        %v285 = vld [vmem:[%s264 + $0x38] sm:$0xf]
        %v286 = vld [vmem:[%s264 + $0x3c] sm:$0x1]
        %v287 = vld [vmem:[%s264 + $0x40] sm:$0xf]
        %v288 = vld [vmem:[%s264 + $0x44] sm:$0x1]
        %v289 = vld [vmem:[%s264 + $0x48] sm:$0xf]
        %v290 = vld [vmem:[%s264 + $0x50] sm:$0xf]
        %v291 = vld [vmem:[%s264 + $0x58] sm:$0xf]
        %v292 = vld [vmem:[%s264 + $0x60] sm:$0xf]
        %v293 = vld [vmem:[%s264 + $0x68] sm:$0xf]
        %v294 = vld [vmem:[%s264 + $0x70] sm:$0xf]
        %v295 = vld [vmem:[%s264 + $0x78] sm:$0xf]
        %v296 = vld [vmem:[%s264 + $0x80] sm:$0xf]
        %v297 = vld [vmem:[%s264 + $0x88] sm:$0xf]
        %v298 = vld [vmem:[%s264 + $0x90] sm:$0xf]
        %v299 = vld [vmem:[%s264 + $0x94] sm:$0x1]
        %v300 = vld [vmem:[%s264 + $0x98] sm:$0xf]
        %v301 = vld [vmem:[%s264 + $0x9c] sm:$0x1]
        %v302 = vld [vmem:[%s264 + $0xa0] sm:$0xf]
        %v303 = vld [vmem:[%s264 + $0xa4] sm:$0x1]
        %v304 = vld [vmem:[%s264 + $0xa8] sm:$0xf]
        %v305 = vld [vmem:[%s264 + $0xac] sm:$0x1]
        %v306 = vld [vmem:[%s264 + $0xb0] sm:$0xf]
        %v307 = vld [vmem:[%s264 + $0xb4] sm:$0x1]
        %v308 = vld [vmem:[%s264 + $0xb8] sm:$0xf]
        %v309 = vld [vmem:[%s264 + $0xbc] sm:$0x1]
        %v310 = vld [vmem:[%s264 + $0xc0] sm:$0xf]
        %v311 = vld [vmem:[%s264 + $0xc4] sm:$0x1]
        %v312 = vld [vmem:[%s264 + $0xc8] sm:$0xf]
        %v313 = vld [vmem:[%s264 + $0xcc] sm:$0x1]
        %v314 = vld [vmem:[%s264 + $0xd8] sm:$0xf]
        %v315 = vld [vmem:[%s264 + $0xe0] sm:$0xf]
        %v316 = vld [vmem:[%s264 + $0xe8] sm:$0xf]
        %v317 = vld [vmem:[%s264 + $0xf0] sm:$0xf]
        %v318 = vld [vmem:[%s264 + $0xf8] sm:$0xf]
        %v319 = vld [vmem:[%s264 + $0x100] sm:$0xf]
        %v320 = vld [vmem:[%s264 + $0x108] sm:$0xf]
        %v321 = vld [vmem:[%s264 + $0x110] sm:$0xf]
        %vm322 = vsmask.f32 3328
        %vm323 = vsmask.f32 7440
        %vm324 = vmor %vm322, %vm323
        %v326 = vshrl.u32 %v271, 16
        %v328 = vrot.slane %v326, 4
        %v329 = vshll.u32 %v271, 16
        %v331 = vrot.slane %v329, 5
        %v332 = vor.u32 %v328, %v331
        %v333 = vrot.slane %v332, 4
        %v335 = vshll.u32 %v272, 16
        %v337 = vrot.slane %v335, 5
        %v338 = vsel %vm324, %v333, %v337
        %v340 = vshrl.u32 %v273, 16
        %v342 = vrot.slane %v340, 4
        %v343 = vshll.u32 %v273, 16
        %v345 = vrot.slane %v343, 5
        %v346 = vor.u32 %v342, %v345
        %v347 = vrot.slane %v346, 4
        %v349 = vshll.u32 %v274, 16
        %v351 = vrot.slane %v349, 5
        %v352 = vsel %vm324, %v347, %v351
        %v354 = vshrl.u32 %v275, 16
        %v356 = vrot.slane %v354, 4
        %v357 = vshll.u32 %v275, 16
        %v359 = vrot.slane %v357, 5
        %v360 = vor.u32 %v356, %v359
        %v361 = vrot.slane %v360, 4
        %v363 = vshll.u32 %v276, 16
        %v365 = vrot.slane %v363, 5
        %v366 = vsel %vm324, %v361, %v365
        %v368 = vshrl.u32 %v277, 16
        %v370 = vrot.slane %v368, 4
        %v371 = vshll.u32 %v277, 16
        %v373 = vrot.slane %v371, 5
        %v374 = vor.u32 %v370, %v373
        %v375 = vrot.slane %v374, 4
        %v377 = vshll.u32 %v278, 16
        %v379 = vrot.slane %v377, 5
        %v380 = vsel %vm324, %v375, %v379
        %v382 = vshrl.u32 %v279, 16
        %v384 = vrot.slane %v382, 4
        %v385 = vshll.u32 %v279, 16
        %v387 = vrot.slane %v385, 5
        %v388 = vor.u32 %v384, %v387
        %v389 = vrot.slane %v388, 4
        %v391 = vshll.u32 %v280, 16
        %v393 = vrot.slane %v391, 5
        %v394 = vsel %vm324, %v389, %v393
        %v396 = vshrl.u32 %v281, 16
        %v398 = vrot.slane %v396, 4
        %v399 = vshll.u32 %v281, 16
        %v401 = vrot.slane %v399, 5
        %v402 = vor.u32 %v398, %v401
        %v403 = vrot.slane %v402, 4
        %v405 = vshll.u32 %v282, 16
        %v407 = vrot.slane %v405, 5
        %v408 = vsel %vm324, %v403, %v407
        %v410 = vshrl.u32 %v283, 16
        %v412 = vrot.slane %v410, 4
        %v413 = vshll.u32 %v283, 16
        %v415 = vrot.slane %v413, 5
        %v416 = vor.u32 %v412, %v415
        %v417 = vrot.slane %v416, 4
        %v419 = vshll.u32 %v284, 16
        %v421 = vrot.slane %v419, 5
        %v422 = vsel %vm324, %v417, %v421
        %v424 = vshrl.u32 %v285, 16
        %v426 = vrot.slane %v424, 4
        %v427 = vshll.u32 %v285, 16
        %v429 = vrot.slane %v427, 5
        %v430 = vor.u32 %v426, %v429
        %v431 = vrot.slane %v430, 4
        %v433 = vshll.u32 %v286, 16
        %v435 = vrot.slane %v433, 5
        %v436 = vsel %vm324, %v431, %v435
        %v438 = vshrl.u32 %v298, 16
        %v440 = vrot.slane %v438, 4
        %v441 = vshll.u32 %v298, 16
        %v443 = vrot.slane %v441, 5
        %v444 = vor.u32 %v440, %v443
        %v445 = vrot.slane %v444, 4
        %v447 = vshll.u32 %v299, 16
        %v449 = vrot.slane %v447, 5
        %v450 = vsel %vm324, %v445, %v449
        %v452 = vshrl.u32 %v300, 16
        %v454 = vrot.slane %v452, 4
        %v455 = vshll.u32 %v300, 16
        %v457 = vrot.slane %v455, 5
        %v458 = vor.u32 %v454, %v457
        %v459 = vrot.slane %v458, 4
        %v461 = vshll.u32 %v301, 16
        %v463 = vrot.slane %v461, 5
        %v464 = vsel %vm324, %v459, %v463
        %v466 = vshrl.u32 %v302, 16
        %v468 = vrot.slane %v466, 4
        %v469 = vshll.u32 %v302, 16
        %v471 = vrot.slane %v469, 5
        %v472 = vor.u32 %v468, %v471
        %v473 = vrot.slane %v472, 4
        %v475 = vshll.u32 %v303, 16
        %v477 = vrot.slane %v475, 5
        %v478 = vsel %vm324, %v473, %v477
        %v480 = vshrl.u32 %v304, 16
        %v482 = vrot.slane %v480, 4
        %v483 = vshll.u32 %v304, 16
        %v485 = vrot.slane %v483, 5
        %v486 = vor.u32 %v482, %v485
        %v487 = vrot.slane %v486, 4
        %v489 = vshll.u32 %v305, 16
        %v491 = vrot.slane %v489, 5
        %v492 = vsel %vm324, %v487, %v491
        %v494 = vshrl.u32 %v306, 16
        %v496 = vrot.slane %v494, 4
        %v497 = vshll.u32 %v306, 16
        %v499 = vrot.slane %v497, 5
        %v500 = vor.u32 %v496, %v499
        %v501 = vrot.slane %v500, 4
        %v503 = vshll.u32 %v307, 16
        %v505 = vrot.slane %v503, 5
        %v506 = vsel %vm324, %v501, %v505
        %v508 = vshrl.u32 %v308, 16
        %v510 = vrot.slane %v508, 4
        %v511 = vshll.u32 %v308, 16
        %v513 = vrot.slane %v511, 5
        %v514 = vor.u32 %v510, %v513
        %v515 = vrot.slane %v514, 4
        %v517 = vshll.u32 %v309, 16
        %v519 = vrot.slane %v517, 5
        %v520 = vsel %vm324, %v515, %v519
        %v522 = vshrl.u32 %v310, 16
        %v524 = vrot.slane %v522, 4
        %v525 = vshll.u32 %v310, 16
        %v527 = vrot.slane %v525, 5
        %v528 = vor.u32 %v524, %v527
        %v529 = vrot.slane %v528, 4
        %v531 = vshll.u32 %v311, 16
        %v533 = vrot.slane %v531, 5
        %v534 = vsel %vm324, %v529, %v533
        %v536 = vshrl.u32 %v312, 16
        %v538 = vrot.slane %v536, 4
        %v539 = vshll.u32 %v312, 16
        %v541 = vrot.slane %v539, 5
        %v542 = vor.u32 %v538, %v541
        %v543 = vrot.slane %v542, 4
        %v545 = vshll.u32 %v313, 16
        %v547 = vrot.slane %v545, 5
        %v548 = vsel %vm324, %v543, %v547
        %v550 = vshrl.u32 %v287, 16
        %v552 = vrot.slane %v550, 4
        %v553 = vshll.u32 %v287, 16
        %v555 = vrot.slane %v553, 5
        %v556 = vor.u32 %v552, %v555
        %v557 = vrot.slane %v556, 4
        %v559 = vshll.u32 %v288, 16
        %v561 = vrot.slane %v559, 5
        %v562 = vsel %vm324, %v557, %v561
        %v563 = vld [vmem:[%s1] sm:$0xf]
        %v564 = vld [vmem:[%s1 + $0x4] sm:$0xf]
        %s565 = scalar_lea.vmem %s1, 8
        %v566 = vld [vmem:[%s565] sm:$0xf]
        %v567 = vld [vmem:[%s565 + $0x4] sm:$0xf]
        %v576 = vunpack.c.l.b16 %v289
        %v577 = vunpack.c.l.b16 %v290
        %v578 = vunpack.c.l.b16 %v291
        %v579 = vunpack.c.l.b16 %v292
        %v580 = vunpack.c.l.b16 %v293
        %v581 = vunpack.c.l.b16 %v294
        %v582 = vunpack.c.l.b16 %v295
        %v583 = vunpack.c.l.b16 %v296
        %v584 = vpack.c.b16 %v577, %v576
        %v585 = vpack.c.b16 %v579, %v578
        %v586 = vpack.c.b16 %v581, %v580
        %v587 = vpack.c.b16 %v583, %v582
        %v590 = vunpack.c.l.b16 %v566
        %v591 = vunpack.c.l.b16 %v567
        %v592 = vpack.c.b16 %v591, %v590
        %vm594 = vcmask 130048
        %v596 = vsel %vm594, %v584, 0
        %v599 = vsel %vm594, %v585, 0
        %v602 = vsel %vm594, %v586, 0
        %v605 = vsel %vm594, %v587, 0
        %607 = vmatprep.subr.bf16.mxu0 0
        %608 = vmatpush1.bf16.msra.mxu0 %v592
        %609 = vmatprep.subr.bf16.mxu0 0
        %610 = vmatpush1.bf16.msra.mxu0 0
        %611 = vmatprep.subr.bf16.mxu0 0
        %612 = vmatpush1.bf16.msra.mxu0 0
        %613 = vmatprep.subr.bf16.mxu0 0
        %614 = vmatpush1.bf16.msra.mxu0 0
        %615 = vmatprep.subr.bf16.mxu0 0
        %616 = vmatpush1.bf16.msra.mxu0 0
        %617 = vmatprep.subr.bf16.mxu0 0
        %618 = vmatpush1.bf16.msra.mxu0 0
        %619 = vmatprep.subr.bf16.mxu0 0
        %620 = vmatpush1.bf16.msra.mxu0 0
        %621 = vmatprep.subr.bf16.mxu0 0
        %622 = vmatpush1.bf16.msra.mxu0 0
        %623 = vmatprep.subr.bf16.mxu0 0
        %624 = vmatpush1.bf16.msra.mxu0 0
        %625 = vmatprep.subr.bf16.mxu0 0
        %626 = vmatpush1.bf16.msra.mxu0 0
        %627 = vmatprep.subr.bf16.mxu0 0
        %628 = vmatpush1.bf16.msra.mxu0 0
        %629 = vmatprep.subr.bf16.mxu0 0
        %630 = vmatpush1.bf16.msra.mxu0 0
        %631 = vmatprep.subr.bf16.mxu0 0
        %632 = vmatpush1.bf16.msra.mxu0 0
        %633 = vmatprep.subr.bf16.mxu0 0
        %634 = vmatpush1.bf16.msra.mxu0 0
        %635 = vmatprep.subr.bf16.mxu0 0
        %636 = vmatpush1.bf16.msra.mxu0 0
        %637 = vmatprep.subr.bf16.mxu0 0
        %638 = vmatpush1.bf16.msra.mxu0 0
        %639 = vmatprep.mubr.bf16.mxu0 0
        %640 = vmatmul.mubr.bf16.gmra.mrb[0].mxu0 %v596
        %v641 = vpop.f32.mrb[0].mxu0
        %v642 = vadd.f32 0.0, %v641
        %v643 = vpop.f32.mrb[0].mxu0
        %v644 = vpop.f32.mrb[0].mxu0
        %v645 = vadd.f32 0.0, %v644
        %v646 = vpop.f32.mrb[0].mxu0
        %647 = vmatprep.mubr.bf16.mxu0 0
        %648 = vmatmul.mubr.bf16.gmra.mrb[0].mxu0 %v599
        %v649 = vpop.f32.mrb[0].mxu0
        %v650 = vadd.f32 0.0, %v649
        %v651 = vpop.f32.mrb[0].mxu0
        %v652 = vpop.f32.mrb[0].mxu0
        %v653 = vadd.f32 0.0, %v652
        %v654 = vpop.f32.mrb[0].mxu0
        %655 = vmatprep.mubr.bf16.mxu0 0
        %656 = vmatmul.mubr.bf16.gmra.mrb[0].mxu0 %v602
        %v657 = vpop.f32.mrb[0].mxu0
        %v658 = vadd.f32 0.0, %v657
        %v659 = vpop.f32.mrb[0].mxu0
        %v660 = vpop.f32.mrb[0].mxu0
        %v661 = vadd.f32 0.0, %v660
        %v662 = vpop.f32.mrb[0].mxu0
        %663 = vmatprep.mubr.bf16.mxu0 0
        %664 = vmatmul.mubr.bf16.gmra.mrb[0].mxu0 %v605
        %v665 = vpop.f32.mrb[0].mxu0
        %v666 = vadd.f32 0.0, %v665
        %v667 = vpop.f32.mrb[0].mxu0
        %v668 = vpop.f32.mrb[0].mxu0
        %v669 = vadd.f32 0.0, %v668
        %v670 = vpop.f32.mrb[0].mxu0
        %671 = vdwg.mxu0
        %v680 = vunpack.c.l.b16 %v271
        %v681 = vunpack.c.l.b16 %v273
        %v682 = vunpack.c.l.b16 %v275
        %v683 = vunpack.c.l.b16 %v277
        %v684 = vunpack.c.l.b16 %v279
        %v685 = vunpack.c.l.b16 %v281
        %v686 = vunpack.c.l.b16 %v283
        %v687 = vunpack.c.l.b16 %v285
        %v688 = vpack.c.b16 %v681, %v680
        %v689 = vpack.c.b16 %v683, %v682
        %v690 = vpack.c.b16 %v685, %v684
        %v691 = vpack.c.b16 %v687, %v686
        %v694 = vunpack.c.l.b16 %v563
        %v695 = vunpack.c.l.b16 %v564
        %v696 = vpack.c.b16 %v695, %v694
        %v699 = vsel %vm594, %v688, 0
        %v702 = vsel %vm594, %v689, 0
        %v705 = vsel %vm594, %v690, 0
        %v708 = vsel %vm594, %v691, 0
        %710 = vmatprep.subr.bf16.mxu0 0
        %711 = vmatpush1.bf16.msra.mxu0 %v696
        %712 = vmatprep.subr.bf16.mxu0 0
        %713 = vmatpush1.bf16.msra.mxu0 0
        %714 = vmatprep.subr.bf16.mxu0 0
        %715 = vmatpush1.bf16.msra.mxu0 0
        %716 = vmatprep.subr.bf16.mxu0 0
        %717 = vmatpush1.bf16.msra.mxu0 0
        %718 = vmatprep.subr.bf16.mxu0 0
        %719 = vmatpush1.bf16.msra.mxu0 0
        %720 = vmatprep.subr.bf16.mxu0 0
        %721 = vmatpush1.bf16.msra.mxu0 0
        %722 = vmatprep.subr.bf16.mxu0 0
        %723 = vmatpush1.bf16.msra.mxu0 0
        %724 = vmatprep.subr.bf16.mxu0 0
        %725 = vmatpush1.bf16.msra.mxu0 0
        %726 = vmatprep.subr.bf16.mxu0 0
        %727 = vmatpush1.bf16.msra.mxu0 0
        %728 = vmatprep.subr.bf16.mxu0 0
        %729 = vmatpush1.bf16.msra.mxu0 0
        %730 = vmatprep.subr.bf16.mxu0 0
        %731 = vmatpush1.bf16.msra.mxu0 0
        %732 = vmatprep.subr.bf16.mxu0 0
        %733 = vmatpush1.bf16.msra.mxu0 0
        %734 = vmatprep.subr.bf16.mxu0 0
        %735 = vmatpush1.bf16.msra.mxu0 0
        %736 = vmatprep.subr.bf16.mxu0 0
        %737 = vmatpush1.bf16.msra.mxu0 0
        %738 = vmatprep.subr.bf16.mxu0 0
        %739 = vmatpush1.bf16.msra.mxu0 0
        %740 = vmatprep.subr.bf16.mxu0 0
        %741 = vmatpush1.bf16.msra.mxu0 0
        %742 = vmatprep.mubr.bf16.mxu0 0
        %743 = vmatmul.mubr.bf16.gmra.mrb[0].mxu0 %v699
        %v744 = vpop.f32.mrb[0].mxu0
        %v745 = vadd.f32 %v642, %v744
        %v746 = vpop.f32.mrb[0].mxu0
        %v747 = vpop.f32.mrb[0].mxu0
        %v748 = vadd.f32 %v645, %v747
        %v749 = vpop.f32.mrb[0].mxu0
        %750 = vmatprep.mubr.bf16.mxu0 0
        %751 = vmatmul.mubr.bf16.gmra.mrb[0].mxu0 %v702
        %v752 = vpop.f32.mrb[0].mxu0
        %v753 = vadd.f32 %v650, %v752
        %v754 = vpop.f32.mrb[0].mxu0
        %v755 = vpop.f32.mrb[0].mxu0
        %v756 = vadd.f32 %v653, %v755
        %v757 = vpop.f32.mrb[0].mxu0
        %758 = vmatprep.mubr.bf16.mxu0 0
        %759 = vmatmul.mubr.bf16.gmra.mrb[0].mxu0 %v705
        %v760 = vpop.f32.mrb[0].mxu0
        %v761 = vadd.f32 %v658, %v760
        %v762 = vpop.f32.mrb[0].mxu0
        %v763 = vpop.f32.mrb[0].mxu0
        %v764 = vadd.f32 %v661, %v763
        %v765 = vpop.f32.mrb[0].mxu0
        %766 = vmatprep.mubr.bf16.mxu0 0
        %767 = vmatmul.mubr.bf16.gmra.mrb[0].mxu0 %v708
        %v768 = vpop.f32.mrb[0].mxu0
        %v769 = vadd.f32 %v666, %v768
        %v770 = vpop.f32.mrb[0].mxu0
        %v771 = vpop.f32.mrb[0].mxu0
        %v772 = vadd.f32 %v669, %v771
        %v773 = vpop.f32.mrb[0].mxu0
        %774 = vdwg.mxu0
        %s775 = scalar_lea.vmem %s1, 16
        %v776 = vld [vmem:[%s775] sm:$0xf]
        %v777 = vld [vmem:[%s775 + $0x4] sm:$0xf]
        %v778 = vunpack.c.l.b16 %v338
        %v779 = vunpack.c.l.b16 %v352
        %v780 = vunpack.c.l.b16 %v366
        %v781 = vunpack.c.l.b16 %v380
        %v782 = vunpack.c.l.b16 %v394
        %v783 = vunpack.c.l.b16 %v408
        %v784 = vunpack.c.l.b16 %v422
        %v785 = vunpack.c.l.b16 %v436
        %v786 = vpack.c.b16 %v779, %v778
        %v787 = vpack.c.b16 %v781, %v780
        %v788 = vpack.c.b16 %v783, %v782
        %v789 = vpack.c.b16 %v785, %v784
        %v792 = vunpack.c.l.b16 %v776
        %v793 = vunpack.c.l.b16 %v777
        %v794 = vpack.c.b16 %v793, %v792
        %v797 = vsel %vm594, %v786, 0
        %v800 = vsel %vm594, %v787, 0
        %v803 = vsel %vm594, %v788, 0
        %v806 = vsel %vm594, %v789, 0
        %808 = vmatprep.subr.bf16.mxu0 0
        %809 = vmatpush1.bf16.msra.mxu0 %v794
        %810 = vmatprep.subr.bf16.mxu0 0
        %811 = vmatpush1.bf16.msra.mxu0 0
        %812 = vmatprep.subr.bf16.mxu0 0
        %813 = vmatpush1.bf16.msra.mxu0 0
        %814 = vmatprep.subr.bf16.mxu0 0
        %815 = vmatpush1.bf16.msra.mxu0 0
        %816 = vmatprep.subr.bf16.mxu0 0
        %817 = vmatpush1.bf16.msra.mxu0 0
        %818 = vmatprep.subr.bf16.mxu0 0
        %819 = vmatpush1.bf16.msra.mxu0 0
        %820 = vmatprep.subr.bf16.mxu0 0
        %821 = vmatpush1.bf16.msra.mxu0 0
        %822 = vmatprep.subr.bf16.mxu0 0
        %823 = vmatpush1.bf16.msra.mxu0 0
        %824 = vmatprep.subr.bf16.mxu0 0
        %825 = vmatpush1.bf16.msra.mxu0 0
        %826 = vmatprep.subr.bf16.mxu0 0
        %827 = vmatpush1.bf16.msra.mxu0 0
        %828 = vmatprep.subr.bf16.mxu0 0
        %829 = vmatpush1.bf16.msra.mxu0 0
        %830 = vmatprep.subr.bf16.mxu0 0
        %831 = vmatpush1.bf16.msra.mxu0 0
        %832 = vmatprep.subr.bf16.mxu0 0
        %833 = vmatpush1.bf16.msra.mxu0 0
        %834 = vmatprep.subr.bf16.mxu0 0
        %835 = vmatpush1.bf16.msra.mxu0 0
        %836 = vmatprep.subr.bf16.mxu0 0
        %837 = vmatpush1.bf16.msra.mxu0 0
        %838 = vmatprep.subr.bf16.mxu0 0
        %839 = vmatpush1.bf16.msra.mxu0 0
        %840 = vmatprep.mubr.bf16.mxu0 0
        %841 = vmatmul.mubr.bf16.gmra.mrb[0].mxu0 %v797
        %v842 = vpop.f32.mrb[0].mxu0
        %v843 = vadd.f32 0.0, %v842
        %v844 = vpop.f32.mrb[0].mxu0
        %v845 = vpop.f32.mrb[0].mxu0
        %v846 = vadd.f32 0.0, %v845
        %v847 = vpop.f32.mrb[0].mxu0
        %848 = vmatprep.mubr.bf16.mxu0 0
        %849 = vmatmul.mubr.bf16.gmra.mrb[0].mxu0 %v800
        %v850 = vpop.f32.mrb[0].mxu0
        %v851 = vadd.f32 0.0, %v850
        %v852 = vpop.f32.mrb[0].mxu0
        %v853 = vpop.f32.mrb[0].mxu0
        %v854 = vadd.f32 0.0, %v853
        %v855 = vpop.f32.mrb[0].mxu0
        %856 = vmatprep.mubr.bf16.mxu0 0
        %857 = vmatmul.mubr.bf16.gmra.mrb[0].mxu0 %v803
        %v858 = vpop.f32.mrb[0].mxu0
        %v859 = vadd.f32 0.0, %v858
        %v860 = vpop.f32.mrb[0].mxu0
        %v861 = vpop.f32.mrb[0].mxu0
        %v862 = vadd.f32 0.0, %v861
        %v863 = vpop.f32.mrb[0].mxu0
        %864 = vmatprep.mubr.bf16.mxu0 0
        %865 = vmatmul.mubr.bf16.gmra.mrb[0].mxu0 %v806
        %v866 = vpop.f32.mrb[0].mxu0
        %v867 = vadd.f32 0.0, %v866
        %v868 = vpop.f32.mrb[0].mxu0
        %v869 = vpop.f32.mrb[0].mxu0
        %v870 = vadd.f32 0.0, %v869
        %v871 = vpop.f32.mrb[0].mxu0
        %872 = vdwg.mxu0
        %v873 = vadd.f32 %v745, %v843
        %v874 = vadd.f32 %v748, %v846
        %v875 = vadd.f32 %v753, %v851
        %v876 = vadd.f32 %v756, %v854
        %v877 = vadd.f32 %v761, %v859
        %v878 = vadd.f32 %v764, %v862
        %v879 = vadd.f32 %v769, %v867
        %v880 = vadd.f32 %v772, %v870
        %s881 = scalar_lea.vmem %s1, 24
        %v882 = vld [vmem:[%s881] sm:$0xf]
        %v883 = vld [vmem:[%s881 + $0x4] sm:$0xf]
        %v892 = vunpack.c.l.b16 %v298
        %v893 = vunpack.c.l.b16 %v300
        %v894 = vunpack.c.l.b16 %v302
        %v895 = vunpack.c.l.b16 %v304
        %v896 = vunpack.c.l.b16 %v306
        %v897 = vunpack.c.l.b16 %v308
        %v898 = vunpack.c.l.b16 %v310
        %v899 = vunpack.c.l.b16 %v312
        %v900 = vpack.c.b16 %v893, %v892
        %v901 = vpack.c.b16 %v895, %v894
        %v902 = vpack.c.b16 %v897, %v896
        %v903 = vpack.c.b16 %v899, %v898
        %v906 = vunpack.c.l.b16 %v882
        %v907 = vunpack.c.l.b16 %v883
        %v908 = vpack.c.b16 %v907, %v906
        %v911 = vsel %vm594, %v900, 0
        %v914 = vsel %vm594, %v901, 0
        %v917 = vsel %vm594, %v902, 0
        %v920 = vsel %vm594, %v903, 0
        %922 = vmatprep.subr.bf16.mxu0 0
        %923 = vmatpush1.bf16.msra.mxu0 %v908
        %924 = vmatprep.subr.bf16.mxu0 0
        %925 = vmatpush1.bf16.msra.mxu0 0
        %926 = vmatprep.subr.bf16.mxu0 0
        %927 = vmatpush1.bf16.msra.mxu0 0
        %928 = vmatprep.subr.bf16.mxu0 0
        %929 = vmatpush1.bf16.msra.mxu0 0
        %930 = vmatprep.subr.bf16.mxu0 0
        %931 = vmatpush1.bf16.msra.mxu0 0
        %932 = vmatprep.subr.bf16.mxu0 0
        %933 = vmatpush1.bf16.msra.mxu0 0
        %934 = vmatprep.subr.bf16.mxu0 0
        %935 = vmatpush1.bf16.msra.mxu0 0
        %936 = vmatprep.subr.bf16.mxu0 0
        %937 = vmatpush1.bf16.msra.mxu0 0
        %938 = vmatprep.subr.bf16.mxu0 0
        %939 = vmatpush1.bf16.msra.mxu0 0
        %940 = vmatprep.subr.bf16.mxu0 0
        %941 = vmatpush1.bf16.msra.mxu0 0
        %942 = vmatprep.subr.bf16.mxu0 0
        %943 = vmatpush1.bf16.msra.mxu0 0
        %944 = vmatprep.subr.bf16.mxu0 0
        %945 = vmatpush1.bf16.msra.mxu0 0
        %946 = vmatprep.subr.bf16.mxu0 0
        %947 = vmatpush1.bf16.msra.mxu0 0
        %948 = vmatprep.subr.bf16.mxu0 0
        %949 = vmatpush1.bf16.msra.mxu0 0
        %950 = vmatprep.subr.bf16.mxu0 0
        %951 = vmatpush1.bf16.msra.mxu0 0
        %952 = vmatprep.subr.bf16.mxu0 0
        %953 = vmatpush1.bf16.msra.mxu0 0
        %954 = vmatprep.mubr.bf16.mxu0 0
        %955 = vmatmul.mubr.bf16.gmra.mrb[0].mxu0 %v911
        %v956 = vpop.f32.mrb[0].mxu0
        %v957 = vadd.f32 0.0, %v956
        %v958 = vpop.f32.mrb[0].mxu0
        %v959 = vpop.f32.mrb[0].mxu0
        %v960 = vadd.f32 0.0, %v959
        %v961 = vpop.f32.mrb[0].mxu0
        %962 = vmatprep.mubr.bf16.mxu0 0
        %963 = vmatmul.mubr.bf16.gmra.mrb[0].mxu0 %v914
        %v964 = vpop.f32.mrb[0].mxu0
        %v965 = vadd.f32 0.0, %v964
        %v966 = vpop.f32.mrb[0].mxu0
        %v967 = vpop.f32.mrb[0].mxu0
        %v968 = vadd.f32 0.0, %v967
        %v969 = vpop.f32.mrb[0].mxu0
        %970 = vmatprep.mubr.bf16.mxu0 0
        %971 = vmatmul.mubr.bf16.gmra.mrb[0].mxu0 %v917
        %v972 = vpop.f32.mrb[0].mxu0
        %v973 = vadd.f32 0.0, %v972
        %v974 = vpop.f32.mrb[0].mxu0
        %v975 = vpop.f32.mrb[0].mxu0
        %v976 = vadd.f32 0.0, %v975
        %v977 = vpop.f32.mrb[0].mxu0
        %978 = vmatprep.mubr.bf16.mxu0 0
        %979 = vmatmul.mubr.bf16.gmra.mrb[0].mxu0 %v920
        %v980 = vpop.f32.mrb[0].mxu0
        %v981 = vadd.f32 0.0, %v980
        %v982 = vpop.f32.mrb[0].mxu0
        %v983 = vpop.f32.mrb[0].mxu0
        %v984 = vadd.f32 0.0, %v983
        %v985 = vpop.f32.mrb[0].mxu0
        %986 = vdwg.mxu0
        %v987 = vadd.f32 %v873, %v957
        %v988 = vadd.f32 %v874, %v960
        %v989 = vadd.f32 %v875, %v965
        %v990 = vadd.f32 %v876, %v968
        %v991 = vadd.f32 %v877, %v973
        %v992 = vadd.f32 %v878, %v976
        %v993 = vadd.f32 %v879, %v981
        %v994 = vadd.f32 %v880, %v984
        %s995 = scalar_lea.vmem %s1, 32
        %v996 = vld [vmem:[%s995] sm:$0xf]
        %v997 = vld [vmem:[%s995 + $0x4] sm:$0xf]
        %v1006 = vunpack.c.l.b16 %v314
        %v1007 = vunpack.c.l.b16 %v315
        %v1008 = vunpack.c.l.b16 %v316
        %v1009 = vunpack.c.l.b16 %v317
        %v1010 = vunpack.c.l.b16 %v318
        %v1011 = vunpack.c.l.b16 %v319
        %v1012 = vunpack.c.l.b16 %v320
        %v1013 = vunpack.c.l.b16 %v321
        %v1014 = vpack.c.b16 %v1007, %v1006
        %v1015 = vpack.c.b16 %v1009, %v1008
        %v1016 = vpack.c.b16 %v1011, %v1010
        %v1017 = vpack.c.b16 %v1013, %v1012
        %v1020 = vunpack.c.l.b16 %v996
        %v1021 = vunpack.c.l.b16 %v997
        %v1022 = vpack.c.b16 %v1021, %v1020
        %v1025 = vsel %vm594, %v1014, 0
        %v1028 = vsel %vm594, %v1015, 0
        %v1031 = vsel %vm594, %v1016, 0
        %v1034 = vsel %vm594, %v1017, 0
        %1036 = vmatprep.subr.bf16.mxu0 0
        %1037 = vmatpush1.bf16.msra.mxu0 %v1022
        %1038 = vmatprep.subr.bf16.mxu0 0
        %1039 = vmatpush1.bf16.msra.mxu0 0
        %1040 = vmatprep.subr.bf16.mxu0 0
        %1041 = vmatpush1.bf16.msra.mxu0 0
        %1042 = vmatprep.subr.bf16.mxu0 0
        %1043 = vmatpush1.bf16.msra.mxu0 0
        %1044 = vmatprep.subr.bf16.mxu0 0
        %1045 = vmatpush1.bf16.msra.mxu0 0
        %1046 = vmatprep.subr.bf16.mxu0 0
        %1047 = vmatpush1.bf16.msra.mxu0 0
        %1048 = vmatprep.subr.bf16.mxu0 0
        %1049 = vmatpush1.bf16.msra.mxu0 0
        %1050 = vmatprep.subr.bf16.mxu0 0
        %1051 = vmatpush1.bf16.msra.mxu0 0
        %1052 = vmatprep.subr.bf16.mxu0 0
        %1053 = vmatpush1.bf16.msra.mxu0 0
        %1054 = vmatprep.subr.bf16.mxu0 0
        %1055 = vmatpush1.bf16.msra.mxu0 0
        %1056 = vmatprep.subr.bf16.mxu0 0
        %1057 = vmatpush1.bf16.msra.mxu0 0
        %1058 = vmatprep.subr.bf16.mxu0 0
        %1059 = vmatpush1.bf16.msra.mxu0 0
        %1060 = vmatprep.subr.bf16.mxu0 0
        %1061 = vmatpush1.bf16.msra.mxu0 0
        %1062 = vmatprep.subr.bf16.mxu0 0
        %1063 = vmatpush1.bf16.msra.mxu0 0
        %1064 = vmatprep.subr.bf16.mxu0 0
        %1065 = vmatpush1.bf16.msra.mxu0 0
        %1066 = vmatprep.subr.bf16.mxu0 0
        %1067 = vmatpush1.bf16.msra.mxu0 0
        %1068 = vmatprep.mubr.bf16.mxu0 0
        %1069 = vmatmul.mubr.bf16.gmra.mrb[0].mxu0 %v1025
        %v1070 = vpop.f32.mrb[0].mxu0
        %v1071 = vadd.f32 0.0, %v1070
        %v1072 = vpop.f32.mrb[0].mxu0
        %v1073 = vpop.f32.mrb[0].mxu0
        %v1074 = vadd.f32 0.0, %v1073
        %v1075 = vpop.f32.mrb[0].mxu0
        %1076 = vmatprep.mubr.bf16.mxu0 0
        %1077 = vmatmul.mubr.bf16.gmra.mrb[0].mxu0 %v1028
        %v1078 = vpop.f32.mrb[0].mxu0
        %v1079 = vadd.f32 0.0, %v1078
        %v1080 = vpop.f32.mrb[0].mxu0
        %v1081 = vpop.f32.mrb[0].mxu0
        %v1082 = vadd.f32 0.0, %v1081
        %v1083 = vpop.f32.mrb[0].mxu0
        %1084 = vmatprep.mubr.bf16.mxu0 0
        %1085 = vmatmul.mubr.bf16.gmra.mrb[0].mxu0 %v1031
        %v1086 = vpop.f32.mrb[0].mxu0
        %v1087 = vadd.f32 0.0, %v1086
        %v1088 = vpop.f32.mrb[0].mxu0
        %v1089 = vpop.f32.mrb[0].mxu0
        %v1090 = vadd.f32 0.0, %v1089
        %v1091 = vpop.f32.mrb[0].mxu0
        %1092 = vmatprep.mubr.bf16.mxu0 0
        %1093 = vmatmul.mubr.bf16.gmra.mrb[0].mxu0 %v1034
        %v1094 = vpop.f32.mrb[0].mxu0
        %v1095 = vadd.f32 0.0, %v1094
        %v1096 = vpop.f32.mrb[0].mxu0
        %v1097 = vpop.f32.mrb[0].mxu0
        %v1098 = vadd.f32 0.0, %v1097
        %v1099 = vpop.f32.mrb[0].mxu0
        %1100 = vdwg.mxu0
        %v1101 = vadd.f32 %v987, %v1071
        %v1102 = vadd.f32 %v988, %v1074
        %v1103 = vadd.f32 %v989, %v1079
        %v1104 = vadd.f32 %v990, %v1082
        %v1105 = vadd.f32 %v991, %v1087
        %v1106 = vadd.f32 %v992, %v1090
        %v1107 = vadd.f32 %v993, %v1095
        %v1108 = vadd.f32 %v994, %v1098
        %s1109 = scalar_lea.vmem %s1, 40
        %v1110 = vld [vmem:[%s1109] sm:$0xf]
        %v1111 = vld [vmem:[%s1109 + $0x4] sm:$0xf]
        %v1112 = vunpack.c.l.b16 %v450
        %v1113 = vunpack.c.l.b16 %v464
        %v1114 = vunpack.c.l.b16 %v478
        %v1115 = vunpack.c.l.b16 %v492
        %v1116 = vunpack.c.l.b16 %v506
        %v1117 = vunpack.c.l.b16 %v520
        %v1118 = vunpack.c.l.b16 %v534
        %v1119 = vunpack.c.l.b16 %v548
        %v1120 = vpack.c.b16 %v1113, %v1112
        %v1121 = vpack.c.b16 %v1115, %v1114
        %v1122 = vpack.c.b16 %v1117, %v1116
        %v1123 = vpack.c.b16 %v1119, %v1118
        %v1126 = vunpack.c.l.b16 %v1110
        %v1127 = vunpack.c.l.b16 %v1111
        %v1128 = vpack.c.b16 %v1127, %v1126
        %v1131 = vsel %vm594, %v1120, 0
        %v1134 = vsel %vm594, %v1121, 0
        %v1137 = vsel %vm594, %v1122, 0
        %v1140 = vsel %vm594, %v1123, 0
        %1142 = vmatprep.subr.bf16.mxu0 0
        %1143 = vmatpush1.bf16.msra.mxu0 %v1128
        %1144 = vmatprep.subr.bf16.mxu0 0
        %1145 = vmatpush1.bf16.msra.mxu0 0
        %1146 = vmatprep.subr.bf16.mxu0 0
        %1147 = vmatpush1.bf16.msra.mxu0 0
        %1148 = vmatprep.subr.bf16.mxu0 0
        %1149 = vmatpush1.bf16.msra.mxu0 0
        %1150 = vmatprep.subr.bf16.mxu0 0
        %1151 = vmatpush1.bf16.msra.mxu0 0
        %1152 = vmatprep.subr.bf16.mxu0 0
        %1153 = vmatpush1.bf16.msra.mxu0 0
        %1154 = vmatprep.subr.bf16.mxu0 0
        %1155 = vmatpush1.bf16.msra.mxu0 0
        %1156 = vmatprep.subr.bf16.mxu0 0
        %1157 = vmatpush1.bf16.msra.mxu0 0
        %1158 = vmatprep.subr.bf16.mxu0 0
        %1159 = vmatpush1.bf16.msra.mxu0 0
        %1160 = vmatprep.subr.bf16.mxu0 0
        %1161 = vmatpush1.bf16.msra.mxu0 0
        %1162 = vmatprep.subr.bf16.mxu0 0
        %1163 = vmatpush1.bf16.msra.mxu0 0
        %1164 = vmatprep.subr.bf16.mxu0 0
        %1165 = vmatpush1.bf16.msra.mxu0 0
        %1166 = vmatprep.subr.bf16.mxu0 0
        %1167 = vmatpush1.bf16.msra.mxu0 0
        %1168 = vmatprep.subr.bf16.mxu0 0
        %1169 = vmatpush1.bf16.msra.mxu0 0
        %1170 = vmatprep.subr.bf16.mxu0 0
        %1171 = vmatpush1.bf16.msra.mxu0 0
        %1172 = vmatprep.subr.bf16.mxu0 0
        %1173 = vmatpush1.bf16.msra.mxu0 0
        %1174 = vmatprep.mubr.bf16.mxu0 0
        %1175 = vmatmul.mubr.bf16.gmra.mrb[0].mxu0 %v1131
        %v1176 = vpop.f32.mrb[0].mxu0
        %v1177 = vadd.f32 0.0, %v1176
        %v1178 = vpop.f32.mrb[0].mxu0
        %v1179 = vpop.f32.mrb[0].mxu0
        %v1180 = vadd.f32 0.0, %v1179
        %v1181 = vpop.f32.mrb[0].mxu0
        %1182 = vmatprep.mubr.bf16.mxu0 0
        %1183 = vmatmul.mubr.bf16.gmra.mrb[0].mxu0 %v1134
        %v1184 = vpop.f32.mrb[0].mxu0
        %v1185 = vadd.f32 0.0, %v1184
        %v1186 = vpop.f32.mrb[0].mxu0
        %v1187 = vpop.f32.mrb[0].mxu0
        %v1188 = vadd.f32 0.0, %v1187
        %v1189 = vpop.f32.mrb[0].mxu0
        %1190 = vmatprep.mubr.bf16.mxu0 0
        %1191 = vmatmul.mubr.bf16.gmra.mrb[0].mxu0 %v1137
        %v1192 = vpop.f32.mrb[0].mxu0
        %v1193 = vadd.f32 0.0, %v1192
        %v1194 = vpop.f32.mrb[0].mxu0
        %v1195 = vpop.f32.mrb[0].mxu0
        %v1196 = vadd.f32 0.0, %v1195
        %v1197 = vpop.f32.mrb[0].mxu0
        %1198 = vmatprep.mubr.bf16.mxu0 0
        %1199 = vmatmul.mubr.bf16.gmra.mrb[0].mxu0 %v1140
        %v1200 = vpop.f32.mrb[0].mxu0
        %v1201 = vadd.f32 0.0, %v1200
        %v1202 = vpop.f32.mrb[0].mxu0
        %v1203 = vpop.f32.mrb[0].mxu0
        %v1204 = vadd.f32 0.0, %v1203
        %v1205 = vpop.f32.mrb[0].mxu0
        %1206 = vdwg.mxu0
        %v1207 = vadd.f32 %v1101, %v1177
        %v1208 = vadd.f32 %v1102, %v1180
        %v1209 = vadd.f32 %v1103, %v1185
        %v1210 = vadd.f32 %v1104, %v1188
        %v1211 = vadd.f32 %v1105, %v1193
        %v1212 = vadd.f32 %v1106, %v1196
        %v1213 = vadd.f32 %v1107, %v1201
        %v1214 = vadd.f32 %v1108, %v1204
        %s1215 = scalar_lea.vmem %s1, 48
        %v1216 = vld [vmem:[%s1215] sm:$0xf]
        %v1217 = vld [vmem:[%s1215 + $0x4] sm:$0xf]
        %v1219 = vunpack.c.l.b16 %v287
        %v1220 = vpack.c.b16 %v682, %v681
        %v1221 = vpack.c.b16 %v684, %v683
        %v1222 = vpack.c.b16 %v686, %v685
        %v1223 = vpack.c.b16 %v1219, %v687
        %v1226 = vunpack.c.l.b16 %v1216
        %v1227 = vunpack.c.l.b16 %v1217
        %v1228 = vpack.c.b16 %v1227, %v1226
        %v1231 = vsel %vm594, %v1220, 0
        %v1234 = vsel %vm594, %v1221, 0
        %v1237 = vsel %vm594, %v1222, 0
        %v1240 = vsel %vm594, %v1223, 0
        %1242 = vmatprep.subr.bf16.mxu0 0
        %1243 = vmatpush1.bf16.msra.mxu0 %v1228
        %1244 = vmatprep.subr.bf16.mxu0 0
        %1245 = vmatpush1.bf16.msra.mxu0 0
        %1246 = vmatprep.subr.bf16.mxu0 0
        %1247 = vmatpush1.bf16.msra.mxu0 0
        %1248 = vmatprep.subr.bf16.mxu0 0
        %1249 = vmatpush1.bf16.msra.mxu0 0
        %1250 = vmatprep.subr.bf16.mxu0 0
        %1251 = vmatpush1.bf16.msra.mxu0 0
        %1252 = vmatprep.subr.bf16.mxu0 0
        %1253 = vmatpush1.bf16.msra.mxu0 0
        %1254 = vmatprep.subr.bf16.mxu0 0
        %1255 = vmatpush1.bf16.msra.mxu0 0
        %1256 = vmatprep.subr.bf16.mxu0 0
        %1257 = vmatpush1.bf16.msra.mxu0 0
        %1258 = vmatprep.subr.bf16.mxu0 0
        %1259 = vmatpush1.bf16.msra.mxu0 0
        %1260 = vmatprep.subr.bf16.mxu0 0
        %1261 = vmatpush1.bf16.msra.mxu0 0
        %1262 = vmatprep.subr.bf16.mxu0 0
        %1263 = vmatpush1.bf16.msra.mxu0 0
        %1264 = vmatprep.subr.bf16.mxu0 0
        %1265 = vmatpush1.bf16.msra.mxu0 0
        %1266 = vmatprep.subr.bf16.mxu0 0
        %1267 = vmatpush1.bf16.msra.mxu0 0
        %1268 = vmatprep.subr.bf16.mxu0 0
        %1269 = vmatpush1.bf16.msra.mxu0 0
        %1270 = vmatprep.subr.bf16.mxu0 0
        %1271 = vmatpush1.bf16.msra.mxu0 0
        %1272 = vmatprep.subr.bf16.mxu0 0
        %1273 = vmatpush1.bf16.msra.mxu0 0
        %1274 = vmatprep.mubr.bf16.mxu0 0
        %1275 = vmatmul.mubr.bf16.gmra.mrb[0].mxu0 %v1231
        %v1276 = vpop.f32.mrb[0].mxu0
        %v1277 = vadd.f32 0.0, %v1276
        %v1278 = vpop.f32.mrb[0].mxu0
        %v1279 = vpop.f32.mrb[0].mxu0
        %v1280 = vadd.f32 0.0, %v1279
        %v1281 = vpop.f32.mrb[0].mxu0
        %1282 = vmatprep.mubr.bf16.mxu0 0
        %1283 = vmatmul.mubr.bf16.gmra.mrb[0].mxu0 %v1234
        %v1284 = vpop.f32.mrb[0].mxu0
        %v1285 = vadd.f32 0.0, %v1284
        %v1286 = vpop.f32.mrb[0].mxu0
        %v1287 = vpop.f32.mrb[0].mxu0
        %v1288 = vadd.f32 0.0, %v1287
        %v1289 = vpop.f32.mrb[0].mxu0
        %1290 = vmatprep.mubr.bf16.mxu0 0
        %1291 = vmatmul.mubr.bf16.gmra.mrb[0].mxu0 %v1237
        %v1292 = vpop.f32.mrb[0].mxu0
        %v1293 = vadd.f32 0.0, %v1292
        %v1294 = vpop.f32.mrb[0].mxu0
        %v1295 = vpop.f32.mrb[0].mxu0
        %v1296 = vadd.f32 0.0, %v1295
        %v1297 = vpop.f32.mrb[0].mxu0
        %1298 = vmatprep.mubr.bf16.mxu0 0
        %1299 = vmatmul.mubr.bf16.gmra.mrb[0].mxu0 %v1240
        %v1300 = vpop.f32.mrb[0].mxu0
        %v1301 = vadd.f32 0.0, %v1300
        %v1302 = vpop.f32.mrb[0].mxu0
        %v1303 = vpop.f32.mrb[0].mxu0
        %v1304 = vadd.f32 0.0, %v1303
        %v1305 = vpop.f32.mrb[0].mxu0
        %1306 = vdwg.mxu0
        %v1307 = vadd.f32 %v1207, %v1277
        %v1308 = vadd.f32 %v1208, %v1280
        %v1309 = vadd.f32 %v1209, %v1285
        %v1310 = vadd.f32 %v1210, %v1288
        %v1311 = vadd.f32 %v1211, %v1293
        %v1312 = vadd.f32 %v1212, %v1296
        %v1313 = vadd.f32 %v1213, %v1301
        %v1314 = vadd.f32 %v1214, %v1304
        %s1315 = scalar_lea.vmem %s1, 56
        %v1316 = vld [vmem:[%s1315] sm:$0xf]
        %v1317 = vld [vmem:[%s1315 + $0x4] sm:$0xf]
        %v1319 = vunpack.c.l.b16 %v297
        %v1320 = vpack.c.b16 %v578, %v577
        %v1321 = vpack.c.b16 %v580, %v579
        %v1322 = vpack.c.b16 %v582, %v581
        %v1323 = vpack.c.b16 %v1319, %v583
        %v1326 = vunpack.c.l.b16 %v1316
        %v1327 = vunpack.c.l.b16 %v1317
        %v1328 = vpack.c.b16 %v1327, %v1326
        %v1331 = vsel %vm594, %v1320, 0
        %v1334 = vsel %vm594, %v1321, 0
        %v1337 = vsel %vm594, %v1322, 0
        %v1340 = vsel %vm594, %v1323, 0
        %1342 = vmatprep.subr.bf16.mxu0 0
        %1343 = vmatpush1.bf16.msra.mxu0 %v1328
        %1344 = vmatprep.subr.bf16.mxu0 0
        %1345 = vmatpush1.bf16.msra.mxu0 0
        %1346 = vmatprep.subr.bf16.mxu0 0
        %1347 = vmatpush1.bf16.msra.mxu0 0
        %1348 = vmatprep.subr.bf16.mxu0 0
        %1349 = vmatpush1.bf16.msra.mxu0 0
        %1350 = vmatprep.subr.bf16.mxu0 0
        %1351 = vmatpush1.bf16.msra.mxu0 0
        %1352 = vmatprep.subr.bf16.mxu0 0
        %1353 = vmatpush1.bf16.msra.mxu0 0
        %1354 = vmatprep.subr.bf16.mxu0 0
        %1355 = vmatpush1.bf16.msra.mxu0 0
        %1356 = vmatprep.subr.bf16.mxu0 0
        %1357 = vmatpush1.bf16.msra.mxu0 0
        %1358 = vmatprep.subr.bf16.mxu0 0
        %1359 = vmatpush1.bf16.msra.mxu0 0
        %1360 = vmatprep.subr.bf16.mxu0 0
        %1361 = vmatpush1.bf16.msra.mxu0 0
        %1362 = vmatprep.subr.bf16.mxu0 0
        %1363 = vmatpush1.bf16.msra.mxu0 0
        %1364 = vmatprep.subr.bf16.mxu0 0
        %1365 = vmatpush1.bf16.msra.mxu0 0
        %1366 = vmatprep.subr.bf16.mxu0 0
        %1367 = vmatpush1.bf16.msra.mxu0 0
        %1368 = vmatprep.subr.bf16.mxu0 0
        %1369 = vmatpush1.bf16.msra.mxu0 0
        %1370 = vmatprep.subr.bf16.mxu0 0
        %1371 = vmatpush1.bf16.msra.mxu0 0
        %1372 = vmatprep.subr.bf16.mxu0 0
        %1373 = vmatpush1.bf16.msra.mxu0 0
        %1374 = vmatprep.mubr.bf16.mxu0 0
        %1375 = vmatmul.mubr.bf16.gmra.mrb[0].mxu0 %v1331
        %v1376 = vpop.f32.mrb[0].mxu0
        %v1377 = vadd.f32 0.0, %v1376
        %v1378 = vpop.f32.mrb[0].mxu0
        %v1379 = vpop.f32.mrb[0].mxu0
        %v1380 = vadd.f32 0.0, %v1379
        %v1381 = vpop.f32.mrb[0].mxu0
        %1382 = vmatprep.mubr.bf16.mxu0 0
        %1383 = vmatmul.mubr.bf16.gmra.mrb[0].mxu0 %v1334
        %v1384 = vpop.f32.mrb[0].mxu0
        %v1385 = vadd.f32 0.0, %v1384
        %v1386 = vpop.f32.mrb[0].mxu0
        %v1387 = vpop.f32.mrb[0].mxu0
        %v1388 = vadd.f32 0.0, %v1387
        %v1389 = vpop.f32.mrb[0].mxu0
        %1390 = vmatprep.mubr.bf16.mxu0 0
        %1391 = vmatmul.mubr.bf16.gmra.mrb[0].mxu0 %v1337
        %v1392 = vpop.f32.mrb[0].mxu0
        %v1393 = vadd.f32 0.0, %v1392
        %v1394 = vpop.f32.mrb[0].mxu0
        %v1395 = vpop.f32.mrb[0].mxu0
        %v1396 = vadd.f32 0.0, %v1395
        %v1397 = vpop.f32.mrb[0].mxu0
        %1398 = vmatprep.mubr.bf16.mxu0 0
        %1399 = vmatmul.mubr.bf16.gmra.mrb[0].mxu0 %v1340
        %v1400 = vpop.f32.mrb[0].mxu0
        %v1401 = vadd.f32 0.0, %v1400
        %v1402 = vpop.f32.mrb[0].mxu0
        %v1403 = vpop.f32.mrb[0].mxu0
        %v1404 = vadd.f32 0.0, %v1403
        %v1405 = vpop.f32.mrb[0].mxu0
        %1406 = vdwg.mxu0
        %v1407 = vadd.f32 %v1307, %v1377
        %v1408 = vadd.f32 %v1308, %v1380
        %v1409 = vadd.f32 %v1309, %v1385
        %v1410 = vadd.f32 %v1310, %v1388
        %v1411 = vadd.f32 %v1311, %v1393
        %v1412 = vadd.f32 %v1312, %v1396
        %v1413 = vadd.f32 %v1313, %v1401
        %v1414 = vadd.f32 %v1314, %v1404
        %s1415 = scalar_lea.vmem %s1, 64
        %v1416 = vld [vmem:[%s1415] sm:$0xf]
        %v1417 = vld [vmem:[%s1415 + $0x4] sm:$0xf]
        %v1418 = vunpack.c.l.b16 %v562
        %v1419 = vpack.c.b16 %v780, %v779
        %v1420 = vpack.c.b16 %v782, %v781
        %v1421 = vpack.c.b16 %v784, %v783
        %v1422 = vpack.c.b16 %v1418, %v785
        %v1425 = vunpack.c.l.b16 %v1416
        %v1426 = vunpack.c.l.b16 %v1417
        %v1427 = vpack.c.b16 %v1426, %v1425
        %v1430 = vsel %vm594, %v1419, 0
        %v1433 = vsel %vm594, %v1420, 0
        %v1436 = vsel %vm594, %v1421, 0
        %v1439 = vsel %vm594, %v1422, 0
        %1441 = vmatprep.subr.bf16.mxu0 0
        %1442 = vmatpush1.bf16.msra.mxu0 %v1427
        %1443 = vmatprep.subr.bf16.mxu0 0
        %1444 = vmatpush1.bf16.msra.mxu0 0
        %1445 = vmatprep.subr.bf16.mxu0 0
        %1446 = vmatpush1.bf16.msra.mxu0 0
        %1447 = vmatprep.subr.bf16.mxu0 0
        %1448 = vmatpush1.bf16.msra.mxu0 0
        %1449 = vmatprep.subr.bf16.mxu0 0
        %1450 = vmatpush1.bf16.msra.mxu0 0
        %1451 = vmatprep.subr.bf16.mxu0 0
        %1452 = vmatpush1.bf16.msra.mxu0 0
        %1453 = vmatprep.subr.bf16.mxu0 0
        %1454 = vmatpush1.bf16.msra.mxu0 0
        %1455 = vmatprep.subr.bf16.mxu0 0
        %1456 = vmatpush1.bf16.msra.mxu0 0
        %1457 = vmatprep.subr.bf16.mxu0 0
        %1458 = vmatpush1.bf16.msra.mxu0 0
        %1459 = vmatprep.subr.bf16.mxu0 0
        %1460 = vmatpush1.bf16.msra.mxu0 0
        %1461 = vmatprep.subr.bf16.mxu0 0
        %1462 = vmatpush1.bf16.msra.mxu0 0
        %1463 = vmatprep.subr.bf16.mxu0 0
        %1464 = vmatpush1.bf16.msra.mxu0 0
        %1465 = vmatprep.subr.bf16.mxu0 0
        %1466 = vmatpush1.bf16.msra.mxu0 0
        %1467 = vmatprep.subr.bf16.mxu0 0
        %1468 = vmatpush1.bf16.msra.mxu0 0
        %1469 = vmatprep.subr.bf16.mxu0 0
        %1470 = vmatpush1.bf16.msra.mxu0 0
        %1471 = vmatprep.subr.bf16.mxu0 0
        %1472 = vmatpush1.bf16.msra.mxu0 0
        %1473 = vmatprep.mubr.bf16.mxu0 0
        %1474 = vmatmul.mubr.bf16.gmra.mrb[0].mxu0 %v1430
        %v1475 = vpop.f32.mrb[0].mxu0
        %v1476 = vadd.f32 0.0, %v1475
        %v1477 = vpop.f32.mrb[0].mxu0
        %v1478 = vpop.f32.mrb[0].mxu0
        %v1479 = vadd.f32 0.0, %v1478
        %v1480 = vpop.f32.mrb[0].mxu0
        %1481 = vmatprep.mubr.bf16.mxu0 0
        %1482 = vmatmul.mubr.bf16.gmra.mrb[0].mxu0 %v1433
        %v1483 = vpop.f32.mrb[0].mxu0
        %v1484 = vadd.f32 0.0, %v1483
        %v1485 = vpop.f32.mrb[0].mxu0
        %v1486 = vpop.f32.mrb[0].mxu0
        %v1487 = vadd.f32 0.0, %v1486
        %v1488 = vpop.f32.mrb[0].mxu0
        %1489 = vmatprep.mubr.bf16.mxu0 0
        %1490 = vmatmul.mubr.bf16.gmra.mrb[0].mxu0 %v1436
        %v1491 = vpop.f32.mrb[0].mxu0
        %v1492 = vadd.f32 0.0, %v1491
        %v1493 = vpop.f32.mrb[0].mxu0
        %v1494 = vpop.f32.mrb[0].mxu0
        %v1495 = vadd.f32 0.0, %v1494
        %v1496 = vpop.f32.mrb[0].mxu0
        %1497 = vmatprep.mubr.bf16.mxu0 0
        %1498 = vmatmul.mubr.bf16.gmra.mrb[0].mxu0 %v1439
        %v1499 = vpop.f32.mrb[0].mxu0
        %v1500 = vadd.f32 0.0, %v1499
        %v1501 = vpop.f32.mrb[0].mxu0
        %v1502 = vpop.f32.mrb[0].mxu0
        %v1503 = vadd.f32 0.0, %v1502
        %v1504 = vpop.f32.mrb[0].mxu0
        %1505 = vdwg.mxu0
        %v1506 = vadd.f32 %v1407, %v1476
        %v1507 = vadd.f32 %v1408, %v1479
        %v1508 = vadd.f32 %v1409, %v1484
        %v1509 = vadd.f32 %v1410, %v1487
        %v1510 = vadd.f32 %v1411, %v1492
        %v1511 = vadd.f32 %v1412, %v1495
        %v1512 = vadd.f32 %v1413, %v1500
        %v1513 = vadd.f32 %v1414, %v1503
        %v1514 = vld [vmem:[%s2] sm:$0x1]
        %v1516 = vlaneseq
        %v1517 = vshrl.u32 %v1516, 7
        %v1518 = vsub.s32 0, %v1517
        %v1519 = vrot.slane %v1514, %v1518
        %v1521 = vadd.f32 %v1506, %v1519
        %v1522 = vadd.f32 %v1507, %v1519
        %v1523 = vadd.f32 %v1508, %v1519
        %v1524 = vadd.f32 %v1509, %v1519
        %v1525 = vadd.f32 %v1510, %v1519
        %v1526 = vadd.f32 %v1511, %v1519
        %v1527 = vadd.f32 %v1512, %v1519
        %v1528 = vadd.f32 %v1513, %v1519
        %v1529 = vld [vmem:[%s269] sm:$0xf]
        %v1530 = vld [vmem:[%s269 + $0x4] sm:$0xf]
        %v1531 = vld [vmem:[%s269 + $0x8] sm:$0xf]
        %v1532 = vld [vmem:[%s269 + $0xc] sm:$0xf]
        %v1533 = vld [vmem:[%s269 + $0x10] sm:$0xf]
        %v1534 = vld [vmem:[%s269 + $0x14] sm:$0xf]
        %v1535 = vld [vmem:[%s269 + $0x18] sm:$0xf]
        %v1536 = vld [vmem:[%s269 + $0x1c] sm:$0xf]
        %v1537 = vld [vmem:[%s4] sm:$0xf]
        %v1538 = vld [vmem:[%s5] sm:$0x1]
        %v1540 = vlaneseq
        %v1541 = vshrl.u32 %v1540, 7
        %v1542 = vsub.s32 0, %v1541
        %v1543 = vrot.slane %v1538, %v1542
        %v1553 = vunpack.c.l.b16 %v1529
        %v1554 = vunpack.c.l.b16 %v1530
        %v1555 = vunpack.c.l.b16 %v1531
        %v1556 = vunpack.c.l.b16 %v1532
        %v1557 = vunpack.c.l.b16 %v1533
        %v1558 = vunpack.c.l.b16 %v1534
        %v1559 = vunpack.c.l.b16 %v1535
        %v1560 = vunpack.c.l.b16 %v1536
        %v1561 = vpack.c.b16 %v1554, %v1553
        %v1562 = vpack.c.b16 %v1556, %v1555
        %v1563 = vpack.c.b16 %v1558, %v1557
        %v1564 = vpack.c.b16 %v1560, %v1559
        %vm1565 = vcmask 64512
        %v1567 = vsel %vm1565, %v1561, 0
        %v1570 = vsel %vm1565, %v1562, 0
        %v1573 = vsel %vm1565, %v1563, 0
        %v1576 = vsel %vm1565, %v1564, 0
        %vm1578 = vcmask 1043456
        %v1580 = vsel %vm1578, %v1537, 0
        %1582 = vmatprep.subr.bf16.mxu0 0
        %1583 = vmatpush1.bf16.msra.mxu0 %v1580
        %1584 = vmatprep.subr.bf16.mxu0 0
        %1585 = vmatpush1.bf16.msra.mxu0 0
        %1586 = vmatprep.subr.bf16.mxu0 0
        %1587 = vmatpush1.bf16.msra.mxu0 0
        %1588 = vmatprep.subr.bf16.mxu0 0
        %1589 = vmatpush1.bf16.msra.mxu0 0
        %1590 = vmatprep.subr.bf16.mxu0 0
        %1591 = vmatpush1.bf16.msra.mxu0 0
        %1592 = vmatprep.subr.bf16.mxu0 0
        %1593 = vmatpush1.bf16.msra.mxu0 0
        %1594 = vmatprep.subr.bf16.mxu0 0
        %1595 = vmatpush1.bf16.msra.mxu0 0
        %1596 = vmatprep.subr.bf16.mxu0 0
        %1597 = vmatpush1.bf16.msra.mxu0 0
        %1598 = vmatprep.subr.bf16.mxu0 0
        %1599 = vmatpush1.bf16.msra.mxu0 0
        %1600 = vmatprep.subr.bf16.mxu0 0
        %1601 = vmatpush1.bf16.msra.mxu0 0
        %1602 = vmatprep.subr.bf16.mxu0 0
        %1603 = vmatpush1.bf16.msra.mxu0 0
        %1604 = vmatprep.subr.bf16.mxu0 0
        %1605 = vmatpush1.bf16.msra.mxu0 0
        %1606 = vmatprep.subr.bf16.mxu0 0
        %1607 = vmatpush1.bf16.msra.mxu0 0
        %1608 = vmatprep.subr.bf16.mxu0 0
        %1609 = vmatpush1.bf16.msra.mxu0 0
        %1610 = vmatprep.subr.bf16.mxu0 0
        %1611 = vmatpush1.bf16.msra.mxu0 0
        %1612 = vmatprep.subr.bf16.mxu0 0
        %1613 = vmatpush1.bf16.msra.mxu0 0
        %1614 = vmatprep.mubr.bf16.mxu0 0
        %1615 = vmatmul.mubr.bf16.gmra.mrb[0].mxu0 %v1567
        %v1616 = vpop.f32.mrb[0].mxu0
        %v1617 = vadd.f32 %v1543, %v1616
        %v1618 = vpop.f32.mrb[0].mxu0
        %v1619 = vpop.f32.mrb[0].mxu0
        %v1620 = vadd.f32 %v1543, %v1619
        %v1621 = vpop.f32.mrb[0].mxu0
        %1622 = vmatprep.mubr.bf16.mxu0 0
        %1623 = vmatmul.mubr.bf16.gmra.mrb[0].mxu0 %v1570
        %v1624 = vpop.f32.mrb[0].mxu0
        %v1625 = vadd.f32 %v1543, %v1624
        %v1626 = vpop.f32.mrb[0].mxu0
        %v1627 = vpop.f32.mrb[0].mxu0
        %v1628 = vadd.f32 %v1543, %v1627
        %v1629 = vpop.f32.mrb[0].mxu0
        %1630 = vmatprep.mubr.bf16.mxu0 0
        %1631 = vmatmul.mubr.bf16.gmra.mrb[0].mxu0 %v1573
        %v1632 = vpop.f32.mrb[0].mxu0
        %v1633 = vadd.f32 %v1543, %v1632
        %v1634 = vpop.f32.mrb[0].mxu0
        %v1635 = vpop.f32.mrb[0].mxu0
        %v1636 = vadd.f32 %v1543, %v1635
        %v1637 = vpop.f32.mrb[0].mxu0
        %1638 = vmatprep.mubr.bf16.mxu0 0
        %1639 = vmatmul.mubr.bf16.gmra.mrb[0].mxu0 %v1576
        %v1640 = vpop.f32.mrb[0].mxu0
        %v1641 = vadd.f32 %v1543, %v1640
        %v1642 = vpop.f32.mrb[0].mxu0
        %v1643 = vpop.f32.mrb[0].mxu0
        %v1644 = vadd.f32 %v1543, %v1643
        %v1645 = vpop.f32.mrb[0].mxu0
        %1646 = vdwg.mxu0
        %v1647 = vadd.f32 %v1521, %v1617
        %v1648 = vadd.f32 %v1522, %v1620
        %v1649 = vadd.f32 %v1523, %v1625
        %v1650 = vadd.f32 %v1524, %v1628
        %v1651 = vadd.f32 %v1525, %v1633
        %v1652 = vadd.f32 %v1526, %v1636
        %v1653 = vadd.f32 %v1527, %v1641
        %v1654 = vadd.f32 %v1528, %v1644
        %1655 = vst.msk [vmem:[%s259] sm:$0xff] %vm594, %v1647
        %1656 = vst.msk [vmem:[%s259 + $0x8] sm:$0xff] %vm594, %v1648
        %1657 = vst.msk [vmem:[%s259 + $0x10] sm:$0xff] %vm594, %v1649
        %1658 = vst.msk [vmem:[%s259 + $0x18] sm:$0xff] %vm594, %v1650
        %1659 = vst.msk [vmem:[%s259 + $0x20] sm:$0xff] %vm594, %v1651
        %1660 = vst.msk [vmem:[%s259 + $0x28] sm:$0xff] %vm594, %v1652
        %1661 = vst.msk [vmem:[%s259 + $0x30] sm:$0xff] %vm594, %v1653
        %1662 = vst.msk [vmem:[%s259 + $0x38] sm:$0xff] %vm594, %v1654
        %s1663 = sand.u32 %s164, 1
        %s1664 = scalar_lea.sflag [#allocation3], %s1663
        %s1665 = sand.u32 %s164, 1
        %s1666 = smul.addr %s1665, 64
        %s1667 = scalar_lea.vmem [#allocation2], %s1666
        // Predicated region
        $region45: #{_lambda_.3} parent=43 // pred_check
          %p1668 = pneg %p174
        $region46: #{_lambda_.3} parent=43 // pred_check_branch
          %1670 = sbr.rel (%p1668) target = $region48
        $region47: #{_lambda_.3} parent=43 // pred_region
          %s1672 = ssub.s32 1024, 1024
          %1673 = vsyncadd %s1664, %s1672
          %s1674 = smul.addr %s20, 8
          %s1675 = smul.addr %s1674, 128
          %s1676 = scalar_lea.hbm %s6, %s1675
          %s1677 = sshll.u32 %s1667, 4
          %s1678 = int_to_ptr.vmem [resolvable:$true] %s1677
          %1683 = dma.vmem_to_hbm [thread:$0]  %s1678, 1024, %s1676, %s1664, 128, 128, 8
        $region48: #{_lambda_.3} parent=43 // pred_fallthru
          _
      $region44: #{_lambda_.3} parent=5 // pred_fallthru
        _
      %p1684 = scmp.le.s32.totalorder 2, %s15
      // Predicated region
      $region49: #{_lambda_.3} parent=5 // pred_check
        %p1685 = pneg %p1684
      $region50: #{_lambda_.3} parent=5 // pred_check_branch
        %1687 = sbr.rel (%p1685) target = $region52
      $region51: #{_lambda_.3} parent=5 // pred_region
        %s1688 = ssub.s32 %s15, 2
        // Predicated region
        $region53: #{_lambda_.3} parent=51 // pred_check
          %p1689 = pneg %p180
        $region54: #{_lambda_.3} parent=51 // pred_check_branch
          %1691 = sbr.rel (%p1689) target = $region56
        $region55: #{_lambda_.3} parent=51 // pred_region
          %s1692 = sand.u32 %s165, 1
          %s1693 = scalar_lea.sflag [#allocation3], %s1692
          %s1694 = sand.u32 %s165, 1
          %s1695 = smul.addr %s1694, 64
          %s1696 = scalar_lea.vmem [#allocation2], %s1695
          %1697 = dma.done %s1693, 1024
        $region56: #{_lambda_.3} parent=51 // pred_fallthru
          _
      $region52: #{_lambda_.3} parent=5 // pred_fallthru
        _
    $region6: #{_lambda_.3} parent=1 // loop_footer
      %s19 = sadd.s32 1, %s15
    $region7: #{_lambda_.3} parent=1 // loop_footer_branch
      %14 = sbr.rel target = $region3
    $region8: #{_lambda_.3} parent=1 // loop_exit
      _
    %1698 = vsyncpa [#allocation3], 1
    %s1699 = scalar_lea.sflag [#allocation3], 1
    %1700 = vsyncpa %s1699, 1

// kernel: _lambda_.2
$region0: #{_lambda_.2}
  #allocation0 [shape = 'u32[]', space=smem, size = 0x4, offset = 0x4, fixed_abs, tag = 'smem constant byte address 0x4 - core index']
  #allocation1 [shape = 'u32[144,128]{1,0:T(1,128)}', space=vmem, size = 0x12000, scoped, tag = 'internal scratch']
  %s0 = inlined_call_operand.vmem [shape: bf16[2,18,18,8], index: 0, kind: input, shape index: {}]
  %s1 = inlined_call_operand.vmem [shape: bf16[9,8,16], index: 1, kind: input, shape index: {}]
  %s2 = inlined_call_operand.vmem [shape: f32[1,16], index: 2, kind: input, shape index: {}]
  %s3 = inlined_call_operand.vmem [shape: f32[1,16], index: 3, kind: input, shape index: {}]
  %s4 = inlined_call_operand.vmem [shape: bf16[2,256,16], index: 4, kind: output, shape index: {}]
  %s5 = sld [smem:[#allocation0]]
  $region49: #{_lambda_.2} parent=0
    _
  %s7 = ssub.s32 1, %s5
  %s8 = scalar_select 0, %s7, %s5
  loop: start=0, step=1, limit=4
  $region2: #{_lambda_.2} parent=0 // loop_pre_header
    _
  $region3: #{_lambda_.2} parent=0 // loop_header
    %s10 = sphi 0, %s14
    %p11 = scmp.ge.s32.totalorder %s10, 4
    %s20 = sphi 0, %s22
    %s23 = sphi 0, %s20
    %s24 = sphi 0, %s23
    %s40 = sphi 0, %s24
    %s44 = sphi 0, %s44
    %s46 = sphi 0, %s44
    %s47 = sphi 0, %s46
    %s61 = sphi 0, %s47
    %s65 = sphi 0, %s65
    %s67 = sphi 0, %s65
    %s68 = sphi 0, %s67
    %s82 = sphi 0, %s68
    %s86 = sphi 0, %s86
    %s88 = sphi 0, %s86
    %s89 = sphi 0, %s88
    %s103 = sphi 0, %s89
    %s109 = sphi 0, %s111
    %s112 = sphi 0, %s109
    %s113 = sphi 0, %s112
    %s129 = sphi 0, %s113
  $region4: #{_lambda_.2} parent=0 // loop_header_branch
    %13 = sbr.rel (%p11) target = $region8
  $region5: #{_lambda_.2} parent=0 // loop_body
    %s15 = ssub.s32 %s10, 1
    %s16 = ssub.s32 %s10, 2
    %s17 = sadd.s32 %s10, 1
    %s18 = ssub.s32 %s10, %s17
    %p19 = scmp.eq.s32.totalorder %s18, 0
    %s21 = sadd.s32 %s20, 1
    %s22 = scalar_select %p19, %s20, %s21
    %p25 = pneg %p19
    %p26 = scmp.eq.s32.totalorder %s10, 1
    %p27 = por %p25, %p26
    %p28 = scmp.ne.s32.totalorder %s20, %s23
    %p29 = scmp.eq.s32.totalorder %s10, 0
    %p30 = por %p28, %p29
    %p31 = scmp.ne.s32.totalorder %s20, %s23
    %p32 = scmp.eq.s32.totalorder %s15, 1
    %p33 = por %p31, %p32
    %p34 = scmp.ne.s32.totalorder %s23, %s24
    %p35 = scmp.eq.s32.totalorder %s15, 0
    %p36 = por %p34, %p35
    %p37 = scmp.ne.s32.totalorder %s23, %s24
    %p38 = scmp.eq.s32.totalorder %s16, 1
    %p39 = por %p37, %p38
    %p41 = scmp.ne.s32.totalorder %s24, %s40
    %p42 = scmp.eq.s32.totalorder %s16, 0
    %p43 = por %p41, %p42
    %s45 = sadd.s32 %s44, 1
    %p48 = scmp.eq.s32.totalorder %s10, 1
    %p49 = scmp.ne.s32.totalorder %s44, %s46
    %p50 = scmp.eq.s32.totalorder %s10, 0
    %p51 = por %p49, %p50
    %p52 = scmp.ne.s32.totalorder %s44, %s46
    %p53 = scmp.eq.s32.totalorder %s15, 1
    %p54 = por %p52, %p53
    %p55 = scmp.ne.s32.totalorder %s46, %s47
    %p56 = scmp.eq.s32.totalorder %s15, 0
    %p57 = por %p55, %p56
    %p58 = scmp.ne.s32.totalorder %s46, %s47
    %p59 = scmp.eq.s32.totalorder %s16, 1
    %p60 = por %p58, %p59
    %p62 = scmp.ne.s32.totalorder %s47, %s61
    %p63 = scmp.eq.s32.totalorder %s16, 0
    %p64 = por %p62, %p63
    %s66 = sadd.s32 %s65, 1
    %p69 = scmp.eq.s32.totalorder %s10, 1
    %p70 = scmp.ne.s32.totalorder %s65, %s67
    %p71 = scmp.eq.s32.totalorder %s10, 0
    %p72 = por %p70, %p71
    %p73 = scmp.ne.s32.totalorder %s65, %s67
    %p74 = scmp.eq.s32.totalorder %s15, 1
    %p75 = por %p73, %p74
    %p76 = scmp.ne.s32.totalorder %s67, %s68
    %p77 = scmp.eq.s32.totalorder %s15, 0
    %p78 = por %p76, %p77
    %p79 = scmp.ne.s32.totalorder %s67, %s68
    %p80 = scmp.eq.s32.totalorder %s16, 1
    %p81 = por %p79, %p80
    %p83 = scmp.ne.s32.totalorder %s68, %s82
    %p84 = scmp.eq.s32.totalorder %s16, 0
    %p85 = por %p83, %p84
    %s87 = sadd.s32 %s86, 1
    %p90 = scmp.eq.s32.totalorder %s10, 1
    %p91 = scmp.ne.s32.totalorder %s86, %s88
    %p92 = scmp.eq.s32.totalorder %s10, 0
    %p93 = por %p91, %p92
    %p94 = scmp.ne.s32.totalorder %s86, %s88
    %p95 = scmp.eq.s32.totalorder %s15, 1
    %p96 = por %p94, %p95
    %p97 = scmp.ne.s32.totalorder %s88, %s89
    %p98 = scmp.eq.s32.totalorder %s15, 0
    %p99 = por %p97, %p98
    %p100 = scmp.ne.s32.totalorder %s88, %s89
    %p101 = scmp.eq.s32.totalorder %s16, 1
    %p102 = por %p100, %p101
    %p104 = scmp.ne.s32.totalorder %s89, %s103
    %p105 = scmp.eq.s32.totalorder %s16, 0
    %p106 = por %p104, %p105
    %s107 = ssub.s32 %s10, %s17
    %p108 = scmp.eq.s32.totalorder %s107, 0
    %s110 = sadd.s32 %s109, 1
    %s111 = scalar_select %p108, %s109, %s110
    %p114 = pneg %p108
    %p115 = scmp.eq.s32.totalorder %s10, 1
    %p116 = por %p114, %p115
    %p117 = scmp.ne.s32.totalorder %s109, %s112
    %p118 = scmp.eq.s32.totalorder %s10, 0
    %p119 = por %p117, %p118
    %p120 = scmp.ne.s32.totalorder %s109, %s112
    %p121 = scmp.eq.s32.totalorder %s15, 1
    %p122 = por %p120, %p121
    %p123 = scmp.ne.s32.totalorder %s112, %s113
    %p124 = scmp.eq.s32.totalorder %s15, 0
    %p125 = por %p123, %p124
    %p126 = scmp.ne.s32.totalorder %s112, %s113
    %p127 = scmp.eq.s32.totalorder %s16, 1
    %p128 = por %p126, %p127
    %p130 = scmp.ne.s32.totalorder %s113, %s129
    %p131 = scmp.eq.s32.totalorder %s16, 0
    %p132 = por %p130, %p131
    %p133 = scmp.le.s32.totalorder 1, %s10
    %p134 = scmp.lt.s32.totalorder %s10, 3
    %p135 = pnand %p133, %p134
    %p136 = pneg %p135
    // Predicated region
    $region9: #{_lambda_.2} parent=5 // pred_check
      _
    $region10: #{_lambda_.2} parent=5 // pred_check_branch
      %138 = sbr.rel (%p135) target = $region12
    $region11: #{_lambda_.2} parent=5 // pred_region
      %s139 = ssub.s32 %s10, 1
      // Predicated region
      $region13: #{_lambda_.2} parent=11 // pred_check
        %p140 = pneg %p57
      $region14: #{_lambda_.2} parent=11 // pred_check_branch
        %142 = sbr.rel (%p140) target = $region16
      $region15: #{_lambda_.2} parent=11 // pred_region
        _
      $region16: #{_lambda_.2} parent=11 // pred_fallthru
        _
      // Predicated region
      $region17: #{_lambda_.2} parent=11 // pred_check
        %p143 = pneg %p78
      $region18: #{_lambda_.2} parent=11 // pred_check_branch
        %145 = sbr.rel (%p143) target = $region20
      $region19: #{_lambda_.2} parent=11 // pred_region
        _
      $region20: #{_lambda_.2} parent=11 // pred_fallthru
        _
      // Predicated region
      $region21: #{_lambda_.2} parent=11 // pred_check
        %p146 = pneg %p99
      $region22: #{_lambda_.2} parent=11 // pred_check_branch
        %148 = sbr.rel (%p146) target = $region24
      $region23: #{_lambda_.2} parent=11 // pred_region
        _
      $region24: #{_lambda_.2} parent=11 // pred_fallthru
        _
    $region12: #{_lambda_.2} parent=5 // pred_fallthru
      _
    %p149 = scmp.lt.s32.totalorder %s10, 2
    // Predicated region
    $region25: #{_lambda_.2} parent=5 // pred_check
      %p150 = pneg %p149
    $region26: #{_lambda_.2} parent=5 // pred_check_branch
      %152 = sbr.rel (%p150) target = $region28
    $region27: #{_lambda_.2} parent=5 // pred_region
      // Predicated region
      $region29: #{_lambda_.2} parent=27 // pred_check
        %p153 = pneg %p30
      $region30: #{_lambda_.2} parent=27 // pred_check_branch
        %155 = sbr.rel (%p153) target = $region32
      $region31: #{_lambda_.2} parent=27 // pred_region
        %p156 = scmp.lt.s32.totalorder %s10, 1
        %s157 = scalar_select %p156, %s10, 1
        %s158 = smul.addr %s157, 54
        %s159 = smul.addr %s158, 4
        %s160 = scalar_lea.vmem %s0, %s159
      $region32: #{_lambda_.2} parent=27 // pred_fallthru
        _
    $region28: #{_lambda_.2} parent=5 // pred_fallthru
      _
    %p161 = scmp.le.s32.totalorder 1, %s10
    %p162 = scmp.lt.s32.totalorder %s10, 3
    %p163 = pnand %p161, %p162
    %p164 = pneg %p163
    // Predicated region
    $region33: #{_lambda_.2} parent=5 // pred_check
      _
    $region34: #{_lambda_.2} parent=5 // pred_check_branch
      %166 = sbr.rel (%p163) target = $region36
    $region35: #{_lambda_.2} parent=5 // pred_region
      %s167 = ssub.s32 %s10, 1
      %p168 = scmp.lt.s32.totalorder %s15, 1
      %s169 = scalar_select %p168, %s15, 1
      %s170 = smul.addr %s169, 54
      %s171 = smul.addr %s170, 4
      %s172 = scalar_lea.vmem %s0, %s171
      %p173 = pneg %p36
      %p174 = pneg %p33
      %p175 = pneg %p57
      %p176 = pneg %p54
      %p177 = pneg %p78
      %p178 = pneg %p75
      %p179 = pneg %p99
      %p180 = pneg %p96
      %p181 = pneg %p125
      %p182 = pneg %p122
      %p183 = scmp.lt.s32.totalorder %s15, 1
      %s184 = scalar_select %p183, %s15, 1
      %s185 = smul.addr %s184, 32
      %s186 = smul.addr %s185, 4
      %s187 = scalar_lea.vmem %s4, %s186
      %p188 = scmp.lt.s32.totalorder %s15, 1
      %s189 = scalar_select %p188, %s15, 1
      %s190 = smul.addr %s189, 54
      %s191 = smul.addr %s190, 4
      %s192 = scalar_lea.vmem %s0, %s191
      %p193 = scmp.lt.s32.totalorder %s15, 1
      %s194 = scalar_select %p193, %s15, 1
      %s195 = smul.addr %s194, 32
      %s196 = smul.addr %s195, 4
      %s197 = scalar_lea.vmem %s4, %s196
      %v199 = vld [vmem:[%s192] sm:$0xf]
      %v200 = vld [vmem:[%s192 + $0x4] sm:$0xf]
      %v201 = vld [vmem:[%s192 + $0x8] sm:$0x1]
      %v202 = vld [vmem:[%s192 + $0xc] sm:$0xf]
      %v203 = vld [vmem:[%s192 + $0x10] sm:$0xf]
      %v204 = vld [vmem:[%s192 + $0x14] sm:$0x1]
      %v205 = vld [vmem:[%s192 + $0x18] sm:$0xf]
      %v206 = vld [vmem:[%s192 + $0x1c] sm:$0xf]
      %v207 = vld [vmem:[%s192 + $0x20] sm:$0x1]
      %v208 = vld [vmem:[%s192 + $0x24] sm:$0xf]
      %v209 = vld [vmem:[%s192 + $0x28] sm:$0xf]
      %v210 = vld [vmem:[%s192 + $0x2c] sm:$0x1]
      %v211 = vld [vmem:[%s192 + $0x30] sm:$0xf]
      %v212 = vld [vmem:[%s192 + $0x34] sm:$0xf]
      %v213 = vld [vmem:[%s192 + $0x38] sm:$0x1]
      %v214 = vld [vmem:[%s192 + $0x3c] sm:$0xf]
      %v215 = vld [vmem:[%s192 + $0x40] sm:$0xf]
      %v216 = vld [vmem:[%s192 + $0x44] sm:$0x1]
      %v217 = vld [vmem:[%s192 + $0x48] sm:$0xf]
      %v218 = vld [vmem:[%s192 + $0x4c] sm:$0xf]
      %v219 = vld [vmem:[%s192 + $0x50] sm:$0x1]
      %v220 = vld [vmem:[%s192 + $0x54] sm:$0xf]
      %v221 = vld [vmem:[%s192 + $0x58] sm:$0xf]
      %v222 = vld [vmem:[%s192 + $0x5c] sm:$0x1]
      %v223 = vld [vmem:[%s192 + $0x60] sm:$0xf]
      %v224 = vld [vmem:[%s192 + $0x64] sm:$0xf]
      %v225 = vld [vmem:[%s192 + $0x68] sm:$0x1]
      %v226 = vld [vmem:[%s192 + $0x6c] sm:$0xf]
      %v227 = vld [vmem:[%s192 + $0x70] sm:$0xf]
      %v228 = vld [vmem:[%s192 + $0x74] sm:$0x1]
      %v229 = vld [vmem:[%s192 + $0x78] sm:$0xf]
      %v230 = vld [vmem:[%s192 + $0x7c] sm:$0xf]
      %v231 = vld [vmem:[%s192 + $0x80] sm:$0x1]
      %v232 = vld [vmem:[%s192 + $0x84] sm:$0xf]
      %v233 = vld [vmem:[%s192 + $0x88] sm:$0xf]
      %v234 = vld [vmem:[%s192 + $0x8c] sm:$0x1]
      %v235 = vld [vmem:[%s192 + $0x90] sm:$0xf]
      %v236 = vld [vmem:[%s192 + $0x94] sm:$0xf]
      %v237 = vld [vmem:[%s192 + $0x98] sm:$0x1]
      %v238 = vld [vmem:[%s192 + $0x9c] sm:$0xf]
      %v239 = vld [vmem:[%s192 + $0xa0] sm:$0xf]
      %v240 = vld [vmem:[%s192 + $0xa4] sm:$0x1]
      %v241 = vld [vmem:[%s192 + $0xa8] sm:$0xf]
      %v242 = vld [vmem:[%s192 + $0xac] sm:$0xf]
      %v243 = vld [vmem:[%s192 + $0xb0] sm:$0x1]
      %v244 = vld [vmem:[%s192 + $0xb4] sm:$0xf]
      %v245 = vld [vmem:[%s192 + $0xb8] sm:$0xf]
      %v246 = vld [vmem:[%s192 + $0xbc] sm:$0x1]
      %v247 = vld [vmem:[%s192 + $0xc0] sm:$0xf]
      %v248 = vld [vmem:[%s192 + $0xc4] sm:$0xf]
      %v249 = vld [vmem:[%s192 + $0xc8] sm:$0x1]
      %v250 = vld [vmem:[%s192 + $0xcc] sm:$0xf]
      %v251 = vld [vmem:[%s192 + $0xd0] sm:$0xf]
      %v252 = vld [vmem:[%s192 + $0xd4] sm:$0x1]
      %vm253 = vsmask.f32 3328
      %vm254 = vsmask.f32 7440
      %vm255 = vmor %vm253, %vm254
      %v257 = vshrl.u32 %v199, 16
      %v259 = vrot.slane %v257, 4
      %v260 = vshll.u32 %v199, 16
      %v262 = vrot.slane %v260, 5
      %v263 = vor.u32 %v259, %v262
      %v264 = vrot.slane %v263, 4
      %v266 = vshll.u32 %v200, 16
      %v268 = vrot.slane %v266, 5
      %v269 = vsel %vm255, %v264, %v268
      %v270 = vshrl.u32 %v200, 16
      %v272 = vrot.slane %v270, 4
      %v273 = vor.u32 %v272, %v268
      %v274 = vrot.slane %v273, 4
      %v276 = vshll.u32 %v201, 16
      %v278 = vrot.slane %v276, 5
      %v279 = vsel %vm255, %v274, %v278
      %v281 = vshrl.u32 %v202, 16
      %v283 = vrot.slane %v281, 4
      %v284 = vshll.u32 %v202, 16
      %v286 = vrot.slane %v284, 5
      %v287 = vor.u32 %v283, %v286
      %v288 = vrot.slane %v287, 4
      %v290 = vshll.u32 %v203, 16
      %v292 = vrot.slane %v290, 5
      %v293 = vsel %vm255, %v288, %v292
      %v294 = vshrl.u32 %v203, 16
      %v296 = vrot.slane %v294, 4
      %v297 = vor.u32 %v296, %v292
      %v298 = vrot.slane %v297, 4
      %v300 = vshll.u32 %v204, 16
      %v302 = vrot.slane %v300, 5
      %v303 = vsel %vm255, %v298, %v302
      %v305 = vshrl.u32 %v205, 16
      %v307 = vrot.slane %v305, 4
      %v308 = vshll.u32 %v205, 16
      %v310 = vrot.slane %v308, 5
      %v311 = vor.u32 %v307, %v310
      %v312 = vrot.slane %v311, 4
      %v314 = vshll.u32 %v206, 16
      %v316 = vrot.slane %v314, 5
      %v317 = vsel %vm255, %v312, %v316
      %v318 = vshrl.u32 %v206, 16
      %v320 = vrot.slane %v318, 4
      %v321 = vor.u32 %v320, %v316
      %v322 = vrot.slane %v321, 4
      %v324 = vshll.u32 %v207, 16
      %v326 = vrot.slane %v324, 5
      %v327 = vsel %vm255, %v322, %v326
      %v329 = vshrl.u32 %v208, 16
      %v331 = vrot.slane %v329, 4
      %v332 = vshll.u32 %v208, 16
      %v334 = vrot.slane %v332, 5
      %v335 = vor.u32 %v331, %v334
      %v336 = vrot.slane %v335, 4
      %v338 = vshll.u32 %v209, 16
      %v340 = vrot.slane %v338, 5
      %v341 = vsel %vm255, %v336, %v340
      %v342 = vshrl.u32 %v209, 16
      %v344 = vrot.slane %v342, 4
      %v345 = vor.u32 %v344, %v340
      %v346 = vrot.slane %v345, 4
      %v348 = vshll.u32 %v210, 16
      %v350 = vrot.slane %v348, 5
      %v351 = vsel %vm255, %v346, %v350
      %v353 = vshrl.u32 %v211, 16
      %v355 = vrot.slane %v353, 4
      %v356 = vshll.u32 %v211, 16
      %v358 = vrot.slane %v356, 5
      %v359 = vor.u32 %v355, %v358
      %v360 = vrot.slane %v359, 4
      %v362 = vshll.u32 %v212, 16
      %v364 = vrot.slane %v362, 5
      %v365 = vsel %vm255, %v360, %v364
      %v366 = vshrl.u32 %v212, 16
      %v368 = vrot.slane %v366, 4
      %v369 = vor.u32 %v368, %v364
      %v370 = vrot.slane %v369, 4
      %v372 = vshll.u32 %v213, 16
      %v374 = vrot.slane %v372, 5
      %v375 = vsel %vm255, %v370, %v374
      %v377 = vshrl.u32 %v214, 16
      %v379 = vrot.slane %v377, 4
      %v380 = vshll.u32 %v214, 16
      %v382 = vrot.slane %v380, 5
      %v383 = vor.u32 %v379, %v382
      %v384 = vrot.slane %v383, 4
      %v386 = vshll.u32 %v215, 16
      %v388 = vrot.slane %v386, 5
      %v389 = vsel %vm255, %v384, %v388
      %v390 = vshrl.u32 %v215, 16
      %v392 = vrot.slane %v390, 4
      %v393 = vor.u32 %v392, %v388
      %v394 = vrot.slane %v393, 4
      %v396 = vshll.u32 %v216, 16
      %v398 = vrot.slane %v396, 5
      %v399 = vsel %vm255, %v394, %v398
      %v401 = vshrl.u32 %v217, 16
      %v403 = vrot.slane %v401, 4
      %v404 = vshll.u32 %v217, 16
      %v406 = vrot.slane %v404, 5
      %v407 = vor.u32 %v403, %v406
      %v408 = vrot.slane %v407, 4
      %v410 = vshll.u32 %v218, 16
      %v412 = vrot.slane %v410, 5
      %v413 = vsel %vm255, %v408, %v412
      %v414 = vshrl.u32 %v218, 16
      %v416 = vrot.slane %v414, 4
      %v417 = vor.u32 %v416, %v412
      %v418 = vrot.slane %v417, 4
      %v420 = vshll.u32 %v219, 16
      %v422 = vrot.slane %v420, 5
      %v423 = vsel %vm255, %v418, %v422
      %v425 = vshrl.u32 %v220, 16
      %v427 = vrot.slane %v425, 4
      %v428 = vshll.u32 %v220, 16
      %v430 = vrot.slane %v428, 5
      %v431 = vor.u32 %v427, %v430
      %v432 = vrot.slane %v431, 4
      %v434 = vshll.u32 %v221, 16
      %v436 = vrot.slane %v434, 5
      %v437 = vsel %vm255, %v432, %v436
      %v438 = vshrl.u32 %v221, 16
      %v440 = vrot.slane %v438, 4
      %v441 = vor.u32 %v440, %v436
      %v442 = vrot.slane %v441, 4
      %v444 = vshll.u32 %v222, 16
      %v446 = vrot.slane %v444, 5
      %v447 = vsel %vm255, %v442, %v446
      %v449 = vshrl.u32 %v223, 16
      %v451 = vrot.slane %v449, 4
      %v452 = vshll.u32 %v223, 16
      %v454 = vrot.slane %v452, 5
      %v455 = vor.u32 %v451, %v454
      %v456 = vrot.slane %v455, 4
      %v458 = vshll.u32 %v224, 16
      %v460 = vrot.slane %v458, 5
      %v461 = vsel %vm255, %v456, %v460
      %v462 = vshrl.u32 %v224, 16
      %v464 = vrot.slane %v462, 4
      %v465 = vor.u32 %v464, %v460
      %v466 = vrot.slane %v465, 4
      %v468 = vshll.u32 %v225, 16
      %v470 = vrot.slane %v468, 5
      %v471 = vsel %vm255, %v466, %v470
      %v473 = vshrl.u32 %v226, 16
      %v475 = vrot.slane %v473, 4
      %v476 = vshll.u32 %v226, 16
      %v478 = vrot.slane %v476, 5
      %v479 = vor.u32 %v475, %v478
      %v480 = vrot.slane %v479, 4
      %v482 = vshll.u32 %v227, 16
      %v484 = vrot.slane %v482, 5
      %v485 = vsel %vm255, %v480, %v484
      %v486 = vshrl.u32 %v227, 16
      %v488 = vrot.slane %v486, 4
      %v489 = vor.u32 %v488, %v484
      %v490 = vrot.slane %v489, 4
      %v492 = vshll.u32 %v228, 16
      %v494 = vrot.slane %v492, 5
      %v495 = vsel %vm255, %v490, %v494
      %v497 = vshrl.u32 %v229, 16
      %v499 = vrot.slane %v497, 4
      %v500 = vshll.u32 %v229, 16
      %v502 = vrot.slane %v500, 5
      %v503 = vor.u32 %v499, %v502
      %v504 = vrot.slane %v503, 4
      %v506 = vshll.u32 %v230, 16
      %v508 = vrot.slane %v506, 5
      %v509 = vsel %vm255, %v504, %v508
      %v510 = vshrl.u32 %v230, 16
      %v512 = vrot.slane %v510, 4
      %v513 = vor.u32 %v512, %v508
      %v514 = vrot.slane %v513, 4
      %v516 = vshll.u32 %v231, 16
      %v518 = vrot.slane %v516, 5
      %v519 = vsel %vm255, %v514, %v518
      %v521 = vshrl.u32 %v232, 16
      %v523 = vrot.slane %v521, 4
      %v524 = vshll.u32 %v232, 16
      %v526 = vrot.slane %v524, 5
      %v527 = vor.u32 %v523, %v526
      %v528 = vrot.slane %v527, 4
      %v530 = vshll.u32 %v233, 16
      %v532 = vrot.slane %v530, 5
      %v533 = vsel %vm255, %v528, %v532
      %v534 = vshrl.u32 %v233, 16
      %v536 = vrot.slane %v534, 4
      %v537 = vor.u32 %v536, %v532
      %v538 = vrot.slane %v537, 4
      %v540 = vshll.u32 %v234, 16
      %v542 = vrot.slane %v540, 5
      %v543 = vsel %vm255, %v538, %v542
      %v545 = vshrl.u32 %v235, 16
      %v547 = vrot.slane %v545, 4
      %v548 = vshll.u32 %v235, 16
      %v550 = vrot.slane %v548, 5
      %v551 = vor.u32 %v547, %v550
      %v552 = vrot.slane %v551, 4
      %v554 = vshll.u32 %v236, 16
      %v556 = vrot.slane %v554, 5
      %v557 = vsel %vm255, %v552, %v556
      %v558 = vshrl.u32 %v236, 16
      %v560 = vrot.slane %v558, 4
      %v561 = vor.u32 %v560, %v556
      %v562 = vrot.slane %v561, 4
      %v564 = vshll.u32 %v237, 16
      %v566 = vrot.slane %v564, 5
      %v567 = vsel %vm255, %v562, %v566
      %v569 = vshrl.u32 %v238, 16
      %v571 = vrot.slane %v569, 4
      %v572 = vshll.u32 %v238, 16
      %v574 = vrot.slane %v572, 5
      %v575 = vor.u32 %v571, %v574
      %v576 = vrot.slane %v575, 4
      %v578 = vshll.u32 %v239, 16
      %v580 = vrot.slane %v578, 5
      %v581 = vsel %vm255, %v576, %v580
      %v582 = vshrl.u32 %v239, 16
      %v584 = vrot.slane %v582, 4
      %v585 = vor.u32 %v584, %v580
      %v586 = vrot.slane %v585, 4
      %v588 = vshll.u32 %v240, 16
      %v590 = vrot.slane %v588, 5
      %v591 = vsel %vm255, %v586, %v590
      %v593 = vshrl.u32 %v241, 16
      %v595 = vrot.slane %v593, 4
      %v596 = vshll.u32 %v241, 16
      %v598 = vrot.slane %v596, 5
      %v599 = vor.u32 %v595, %v598
      %v600 = vrot.slane %v599, 4
      %v602 = vshll.u32 %v242, 16
      %v604 = vrot.slane %v602, 5
      %v605 = vsel %vm255, %v600, %v604
      %v606 = vshrl.u32 %v242, 16
      %v608 = vrot.slane %v606, 4
      %v609 = vor.u32 %v608, %v604
      %v610 = vrot.slane %v609, 4
      %v612 = vshll.u32 %v243, 16
      %v614 = vrot.slane %v612, 5
      %v615 = vsel %vm255, %v610, %v614
      %v617 = vshrl.u32 %v244, 16
      %v619 = vrot.slane %v617, 4
      %v620 = vshll.u32 %v244, 16
      %v622 = vrot.slane %v620, 5
      %v623 = vor.u32 %v619, %v622
      %v624 = vrot.slane %v623, 4
      %v626 = vshll.u32 %v245, 16
      %v628 = vrot.slane %v626, 5
      %v629 = vsel %vm255, %v624, %v628
      %v630 = vshrl.u32 %v245, 16
      %v632 = vrot.slane %v630, 4
      %v633 = vor.u32 %v632, %v628
      %v634 = vrot.slane %v633, 4
      %v636 = vshll.u32 %v246, 16
      %v638 = vrot.slane %v636, 5
      %v639 = vsel %vm255, %v634, %v638
      %vm688 = vcmask 1042432
      %vm689 = vcmask 1046532
      %vm690 = vmor %vm688, %vm689
      %v691 = vrot.slane %v199, 5
      %v692 = vrot.slane %v691, 4
      %v693 = vrot.slane %v200, 5
      %v694 = vsel %vm690, %v692, %v693
      %v695 = vrot.slane %v693, 4
      %v696 = vrot.slane %v201, 5
      %v697 = vsel %vm690, %v695, %v696
      %v698 = vrot.slane %v202, 5
      %v699 = vrot.slane %v698, 4
      %v700 = vrot.slane %v203, 5
      %v701 = vsel %vm690, %v699, %v700
      %v702 = vrot.slane %v700, 4
      %v703 = vrot.slane %v204, 5
      %v704 = vsel %vm690, %v702, %v703
      %v705 = vrot.slane %v205, 5
      %v706 = vrot.slane %v705, 4
      %v707 = vrot.slane %v206, 5
      %v708 = vsel %vm690, %v706, %v707
      %v709 = vrot.slane %v707, 4
      %v710 = vrot.slane %v207, 5
      %v711 = vsel %vm690, %v709, %v710
      %v712 = vrot.slane %v208, 5
      %v713 = vrot.slane %v712, 4
      %v714 = vrot.slane %v209, 5
      %v715 = vsel %vm690, %v713, %v714
      %v716 = vrot.slane %v714, 4
      %v717 = vrot.slane %v210, 5
      %v718 = vsel %vm690, %v716, %v717
      %v719 = vrot.slane %v211, 5
      %v720 = vrot.slane %v719, 4
      %v721 = vrot.slane %v212, 5
      %v722 = vsel %vm690, %v720, %v721
      %v723 = vrot.slane %v721, 4
      %v724 = vrot.slane %v213, 5
      %v725 = vsel %vm690, %v723, %v724
      %v726 = vrot.slane %v214, 5
      %v727 = vrot.slane %v726, 4
      %v728 = vrot.slane %v215, 5
      %v729 = vsel %vm690, %v727, %v728
      %v730 = vrot.slane %v728, 4
      %v731 = vrot.slane %v216, 5
      %v732 = vsel %vm690, %v730, %v731
      %v733 = vrot.slane %v217, 5
      %v734 = vrot.slane %v733, 4
      %v735 = vrot.slane %v218, 5
      %v736 = vsel %vm690, %v734, %v735
      %v737 = vrot.slane %v735, 4
      %v738 = vrot.slane %v219, 5
      %v739 = vsel %vm690, %v737, %v738
      %v740 = vrot.slane %v220, 5
      %v741 = vrot.slane %v740, 4
      %v742 = vrot.slane %v221, 5
      %v743 = vsel %vm690, %v741, %v742
      %v744 = vrot.slane %v742, 4
      %v745 = vrot.slane %v222, 5
      %v746 = vsel %vm690, %v744, %v745
      %v747 = vrot.slane %v223, 5
      %v748 = vrot.slane %v747, 4
      %v749 = vrot.slane %v224, 5
      %v750 = vsel %vm690, %v748, %v749
      %v751 = vrot.slane %v749, 4
      %v752 = vrot.slane %v225, 5
      %v753 = vsel %vm690, %v751, %v752
      %v754 = vrot.slane %v226, 5
      %v755 = vrot.slane %v754, 4
      %v756 = vrot.slane %v227, 5
      %v757 = vsel %vm690, %v755, %v756
      %v758 = vrot.slane %v756, 4
      %v759 = vrot.slane %v228, 5
      %v760 = vsel %vm690, %v758, %v759
      %v761 = vrot.slane %v229, 5
      %v762 = vrot.slane %v761, 4
      %v763 = vrot.slane %v230, 5
      %v764 = vsel %vm690, %v762, %v763
      %v765 = vrot.slane %v763, 4
      %v766 = vrot.slane %v231, 5
      %v767 = vsel %vm690, %v765, %v766
      %v768 = vrot.slane %v232, 5
      %v769 = vrot.slane %v768, 4
      %v770 = vrot.slane %v233, 5
      %v771 = vsel %vm690, %v769, %v770
      %v772 = vrot.slane %v770, 4
      %v773 = vrot.slane %v234, 5
      %v774 = vsel %vm690, %v772, %v773
      %v775 = vrot.slane %v235, 5
      %v776 = vrot.slane %v775, 4
      %v777 = vrot.slane %v236, 5
      %v778 = vsel %vm690, %v776, %v777
      %v779 = vrot.slane %v777, 4
      %v780 = vrot.slane %v237, 5
      %v781 = vsel %vm690, %v779, %v780
      %v782 = vrot.slane %v238, 5
      %v783 = vrot.slane %v782, 4
      %v784 = vrot.slane %v239, 5
      %v785 = vsel %vm690, %v783, %v784
      %v786 = vrot.slane %v784, 4
      %v787 = vrot.slane %v240, 5
      %v788 = vsel %vm690, %v786, %v787
      %v789 = vrot.slane %v241, 5
      %v790 = vrot.slane %v789, 4
      %v791 = vrot.slane %v242, 5
      %v792 = vsel %vm690, %v790, %v791
      %v793 = vrot.slane %v791, 4
      %v794 = vrot.slane %v243, 5
      %v795 = vsel %vm690, %v793, %v794
      %v796 = vrot.slane %v244, 5
      %v797 = vrot.slane %v796, 4
      %v798 = vrot.slane %v245, 5
      %v799 = vsel %vm690, %v797, %v798
      %v800 = vrot.slane %v798, 4
      %v801 = vrot.slane %v246, 5
      %v802 = vsel %vm690, %v800, %v801
      %v804 = vshrl.u32 %v247, 16
      %v806 = vrot.slane %v804, 4
      %v807 = vshll.u32 %v247, 16
      %v809 = vrot.slane %v807, 5
      %v810 = vor.u32 %v806, %v809
      %v811 = vrot.slane %v810, 4
      %v813 = vshll.u32 %v248, 16
      %v815 = vrot.slane %v813, 5
      %v816 = vsel %vm255, %v811, %v815
      %v817 = vshrl.u32 %v248, 16
      %v819 = vrot.slane %v817, 4
      %v820 = vor.u32 %v819, %v815
      %v821 = vrot.slane %v820, 4
      %v823 = vshll.u32 %v249, 16
      %v825 = vrot.slane %v823, 5
      %v826 = vsel %vm255, %v821, %v825
      %v830 = vrot.slane %v247, 5
      %v831 = vrot.slane %v830, 4
      %v832 = vrot.slane %v248, 5
      %v833 = vsel %vm690, %v831, %v832
      %v834 = vrot.slane %v832, 4
      %v835 = vrot.slane %v249, 5
      %v836 = vsel %vm690, %v834, %v835
      %v838 = vshrl.u32 %v250, 16
      %v840 = vrot.slane %v838, 4
      %v841 = vshll.u32 %v250, 16
      %v843 = vrot.slane %v841, 5
      %v844 = vor.u32 %v840, %v843
      %v845 = vrot.slane %v844, 4
      %v847 = vshll.u32 %v251, 16
      %v849 = vrot.slane %v847, 5
      %v850 = vsel %vm255, %v845, %v849
      %v851 = vshrl.u32 %v251, 16
      %v853 = vrot.slane %v851, 4
      %v854 = vor.u32 %v853, %v849
      %v855 = vrot.slane %v854, 4
      %v857 = vshll.u32 %v252, 16
      %v859 = vrot.slane %v857, 5
      %v860 = vsel %vm255, %v855, %v859
      %v864 = vrot.slane %v250, 5
      %v865 = vrot.slane %v864, 4
      %v866 = vrot.slane %v251, 5
      %v867 = vsel %vm690, %v865, %v866
      %v868 = vrot.slane %v866, 4
      %v869 = vrot.slane %v252, 5
      %v870 = vsel %vm690, %v868, %v869
      %v871 = vld [vmem:[%s1] sm:$0xf]
      %s872 = scalar_lea.vmem %s1, 4
      %v873 = vld [vmem:[%s872] sm:$0xf]
      %v874 = vunpack.c.l.b16 %v269
      %v875 = vunpack.c.l.b16 %v279
      %v876 = vunpack.c.l.b16 %v293
      %v877 = vunpack.c.l.b16 %v303
      %v878 = vunpack.c.l.b16 %v317
      %v879 = vunpack.c.l.b16 %v327
      %v880 = vunpack.c.l.b16 %v341
      %v881 = vunpack.c.l.b16 %v351
      %v882 = vunpack.c.l.b16 %v365
      %v883 = vunpack.c.l.b16 %v375
      %v884 = vunpack.c.l.b16 %v389
      %v885 = vunpack.c.l.b16 %v399
      %v886 = vunpack.c.l.b16 %v413
      %v887 = vunpack.c.l.b16 %v423
      %v888 = vunpack.c.l.b16 %v437
      %v889 = vunpack.c.l.b16 %v447
      %v890 = vunpack.c.l.b16 %v461
      %v891 = vunpack.c.l.b16 %v471
      %v892 = vunpack.c.l.b16 %v485
      %v893 = vunpack.c.l.b16 %v495
      %v894 = vunpack.c.l.b16 %v509
      %v895 = vunpack.c.l.b16 %v519
      %v896 = vunpack.c.l.b16 %v533
      %v897 = vunpack.c.l.b16 %v543
      %v898 = vunpack.c.l.b16 %v557
      %v899 = vunpack.c.l.b16 %v567
      %v900 = vunpack.c.l.b16 %v581
      %v901 = vunpack.c.l.b16 %v591
      %v902 = vunpack.c.l.b16 %v605
      %v903 = vunpack.c.l.b16 %v615
      %v904 = vunpack.c.l.b16 %v629
      %v905 = vunpack.c.l.b16 %v639
      %v906 = vpack.c.b16 %v875, %v874
      %v907 = vpack.c.b16 %v877, %v876
      %v908 = vpack.c.b16 %v879, %v878
      %v909 = vpack.c.b16 %v881, %v880
      %v910 = vpack.c.b16 %v883, %v882
      %v911 = vpack.c.b16 %v885, %v884
      %v912 = vpack.c.b16 %v887, %v886
      %v913 = vpack.c.b16 %v889, %v888
      %v914 = vpack.c.b16 %v891, %v890
      %v915 = vpack.c.b16 %v893, %v892
      %v916 = vpack.c.b16 %v895, %v894
      %v917 = vpack.c.b16 %v897, %v896
      %v918 = vpack.c.b16 %v899, %v898
      %v919 = vpack.c.b16 %v901, %v900
      %v920 = vpack.c.b16 %v903, %v902
      %v921 = vpack.c.b16 %v905, %v904
      %vm922 = vcmask 64512
      %v924 = vsel %vm922, %v906, 0
      %v927 = vsel %vm922, %v907, 0
      %v930 = vsel %vm922, %v908, 0
      %v933 = vsel %vm922, %v909, 0
      %v936 = vsel %vm922, %v910, 0
      %v939 = vsel %vm922, %v911, 0
      %v942 = vsel %vm922, %v912, 0
      %v945 = vsel %vm922, %v913, 0
      %v948 = vsel %vm922, %v914, 0
      %v951 = vsel %vm922, %v915, 0
      %v954 = vsel %vm922, %v916, 0
      %v957 = vsel %vm922, %v917, 0
      %v960 = vsel %vm922, %v918, 0
      %v963 = vsel %vm922, %v919, 0
      %v966 = vsel %vm922, %v920, 0
      %v969 = vsel %vm922, %v921, 0
      %vm971 = vcmask 1043456
      %v973 = vsel %vm971, %v873, 0
      %975 = vmatprep.subr.bf16.mxu0 0
      %976 = vmatpush1.bf16.msra.mxu0 %v973
      %977 = vmatprep.subr.bf16.mxu0 0
      %978 = vmatpush1.bf16.msra.mxu0 0
      %979 = vmatprep.subr.bf16.mxu0 0
      %980 = vmatpush1.bf16.msra.mxu0 0
      %981 = vmatprep.subr.bf16.mxu0 0
      %982 = vmatpush1.bf16.msra.mxu0 0
      %983 = vmatprep.subr.bf16.mxu0 0
      %984 = vmatpush1.bf16.msra.mxu0 0
      %985 = vmatprep.subr.bf16.mxu0 0
      %986 = vmatpush1.bf16.msra.mxu0 0
      %987 = vmatprep.subr.bf16.mxu0 0
      %988 = vmatpush1.bf16.msra.mxu0 0
      %989 = vmatprep.subr.bf16.mxu0 0
      %990 = vmatpush1.bf16.msra.mxu0 0
      %991 = vmatprep.subr.bf16.mxu0 0
      %992 = vmatpush1.bf16.msra.mxu0 0
      %993 = vmatprep.subr.bf16.mxu0 0
      %994 = vmatpush1.bf16.msra.mxu0 0
      %995 = vmatprep.subr.bf16.mxu0 0
      %996 = vmatpush1.bf16.msra.mxu0 0
      %997 = vmatprep.subr.bf16.mxu0 0
      %998 = vmatpush1.bf16.msra.mxu0 0
      %999 = vmatprep.subr.bf16.mxu0 0
      %1000 = vmatpush1.bf16.msra.mxu0 0
      %1001 = vmatprep.subr.bf16.mxu0 0
      %1002 = vmatpush1.bf16.msra.mxu0 0
      %1003 = vmatprep.subr.bf16.mxu0 0
      %1004 = vmatpush1.bf16.msra.mxu0 0
      %1005 = vmatprep.subr.bf16.mxu0 0
      %1006 = vmatpush1.bf16.msra.mxu0 0
      %1007 = vmatprep.mubr.bf16.mxu0 0
      %1008 = vmatmul.mubr.bf16.gmra.mrb[0].mxu0 %v924
      %v1009 = vpop.f32.mrb[0].mxu0
      %v1010 = vadd.f32 0.0, %v1009
      %v1011 = vpop.f32.mrb[0].mxu0
      %v1012 = vpop.f32.mrb[0].mxu0
      %v1013 = vadd.f32 0.0, %v1012
      %v1014 = vpop.f32.mrb[0].mxu0
      %1015 = vmatprep.mubr.bf16.mxu0 0
      %1016 = vmatmul.mubr.bf16.gmra.mrb[0].mxu0 %v927
      %v1017 = vpop.f32.mrb[0].mxu0
      %v1018 = vadd.f32 0.0, %v1017
      %v1019 = vpop.f32.mrb[0].mxu0
      %v1020 = vpop.f32.mrb[0].mxu0
      %v1021 = vadd.f32 0.0, %v1020
      %v1022 = vpop.f32.mrb[0].mxu0
      %1023 = vmatprep.mubr.bf16.mxu0 0
      %1024 = vmatmul.mubr.bf16.gmra.mrb[0].mxu0 %v930
      %v1025 = vpop.f32.mrb[0].mxu0
      %v1026 = vadd.f32 0.0, %v1025
      %v1027 = vpop.f32.mrb[0].mxu0
      %v1028 = vpop.f32.mrb[0].mxu0
      %v1029 = vadd.f32 0.0, %v1028
      %v1030 = vpop.f32.mrb[0].mxu0
      %1031 = vmatprep.mubr.bf16.mxu0 0
      %1032 = vmatmul.mubr.bf16.gmra.mrb[0].mxu0 %v933
      %v1033 = vpop.f32.mrb[0].mxu0
      %v1034 = vadd.f32 0.0, %v1033
      %v1035 = vpop.f32.mrb[0].mxu0
      %v1036 = vpop.f32.mrb[0].mxu0
      %v1037 = vadd.f32 0.0, %v1036
      %v1038 = vpop.f32.mrb[0].mxu0
      %1039 = vmatprep.mubr.bf16.mxu0 0
      %1040 = vmatmul.mubr.bf16.gmra.mrb[0].mxu0 %v936
      %v1041 = vpop.f32.mrb[0].mxu0
      %v1042 = vadd.f32 0.0, %v1041
      %v1043 = vpop.f32.mrb[0].mxu0
      %v1044 = vpop.f32.mrb[0].mxu0
      %v1045 = vadd.f32 0.0, %v1044
      %v1046 = vpop.f32.mrb[0].mxu0
      %1047 = vmatprep.mubr.bf16.mxu0 0
      %1048 = vmatmul.mubr.bf16.gmra.mrb[0].mxu0 %v939
      %v1049 = vpop.f32.mrb[0].mxu0
      %v1050 = vadd.f32 0.0, %v1049
      %v1051 = vpop.f32.mrb[0].mxu0
      %v1052 = vpop.f32.mrb[0].mxu0
      %v1053 = vadd.f32 0.0, %v1052
      %v1054 = vpop.f32.mrb[0].mxu0
      %1055 = vmatprep.mubr.bf16.mxu0 0
      %1056 = vmatmul.mubr.bf16.gmra.mrb[0].mxu0 %v942
      %v1057 = vpop.f32.mrb[0].mxu0
      %v1058 = vadd.f32 0.0, %v1057
      %v1059 = vpop.f32.mrb[0].mxu0
      %v1060 = vpop.f32.mrb[0].mxu0
      %v1061 = vadd.f32 0.0, %v1060
      %v1062 = vpop.f32.mrb[0].mxu0
      %1063 = vmatprep.mubr.bf16.mxu0 0
      %1064 = vmatmul.mubr.bf16.gmra.mrb[0].mxu0 %v945
      %v1065 = vpop.f32.mrb[0].mxu0
      %v1066 = vadd.f32 0.0, %v1065
      %v1067 = vpop.f32.mrb[0].mxu0
      %v1068 = vpop.f32.mrb[0].mxu0
      %v1069 = vadd.f32 0.0, %v1068
      %v1070 = vpop.f32.mrb[0].mxu0
      %1071 = vmatprep.mubr.bf16.mxu0 0
      %1072 = vmatmul.mubr.bf16.gmra.mrb[0].mxu0 %v948
      %v1073 = vpop.f32.mrb[0].mxu0
      %v1074 = vadd.f32 0.0, %v1073
      %v1075 = vpop.f32.mrb[0].mxu0
      %v1076 = vpop.f32.mrb[0].mxu0
      %v1077 = vadd.f32 0.0, %v1076
      %v1078 = vpop.f32.mrb[0].mxu0
      %1079 = vmatprep.mubr.bf16.mxu0 0
      %1080 = vmatmul.mubr.bf16.gmra.mrb[0].mxu0 %v951
      %v1081 = vpop.f32.mrb[0].mxu0
      %v1082 = vadd.f32 0.0, %v1081
      %v1083 = vpop.f32.mrb[0].mxu0
      %v1084 = vpop.f32.mrb[0].mxu0
      %v1085 = vadd.f32 0.0, %v1084
      %v1086 = vpop.f32.mrb[0].mxu0
      %1087 = vmatprep.mubr.bf16.mxu0 0
      %1088 = vmatmul.mubr.bf16.gmra.mrb[0].mxu0 %v954
      %v1089 = vpop.f32.mrb[0].mxu0
      %v1090 = vadd.f32 0.0, %v1089
      %v1091 = vpop.f32.mrb[0].mxu0
      %v1092 = vpop.f32.mrb[0].mxu0
      %v1093 = vadd.f32 0.0, %v1092
      %v1094 = vpop.f32.mrb[0].mxu0
      %1095 = vmatprep.mubr.bf16.mxu0 0
      %1096 = vmatmul.mubr.bf16.gmra.mrb[0].mxu0 %v957
      %v1097 = vpop.f32.mrb[0].mxu0
      %v1098 = vadd.f32 0.0, %v1097
      %v1099 = vpop.f32.mrb[0].mxu0
      %v1100 = vpop.f32.mrb[0].mxu0
      %v1101 = vadd.f32 0.0, %v1100
      %v1102 = vpop.f32.mrb[0].mxu0
      %1103 = vmatprep.mubr.bf16.mxu0 0
      %1104 = vmatmul.mubr.bf16.gmra.mrb[0].mxu0 %v960
      %v1105 = vpop.f32.mrb[0].mxu0
      %v1106 = vadd.f32 0.0, %v1105
      %v1107 = vpop.f32.mrb[0].mxu0
      %v1108 = vpop.f32.mrb[0].mxu0
      %v1109 = vadd.f32 0.0, %v1108
      %v1110 = vpop.f32.mrb[0].mxu0
      %1111 = vmatprep.mubr.bf16.mxu0 0
      %1112 = vmatmul.mubr.bf16.gmra.mrb[0].mxu0 %v963
      %v1113 = vpop.f32.mrb[0].mxu0
      %v1114 = vadd.f32 0.0, %v1113
      %v1115 = vpop.f32.mrb[0].mxu0
      %v1116 = vpop.f32.mrb[0].mxu0
      %v1117 = vadd.f32 0.0, %v1116
      %v1118 = vpop.f32.mrb[0].mxu0
      %1119 = vmatprep.mubr.bf16.mxu0 0
      %1120 = vmatmul.mubr.bf16.gmra.mrb[0].mxu0 %v966
      %v1121 = vpop.f32.mrb[0].mxu0
      %v1122 = vadd.f32 0.0, %v1121
      %v1123 = vpop.f32.mrb[0].mxu0
      %v1124 = vpop.f32.mrb[0].mxu0
      %v1125 = vadd.f32 0.0, %v1124
      %v1126 = vpop.f32.mrb[0].mxu0
      %1127 = vmatprep.mubr.bf16.mxu0 0
      %1128 = vmatmul.mubr.bf16.gmra.mrb[0].mxu0 %v969
      %v1129 = vpop.f32.mrb[0].mxu0
      %v1130 = vadd.f32 0.0, %v1129
      %v1131 = vpop.f32.mrb[0].mxu0
      %v1132 = vpop.f32.mrb[0].mxu0
      %v1133 = vadd.f32 0.0, %v1132
      %v1134 = vpop.f32.mrb[0].mxu0
      %1135 = vdwg.mxu0
      %v1136 = vunpack.c.l.b16 %v199
      %v1137 = vunpack.c.l.b16 %v200
      %v1138 = vunpack.c.l.b16 %v202
      %v1139 = vunpack.c.l.b16 %v203
      %v1140 = vunpack.c.l.b16 %v205
      %v1141 = vunpack.c.l.b16 %v206
      %v1142 = vunpack.c.l.b16 %v208
      %v1143 = vunpack.c.l.b16 %v209
      %v1144 = vunpack.c.l.b16 %v211
      %v1145 = vunpack.c.l.b16 %v212
      %v1146 = vunpack.c.l.b16 %v214
      %v1147 = vunpack.c.l.b16 %v215
      %v1148 = vunpack.c.l.b16 %v217
      %v1149 = vunpack.c.l.b16 %v218
      %v1150 = vunpack.c.l.b16 %v220
      %v1151 = vunpack.c.l.b16 %v221
      %v1152 = vunpack.c.l.b16 %v223
      %v1153 = vunpack.c.l.b16 %v224
      %v1154 = vunpack.c.l.b16 %v226
      %v1155 = vunpack.c.l.b16 %v227
      %v1156 = vunpack.c.l.b16 %v229
      %v1157 = vunpack.c.l.b16 %v230
      %v1158 = vunpack.c.l.b16 %v232
      %v1159 = vunpack.c.l.b16 %v233
      %v1160 = vunpack.c.l.b16 %v235
      %v1161 = vunpack.c.l.b16 %v236
      %v1162 = vunpack.c.l.b16 %v238
      %v1163 = vunpack.c.l.b16 %v239
      %v1164 = vunpack.c.l.b16 %v241
      %v1165 = vunpack.c.l.b16 %v242
      %v1166 = vunpack.c.l.b16 %v244
      %v1167 = vunpack.c.l.b16 %v245
      %v1168 = vpack.c.b16 %v1137, %v1136
      %v1169 = vpack.c.b16 %v1139, %v1138
      %v1170 = vpack.c.b16 %v1141, %v1140
      %v1171 = vpack.c.b16 %v1143, %v1142
      %v1172 = vpack.c.b16 %v1145, %v1144
      %v1173 = vpack.c.b16 %v1147, %v1146
      %v1174 = vpack.c.b16 %v1149, %v1148
      %v1175 = vpack.c.b16 %v1151, %v1150
      %v1176 = vpack.c.b16 %v1153, %v1152
      %v1177 = vpack.c.b16 %v1155, %v1154
      %v1178 = vpack.c.b16 %v1157, %v1156
      %v1179 = vpack.c.b16 %v1159, %v1158
      %v1180 = vpack.c.b16 %v1161, %v1160
      %v1181 = vpack.c.b16 %v1163, %v1162
      %v1182 = vpack.c.b16 %v1165, %v1164
      %v1183 = vpack.c.b16 %v1167, %v1166
      %v1185 = vsel %vm922, %v1168, 0
      %v1188 = vsel %vm922, %v1169, 0
      %v1191 = vsel %vm922, %v1170, 0
      %v1194 = vsel %vm922, %v1171, 0
      %v1197 = vsel %vm922, %v1172, 0
      %v1200 = vsel %vm922, %v1173, 0
      %v1203 = vsel %vm922, %v1174, 0
      %v1206 = vsel %vm922, %v1175, 0
      %v1209 = vsel %vm922, %v1176, 0
      %v1212 = vsel %vm922, %v1177, 0
      %v1215 = vsel %vm922, %v1178, 0
      %v1218 = vsel %vm922, %v1179, 0
      %v1221 = vsel %vm922, %v1180, 0
      %v1224 = vsel %vm922, %v1181, 0
      %v1227 = vsel %vm922, %v1182, 0
      %v1230 = vsel %vm922, %v1183, 0
      %v1233 = vsel %vm971, %v871, 0
      %1235 = vmatprep.subr.bf16.mxu0 0
      %1236 = vmatpush1.bf16.msra.mxu0 %v1233
      %1237 = vmatprep.subr.bf16.mxu0 0
      %1238 = vmatpush1.bf16.msra.mxu0 0
      %1239 = vmatprep.subr.bf16.mxu0 0
      %1240 = vmatpush1.bf16.msra.mxu0 0
      %1241 = vmatprep.subr.bf16.mxu0 0
      %1242 = vmatpush1.bf16.msra.mxu0 0
      %1243 = vmatprep.subr.bf16.mxu0 0
      %1244 = vmatpush1.bf16.msra.mxu0 0
      %1245 = vmatprep.subr.bf16.mxu0 0
      %1246 = vmatpush1.bf16.msra.mxu0 0
      %1247 = vmatprep.subr.bf16.mxu0 0
      %1248 = vmatpush1.bf16.msra.mxu0 0
      %1249 = vmatprep.subr.bf16.mxu0 0
      %1250 = vmatpush1.bf16.msra.mxu0 0
      %1251 = vmatprep.subr.bf16.mxu0 0
      %1252 = vmatpush1.bf16.msra.mxu0 0
      %1253 = vmatprep.subr.bf16.mxu0 0
      %1254 = vmatpush1.bf16.msra.mxu0 0
      %1255 = vmatprep.subr.bf16.mxu0 0
      %1256 = vmatpush1.bf16.msra.mxu0 0
      %1257 = vmatprep.subr.bf16.mxu0 0
      %1258 = vmatpush1.bf16.msra.mxu0 0
      %1259 = vmatprep.subr.bf16.mxu0 0
      %1260 = vmatpush1.bf16.msra.mxu0 0
      %1261 = vmatprep.subr.bf16.mxu0 0
      %1262 = vmatpush1.bf16.msra.mxu0 0
      %1263 = vmatprep.subr.bf16.mxu0 0
      %1264 = vmatpush1.bf16.msra.mxu0 0
      %1265 = vmatprep.subr.bf16.mxu0 0
      %1266 = vmatpush1.bf16.msra.mxu0 0
      %1267 = vmatprep.mubr.bf16.mxu0 0
      %1268 = vmatmul.mubr.bf16.gmra.mrb[0].mxu0 %v1185
      %v1269 = vpop.f32.mrb[0].mxu0
      %v1270 = vadd.f32 %v1010, %v1269
      %v1271 = vpop.f32.mrb[0].mxu0
      %v1272 = vpop.f32.mrb[0].mxu0
      %v1273 = vadd.f32 %v1013, %v1272
      %v1274 = vpop.f32.mrb[0].mxu0
      %1275 = vmatprep.mubr.bf16.mxu0 0
      %1276 = vmatmul.mubr.bf16.gmra.mrb[0].mxu0 %v1188
      %v1277 = vpop.f32.mrb[0].mxu0
      %v1278 = vadd.f32 %v1018, %v1277
      %v1279 = vpop.f32.mrb[0].mxu0
      %v1280 = vpop.f32.mrb[0].mxu0
      %v1281 = vadd.f32 %v1021, %v1280
      %v1282 = vpop.f32.mrb[0].mxu0
      %1283 = vmatprep.mubr.bf16.mxu0 0
      %1284 = vmatmul.mubr.bf16.gmra.mrb[0].mxu0 %v1191
      %v1285 = vpop.f32.mrb[0].mxu0
      %v1286 = vadd.f32 %v1026, %v1285
      %v1287 = vpop.f32.mrb[0].mxu0
      %v1288 = vpop.f32.mrb[0].mxu0
      %v1289 = vadd.f32 %v1029, %v1288
      %v1290 = vpop.f32.mrb[0].mxu0
      %1291 = vmatprep.mubr.bf16.mxu0 0
      %1292 = vmatmul.mubr.bf16.gmra.mrb[0].mxu0 %v1194
      %v1293 = vpop.f32.mrb[0].mxu0
      %v1294 = vadd.f32 %v1034, %v1293
      %v1295 = vpop.f32.mrb[0].mxu0
      %v1296 = vpop.f32.mrb[0].mxu0
      %v1297 = vadd.f32 %v1037, %v1296
      %v1298 = vpop.f32.mrb[0].mxu0
      %1299 = vmatprep.mubr.bf16.mxu0 0
      %1300 = vmatmul.mubr.bf16.gmra.mrb[0].mxu0 %v1197
      %v1301 = vpop.f32.mrb[0].mxu0
      %v1302 = vadd.f32 %v1042, %v1301
      %v1303 = vpop.f32.mrb[0].mxu0
      %v1304 = vpop.f32.mrb[0].mxu0
      %v1305 = vadd.f32 %v1045, %v1304
      %v1306 = vpop.f32.mrb[0].mxu0
      %1307 = vmatprep.mubr.bf16.mxu0 0
      %1308 = vmatmul.mubr.bf16.gmra.mrb[0].mxu0 %v1200
      %v1309 = vpop.f32.mrb[0].mxu0
      %v1310 = vadd.f32 %v1050, %v1309
      %v1311 = vpop.f32.mrb[0].mxu0
      %v1312 = vpop.f32.mrb[0].mxu0
      %v1313 = vadd.f32 %v1053, %v1312
      %v1314 = vpop.f32.mrb[0].mxu0
      %1315 = vmatprep.mubr.bf16.mxu0 0
      %1316 = vmatmul.mubr.bf16.gmra.mrb[0].mxu0 %v1203
      %v1317 = vpop.f32.mrb[0].mxu0
      %v1318 = vadd.f32 %v1058, %v1317
      %v1319 = vpop.f32.mrb[0].mxu0
      %v1320 = vpop.f32.mrb[0].mxu0
      %v1321 = vadd.f32 %v1061, %v1320
      %v1322 = vpop.f32.mrb[0].mxu0
      %1323 = vmatprep.mubr.bf16.mxu0 0
      %1324 = vmatmul.mubr.bf16.gmra.mrb[0].mxu0 %v1206
      %v1325 = vpop.f32.mrb[0].mxu0
      %v1326 = vadd.f32 %v1066, %v1325
      %v1327 = vpop.f32.mrb[0].mxu0
      %v1328 = vpop.f32.mrb[0].mxu0
      %v1329 = vadd.f32 %v1069, %v1328
      %v1330 = vpop.f32.mrb[0].mxu0
      %1331 = vmatprep.mubr.bf16.mxu0 0
      %1332 = vmatmul.mubr.bf16.gmra.mrb[0].mxu0 %v1209
      %v1333 = vpop.f32.mrb[0].mxu0
      %v1334 = vadd.f32 %v1074, %v1333
      %v1335 = vpop.f32.mrb[0].mxu0
      %v1336 = vpop.f32.mrb[0].mxu0
      %v1337 = vadd.f32 %v1077, %v1336
      %v1338 = vpop.f32.mrb[0].mxu0
      %1339 = vmatprep.mubr.bf16.mxu0 0
      %1340 = vmatmul.mubr.bf16.gmra.mrb[0].mxu0 %v1212
      %v1341 = vpop.f32.mrb[0].mxu0
      %v1342 = vadd.f32 %v1082, %v1341
      %v1343 = vpop.f32.mrb[0].mxu0
      %v1344 = vpop.f32.mrb[0].mxu0
      %v1345 = vadd.f32 %v1085, %v1344
      %v1346 = vpop.f32.mrb[0].mxu0
      %1347 = vmatprep.mubr.bf16.mxu0 0
      %1348 = vmatmul.mubr.bf16.gmra.mrb[0].mxu0 %v1215
      %v1349 = vpop.f32.mrb[0].mxu0
      %v1350 = vadd.f32 %v1090, %v1349
      %v1351 = vpop.f32.mrb[0].mxu0
      %v1352 = vpop.f32.mrb[0].mxu0
      %v1353 = vadd.f32 %v1093, %v1352
      %v1354 = vpop.f32.mrb[0].mxu0
      %1355 = vmatprep.mubr.bf16.mxu0 0
      %1356 = vmatmul.mubr.bf16.gmra.mrb[0].mxu0 %v1218
      %v1357 = vpop.f32.mrb[0].mxu0
      %v1358 = vadd.f32 %v1098, %v1357
      %v1359 = vpop.f32.mrb[0].mxu0
      %v1360 = vpop.f32.mrb[0].mxu0
      %v1361 = vadd.f32 %v1101, %v1360
      %v1362 = vpop.f32.mrb[0].mxu0
      %1363 = vmatprep.mubr.bf16.mxu0 0
      %1364 = vmatmul.mubr.bf16.gmra.mrb[0].mxu0 %v1221
      %v1365 = vpop.f32.mrb[0].mxu0
      %v1366 = vadd.f32 %v1106, %v1365
      %v1367 = vpop.f32.mrb[0].mxu0
      %v1368 = vpop.f32.mrb[0].mxu0
      %v1369 = vadd.f32 %v1109, %v1368
      %v1370 = vpop.f32.mrb[0].mxu0
      %1371 = vmatprep.mubr.bf16.mxu0 0
      %1372 = vmatmul.mubr.bf16.gmra.mrb[0].mxu0 %v1224
      %v1373 = vpop.f32.mrb[0].mxu0
      %v1374 = vadd.f32 %v1114, %v1373
      %v1375 = vpop.f32.mrb[0].mxu0
      %v1376 = vpop.f32.mrb[0].mxu0
      %v1377 = vadd.f32 %v1117, %v1376
      %v1378 = vpop.f32.mrb[0].mxu0
      %1379 = vmatprep.mubr.bf16.mxu0 0
      %1380 = vmatmul.mubr.bf16.gmra.mrb[0].mxu0 %v1227
      %v1381 = vpop.f32.mrb[0].mxu0
      %v1382 = vadd.f32 %v1122, %v1381
      %v1383 = vpop.f32.mrb[0].mxu0
      %v1384 = vpop.f32.mrb[0].mxu0
      %v1385 = vadd.f32 %v1125, %v1384
      %v1386 = vpop.f32.mrb[0].mxu0
      %1387 = vmatprep.mubr.bf16.mxu0 0
      %1388 = vmatmul.mubr.bf16.gmra.mrb[0].mxu0 %v1230
      %v1389 = vpop.f32.mrb[0].mxu0
      %v1390 = vadd.f32 %v1130, %v1389
      %v1391 = vpop.f32.mrb[0].mxu0
      %v1392 = vpop.f32.mrb[0].mxu0
      %v1393 = vadd.f32 %v1133, %v1392
      %v1394 = vpop.f32.mrb[0].mxu0
      %1395 = vdwg.mxu0
      %s1396 = scalar_lea.vmem %s1, 8
      %v1397 = vld [vmem:[%s1396] sm:$0xf]
      %v1398 = vunpack.c.l.b16 %v694
      %v1399 = vunpack.c.l.b16 %v697
      %v1400 = vunpack.c.l.b16 %v701
      %v1401 = vunpack.c.l.b16 %v704
      %v1402 = vunpack.c.l.b16 %v708
      %v1403 = vunpack.c.l.b16 %v711
      %v1404 = vunpack.c.l.b16 %v715
      %v1405 = vunpack.c.l.b16 %v718
      %v1406 = vunpack.c.l.b16 %v722
      %v1407 = vunpack.c.l.b16 %v725
      %v1408 = vunpack.c.l.b16 %v729
      %v1409 = vunpack.c.l.b16 %v732
      %v1410 = vunpack.c.l.b16 %v736
      %v1411 = vunpack.c.l.b16 %v739
      %v1412 = vunpack.c.l.b16 %v743
      %v1413 = vunpack.c.l.b16 %v746
      %v1414 = vunpack.c.l.b16 %v750
      %v1415 = vunpack.c.l.b16 %v753
      %v1416 = vunpack.c.l.b16 %v757
      %v1417 = vunpack.c.l.b16 %v760
      %v1418 = vunpack.c.l.b16 %v764
      %v1419 = vunpack.c.l.b16 %v767
      %v1420 = vunpack.c.l.b16 %v771
      %v1421 = vunpack.c.l.b16 %v774
      %v1422 = vunpack.c.l.b16 %v778
      %v1423 = vunpack.c.l.b16 %v781
      %v1424 = vunpack.c.l.b16 %v785
      %v1425 = vunpack.c.l.b16 %v788
      %v1426 = vunpack.c.l.b16 %v792
      %v1427 = vunpack.c.l.b16 %v795
      %v1428 = vunpack.c.l.b16 %v799
      %v1429 = vunpack.c.l.b16 %v802
      %v1430 = vpack.c.b16 %v1399, %v1398
      %v1431 = vpack.c.b16 %v1401, %v1400
      %v1432 = vpack.c.b16 %v1403, %v1402
      %v1433 = vpack.c.b16 %v1405, %v1404
      %v1434 = vpack.c.b16 %v1407, %v1406
      %v1435 = vpack.c.b16 %v1409, %v1408
      %v1436 = vpack.c.b16 %v1411, %v1410
      %v1437 = vpack.c.b16 %v1413, %v1412
      %v1438 = vpack.c.b16 %v1415, %v1414
      %v1439 = vpack.c.b16 %v1417, %v1416
      %v1440 = vpack.c.b16 %v1419, %v1418
      %v1441 = vpack.c.b16 %v1421, %v1420
      %v1442 = vpack.c.b16 %v1423, %v1422
      %v1443 = vpack.c.b16 %v1425, %v1424
      %v1444 = vpack.c.b16 %v1427, %v1426
      %v1445 = vpack.c.b16 %v1429, %v1428
      %v1447 = vsel %vm922, %v1430, 0
      %v1450 = vsel %vm922, %v1431, 0
      %v1453 = vsel %vm922, %v1432, 0
      %v1456 = vsel %vm922, %v1433, 0
      %v1459 = vsel %vm922, %v1434, 0
      %v1462 = vsel %vm922, %v1435, 0
      %v1465 = vsel %vm922, %v1436, 0
      %v1468 = vsel %vm922, %v1437, 0
      %v1471 = vsel %vm922, %v1438, 0
      %v1474 = vsel %vm922, %v1439, 0
      %v1477 = vsel %vm922, %v1440, 0
      %v1480 = vsel %vm922, %v1441, 0
      %v1483 = vsel %vm922, %v1442, 0
      %v1486 = vsel %vm922, %v1443, 0
      %v1489 = vsel %vm922, %v1444, 0
      %v1492 = vsel %vm922, %v1445, 0
      %v1495 = vsel %vm971, %v1397, 0
      %1497 = vmatprep.subr.bf16.mxu0 0
      %1498 = vmatpush1.bf16.msra.mxu0 %v1495
      %1499 = vmatprep.subr.bf16.mxu0 0
      %1500 = vmatpush1.bf16.msra.mxu0 0
      %1501 = vmatprep.subr.bf16.mxu0 0
      %1502 = vmatpush1.bf16.msra.mxu0 0
      %1503 = vmatprep.subr.bf16.mxu0 0
      %1504 = vmatpush1.bf16.msra.mxu0 0
      %1505 = vmatprep.subr.bf16.mxu0 0
      %1506 = vmatpush1.bf16.msra.mxu0 0
      %1507 = vmatprep.subr.bf16.mxu0 0
      %1508 = vmatpush1.bf16.msra.mxu0 0
      %1509 = vmatprep.subr.bf16.mxu0 0
      %1510 = vmatpush1.bf16.msra.mxu0 0
      %1511 = vmatprep.subr.bf16.mxu0 0
      %1512 = vmatpush1.bf16.msra.mxu0 0
      %1513 = vmatprep.subr.bf16.mxu0 0
      %1514 = vmatpush1.bf16.msra.mxu0 0
      %1515 = vmatprep.subr.bf16.mxu0 0
      %1516 = vmatpush1.bf16.msra.mxu0 0
      %1517 = vmatprep.subr.bf16.mxu0 0
      %1518 = vmatpush1.bf16.msra.mxu0 0
      %1519 = vmatprep.subr.bf16.mxu0 0
      %1520 = vmatpush1.bf16.msra.mxu0 0
      %1521 = vmatprep.subr.bf16.mxu0 0
      %1522 = vmatpush1.bf16.msra.mxu0 0
      %1523 = vmatprep.subr.bf16.mxu0 0
      %1524 = vmatpush1.bf16.msra.mxu0 0
      %1525 = vmatprep.subr.bf16.mxu0 0
      %1526 = vmatpush1.bf16.msra.mxu0 0
      %1527 = vmatprep.subr.bf16.mxu0 0
      %1528 = vmatpush1.bf16.msra.mxu0 0
      %1529 = vmatprep.mubr.bf16.mxu0 0
      %1530 = vmatmul.mubr.bf16.gmra.mrb[0].mxu0 %v1447
      %v1531 = vpop.f32.mrb[0].mxu0
      %v1532 = vadd.f32 0.0, %v1531
      %v1533 = vpop.f32.mrb[0].mxu0
      %v1534 = vpop.f32.mrb[0].mxu0
      %v1535 = vadd.f32 0.0, %v1534
      %v1536 = vpop.f32.mrb[0].mxu0
      %1537 = vmatprep.mubr.bf16.mxu0 0
      %1538 = vmatmul.mubr.bf16.gmra.mrb[0].mxu0 %v1450
      %v1539 = vpop.f32.mrb[0].mxu0
      %v1540 = vadd.f32 0.0, %v1539
      %v1541 = vpop.f32.mrb[0].mxu0
      %v1542 = vpop.f32.mrb[0].mxu0
      %v1543 = vadd.f32 0.0, %v1542
      %v1544 = vpop.f32.mrb[0].mxu0
      %1545 = vmatprep.mubr.bf16.mxu0 0
      %1546 = vmatmul.mubr.bf16.gmra.mrb[0].mxu0 %v1453
      %v1547 = vpop.f32.mrb[0].mxu0
      %v1548 = vadd.f32 0.0, %v1547
      %v1549 = vpop.f32.mrb[0].mxu0
      %v1550 = vpop.f32.mrb[0].mxu0
      %v1551 = vadd.f32 0.0, %v1550
      %v1552 = vpop.f32.mrb[0].mxu0
      %1553 = vmatprep.mubr.bf16.mxu0 0
      %1554 = vmatmul.mubr.bf16.gmra.mrb[0].mxu0 %v1456
      %v1555 = vpop.f32.mrb[0].mxu0
      %v1556 = vadd.f32 0.0, %v1555
      %v1557 = vpop.f32.mrb[0].mxu0
      %v1558 = vpop.f32.mrb[0].mxu0
      %v1559 = vadd.f32 0.0, %v1558
      %v1560 = vpop.f32.mrb[0].mxu0
      %1561 = vmatprep.mubr.bf16.mxu0 0
      %1562 = vmatmul.mubr.bf16.gmra.mrb[0].mxu0 %v1459
      %v1563 = vpop.f32.mrb[0].mxu0
      %v1564 = vadd.f32 0.0, %v1563
      %v1565 = vpop.f32.mrb[0].mxu0
      %v1566 = vpop.f32.mrb[0].mxu0
      %v1567 = vadd.f32 0.0, %v1566
      %v1568 = vpop.f32.mrb[0].mxu0
      %1569 = vmatprep.mubr.bf16.mxu0 0
      %1570 = vmatmul.mubr.bf16.gmra.mrb[0].mxu0 %v1462
      %v1571 = vpop.f32.mrb[0].mxu0
      %v1572 = vadd.f32 0.0, %v1571
      %v1573 = vpop.f32.mrb[0].mxu0
      %v1574 = vpop.f32.mrb[0].mxu0
      %v1575 = vadd.f32 0.0, %v1574
      %v1576 = vpop.f32.mrb[0].mxu0
      %1577 = vmatprep.mubr.bf16.mxu0 0
      %1578 = vmatmul.mubr.bf16.gmra.mrb[0].mxu0 %v1465
      %v1579 = vpop.f32.mrb[0].mxu0
      %v1580 = vadd.f32 0.0, %v1579
      %v1581 = vpop.f32.mrb[0].mxu0
      %v1582 = vpop.f32.mrb[0].mxu0
      %v1583 = vadd.f32 0.0, %v1582
      %v1584 = vpop.f32.mrb[0].mxu0
      %1585 = vmatprep.mubr.bf16.mxu0 0
      %1586 = vmatmul.mubr.bf16.gmra.mrb[0].mxu0 %v1468
      %v1587 = vpop.f32.mrb[0].mxu0
      %v1588 = vadd.f32 0.0, %v1587
      %v1589 = vpop.f32.mrb[0].mxu0
      %v1590 = vpop.f32.mrb[0].mxu0
      %v1591 = vadd.f32 0.0, %v1590
      %v1592 = vpop.f32.mrb[0].mxu0
      %1593 = vmatprep.mubr.bf16.mxu0 0
      %1594 = vmatmul.mubr.bf16.gmra.mrb[0].mxu0 %v1471
      %v1595 = vpop.f32.mrb[0].mxu0
      %v1596 = vadd.f32 0.0, %v1595
      %v1597 = vpop.f32.mrb[0].mxu0
      %v1598 = vpop.f32.mrb[0].mxu0
      %v1599 = vadd.f32 0.0, %v1598
      %v1600 = vpop.f32.mrb[0].mxu0
      %1601 = vmatprep.mubr.bf16.mxu0 0
      %1602 = vmatmul.mubr.bf16.gmra.mrb[0].mxu0 %v1474
      %v1603 = vpop.f32.mrb[0].mxu0
      %v1604 = vadd.f32 0.0, %v1603
      %v1605 = vpop.f32.mrb[0].mxu0
      %v1606 = vpop.f32.mrb[0].mxu0
      %v1607 = vadd.f32 0.0, %v1606
      %v1608 = vpop.f32.mrb[0].mxu0
      %1609 = vmatprep.mubr.bf16.mxu0 0
      %1610 = vmatmul.mubr.bf16.gmra.mrb[0].mxu0 %v1477
      %v1611 = vpop.f32.mrb[0].mxu0
      %v1612 = vadd.f32 0.0, %v1611
      %v1613 = vpop.f32.mrb[0].mxu0
      %v1614 = vpop.f32.mrb[0].mxu0
      %v1615 = vadd.f32 0.0, %v1614
      %v1616 = vpop.f32.mrb[0].mxu0
      %1617 = vmatprep.mubr.bf16.mxu0 0
      %1618 = vmatmul.mubr.bf16.gmra.mrb[0].mxu0 %v1480
      %v1619 = vpop.f32.mrb[0].mxu0
      %v1620 = vadd.f32 0.0, %v1619
      %v1621 = vpop.f32.mrb[0].mxu0
      %v1622 = vpop.f32.mrb[0].mxu0
      %v1623 = vadd.f32 0.0, %v1622
      %v1624 = vpop.f32.mrb[0].mxu0
      %1625 = vmatprep.mubr.bf16.mxu0 0
      %1626 = vmatmul.mubr.bf16.gmra.mrb[0].mxu0 %v1483
      %v1627 = vpop.f32.mrb[0].mxu0
      %v1628 = vadd.f32 0.0, %v1627
      %v1629 = vpop.f32.mrb[0].mxu0
      %v1630 = vpop.f32.mrb[0].mxu0
      %v1631 = vadd.f32 0.0, %v1630
      %v1632 = vpop.f32.mrb[0].mxu0
      %1633 = vmatprep.mubr.bf16.mxu0 0
      %1634 = vmatmul.mubr.bf16.gmra.mrb[0].mxu0 %v1486
      %v1635 = vpop.f32.mrb[0].mxu0
      %v1636 = vadd.f32 0.0, %v1635
      %v1637 = vpop.f32.mrb[0].mxu0
      %v1638 = vpop.f32.mrb[0].mxu0
      %v1639 = vadd.f32 0.0, %v1638
      %v1640 = vpop.f32.mrb[0].mxu0
      %1641 = vmatprep.mubr.bf16.mxu0 0
      %1642 = vmatmul.mubr.bf16.gmra.mrb[0].mxu0 %v1489
      %v1643 = vpop.f32.mrb[0].mxu0
      %v1644 = vadd.f32 0.0, %v1643
      %v1645 = vpop.f32.mrb[0].mxu0
      %v1646 = vpop.f32.mrb[0].mxu0
      %v1647 = vadd.f32 0.0, %v1646
      %v1648 = vpop.f32.mrb[0].mxu0
      %1649 = vmatprep.mubr.bf16.mxu0 0
      %1650 = vmatmul.mubr.bf16.gmra.mrb[0].mxu0 %v1492
      %v1651 = vpop.f32.mrb[0].mxu0
      %v1652 = vadd.f32 0.0, %v1651
      %v1653 = vpop.f32.mrb[0].mxu0
      %v1654 = vpop.f32.mrb[0].mxu0
      %v1655 = vadd.f32 0.0, %v1654
      %v1656 = vpop.f32.mrb[0].mxu0
      %1657 = vdwg.mxu0
      %v1658 = vadd.f32 %v1270, %v1532
      %v1659 = vadd.f32 %v1273, %v1535
      %v1660 = vadd.f32 %v1278, %v1540
      %v1661 = vadd.f32 %v1281, %v1543
      %v1662 = vadd.f32 %v1286, %v1548
      %v1663 = vadd.f32 %v1289, %v1551
      %v1664 = vadd.f32 %v1294, %v1556
      %v1665 = vadd.f32 %v1297, %v1559
      %v1666 = vadd.f32 %v1302, %v1564
      %v1667 = vadd.f32 %v1305, %v1567
      %v1668 = vadd.f32 %v1310, %v1572
      %v1669 = vadd.f32 %v1313, %v1575
      %v1670 = vadd.f32 %v1318, %v1580
      %v1671 = vadd.f32 %v1321, %v1583
      %v1672 = vadd.f32 %v1326, %v1588
      %v1673 = vadd.f32 %v1329, %v1591
      %v1674 = vadd.f32 %v1334, %v1596
      %v1675 = vadd.f32 %v1337, %v1599
      %v1676 = vadd.f32 %v1342, %v1604
      %v1677 = vadd.f32 %v1345, %v1607
      %v1678 = vadd.f32 %v1350, %v1612
      %v1679 = vadd.f32 %v1353, %v1615
      %v1680 = vadd.f32 %v1358, %v1620
      %v1681 = vadd.f32 %v1361, %v1623
      %v1682 = vadd.f32 %v1366, %v1628
      %v1683 = vadd.f32 %v1369, %v1631
      %v1684 = vadd.f32 %v1374, %v1636
      %v1685 = vadd.f32 %v1377, %v1639
      %v1686 = vadd.f32 %v1382, %v1644
      %v1687 = vadd.f32 %v1385, %v1647
      %v1688 = vadd.f32 %v1390, %v1652
      %v1689 = vadd.f32 %v1393, %v1655
      %s1690 = scalar_lea.vmem %s1, 12
      %v1691 = vld [vmem:[%s1690] sm:$0xf]
      %v1692 = vunpack.c.l.b16 %v247
      %v1693 = vunpack.c.l.b16 %v248
      %v1694 = vpack.c.b16 %v1693, %v1692
      %v1696 = vsel %vm922, %v1694, 0
      %v1699 = vsel %vm971, %v1691, 0
      %1701 = vmatprep.subr.bf16.mxu0 0
      %1702 = vmatpush1.bf16.msra.mxu0 %v1699
      %1703 = vmatprep.subr.bf16.mxu0 0
      %1704 = vmatpush1.bf16.msra.mxu0 0
      %1705 = vmatprep.subr.bf16.mxu0 0
      %1706 = vmatpush1.bf16.msra.mxu0 0
      %1707 = vmatprep.subr.bf16.mxu0 0
      %1708 = vmatpush1.bf16.msra.mxu0 0
      %1709 = vmatprep.subr.bf16.mxu0 0
      %1710 = vmatpush1.bf16.msra.mxu0 0
      %1711 = vmatprep.subr.bf16.mxu0 0
      %1712 = vmatpush1.bf16.msra.mxu0 0
      %1713 = vmatprep.subr.bf16.mxu0 0
      %1714 = vmatpush1.bf16.msra.mxu0 0
      %1715 = vmatprep.subr.bf16.mxu0 0
      %1716 = vmatpush1.bf16.msra.mxu0 0
      %1717 = vmatprep.subr.bf16.mxu0 0
      %1718 = vmatpush1.bf16.msra.mxu0 0
      %1719 = vmatprep.subr.bf16.mxu0 0
      %1720 = vmatpush1.bf16.msra.mxu0 0
      %1721 = vmatprep.subr.bf16.mxu0 0
      %1722 = vmatpush1.bf16.msra.mxu0 0
      %1723 = vmatprep.subr.bf16.mxu0 0
      %1724 = vmatpush1.bf16.msra.mxu0 0
      %1725 = vmatprep.subr.bf16.mxu0 0
      %1726 = vmatpush1.bf16.msra.mxu0 0
      %1727 = vmatprep.subr.bf16.mxu0 0
      %1728 = vmatpush1.bf16.msra.mxu0 0
      %1729 = vmatprep.subr.bf16.mxu0 0
      %1730 = vmatpush1.bf16.msra.mxu0 0
      %1731 = vmatprep.subr.bf16.mxu0 0
      %1732 = vmatpush1.bf16.msra.mxu0 0
      %1733 = vmatprep.mubr.bf16.mxu0 0
      %1734 = vmatmul.mubr.bf16.gmra.mrb[0].mxu0 %v1188
      %v1735 = vpop.f32.mrb[0].mxu0
      %v1736 = vadd.f32 0.0, %v1735
      %v1737 = vpop.f32.mrb[0].mxu0
      %v1738 = vpop.f32.mrb[0].mxu0
      %v1739 = vadd.f32 0.0, %v1738
      %v1740 = vpop.f32.mrb[0].mxu0
      %1741 = vmatprep.mubr.bf16.mxu0 0
      %1742 = vmatmul.mubr.bf16.gmra.mrb[0].mxu0 %v1191
      %v1743 = vpop.f32.mrb[0].mxu0
      %v1744 = vadd.f32 0.0, %v1743
      %v1745 = vpop.f32.mrb[0].mxu0
      %v1746 = vpop.f32.mrb[0].mxu0
      %v1747 = vadd.f32 0.0, %v1746
      %v1748 = vpop.f32.mrb[0].mxu0
      %1749 = vmatprep.mubr.bf16.mxu0 0
      %1750 = vmatmul.mubr.bf16.gmra.mrb[0].mxu0 %v1194
      %v1751 = vpop.f32.mrb[0].mxu0
      %v1752 = vadd.f32 0.0, %v1751
      %v1753 = vpop.f32.mrb[0].mxu0
      %v1754 = vpop.f32.mrb[0].mxu0
      %v1755 = vadd.f32 0.0, %v1754
      %v1756 = vpop.f32.mrb[0].mxu0
      %1757 = vmatprep.mubr.bf16.mxu0 0
      %1758 = vmatmul.mubr.bf16.gmra.mrb[0].mxu0 %v1197
      %v1759 = vpop.f32.mrb[0].mxu0
      %v1760 = vadd.f32 0.0, %v1759
      %v1761 = vpop.f32.mrb[0].mxu0
      %v1762 = vpop.f32.mrb[0].mxu0
      %v1763 = vadd.f32 0.0, %v1762
      %v1764 = vpop.f32.mrb[0].mxu0
      %1765 = vmatprep.mubr.bf16.mxu0 0
      %1766 = vmatmul.mubr.bf16.gmra.mrb[0].mxu0 %v1200
      %v1767 = vpop.f32.mrb[0].mxu0
      %v1768 = vadd.f32 0.0, %v1767
      %v1769 = vpop.f32.mrb[0].mxu0
      %v1770 = vpop.f32.mrb[0].mxu0
      %v1771 = vadd.f32 0.0, %v1770
      %v1772 = vpop.f32.mrb[0].mxu0
      %1773 = vmatprep.mubr.bf16.mxu0 0
      %1774 = vmatmul.mubr.bf16.gmra.mrb[0].mxu0 %v1203
      %v1775 = vpop.f32.mrb[0].mxu0
      %v1776 = vadd.f32 0.0, %v1775
      %v1777 = vpop.f32.mrb[0].mxu0
      %v1778 = vpop.f32.mrb[0].mxu0
      %v1779 = vadd.f32 0.0, %v1778
      %v1780 = vpop.f32.mrb[0].mxu0
      %1781 = vmatprep.mubr.bf16.mxu0 0
      %1782 = vmatmul.mubr.bf16.gmra.mrb[0].mxu0 %v1206
      %v1783 = vpop.f32.mrb[0].mxu0
      %v1784 = vadd.f32 0.0, %v1783
      %v1785 = vpop.f32.mrb[0].mxu0
      %v1786 = vpop.f32.mrb[0].mxu0
      %v1787 = vadd.f32 0.0, %v1786
      %v1788 = vpop.f32.mrb[0].mxu0
      %1789 = vmatprep.mubr.bf16.mxu0 0
      %1790 = vmatmul.mubr.bf16.gmra.mrb[0].mxu0 %v1209
      %v1791 = vpop.f32.mrb[0].mxu0
      %v1792 = vadd.f32 0.0, %v1791
      %v1793 = vpop.f32.mrb[0].mxu0
      %v1794 = vpop.f32.mrb[0].mxu0
      %v1795 = vadd.f32 0.0, %v1794
      %v1796 = vpop.f32.mrb[0].mxu0
      %1797 = vmatprep.mubr.bf16.mxu0 0
      %1798 = vmatmul.mubr.bf16.gmra.mrb[0].mxu0 %v1212
      %v1799 = vpop.f32.mrb[0].mxu0
      %v1800 = vadd.f32 0.0, %v1799
      %v1801 = vpop.f32.mrb[0].mxu0
      %v1802 = vpop.f32.mrb[0].mxu0
      %v1803 = vadd.f32 0.0, %v1802
      %v1804 = vpop.f32.mrb[0].mxu0
      %1805 = vmatprep.mubr.bf16.mxu0 0
      %1806 = vmatmul.mubr.bf16.gmra.mrb[0].mxu0 %v1215
      %v1807 = vpop.f32.mrb[0].mxu0
      %v1808 = vadd.f32 0.0, %v1807
      %v1809 = vpop.f32.mrb[0].mxu0
      %v1810 = vpop.f32.mrb[0].mxu0
      %v1811 = vadd.f32 0.0, %v1810
      %v1812 = vpop.f32.mrb[0].mxu0
      %1813 = vmatprep.mubr.bf16.mxu0 0
      %1814 = vmatmul.mubr.bf16.gmra.mrb[0].mxu0 %v1218
      %v1815 = vpop.f32.mrb[0].mxu0
      %v1816 = vadd.f32 0.0, %v1815
      %v1817 = vpop.f32.mrb[0].mxu0
      %v1818 = vpop.f32.mrb[0].mxu0
      %v1819 = vadd.f32 0.0, %v1818
      %v1820 = vpop.f32.mrb[0].mxu0
      %1821 = vmatprep.mubr.bf16.mxu0 0
      %1822 = vmatmul.mubr.bf16.gmra.mrb[0].mxu0 %v1221
      %v1823 = vpop.f32.mrb[0].mxu0
      %v1824 = vadd.f32 0.0, %v1823
      %v1825 = vpop.f32.mrb[0].mxu0
      %v1826 = vpop.f32.mrb[0].mxu0
      %v1827 = vadd.f32 0.0, %v1826
      %v1828 = vpop.f32.mrb[0].mxu0
      %1829 = vmatprep.mubr.bf16.mxu0 0
      %1830 = vmatmul.mubr.bf16.gmra.mrb[0].mxu0 %v1224
      %v1831 = vpop.f32.mrb[0].mxu0
      %v1832 = vadd.f32 0.0, %v1831
      %v1833 = vpop.f32.mrb[0].mxu0
      %v1834 = vpop.f32.mrb[0].mxu0
      %v1835 = vadd.f32 0.0, %v1834
      %v1836 = vpop.f32.mrb[0].mxu0
      %1837 = vmatprep.mubr.bf16.mxu0 0
      %1838 = vmatmul.mubr.bf16.gmra.mrb[0].mxu0 %v1227
      %v1839 = vpop.f32.mrb[0].mxu0
      %v1840 = vadd.f32 0.0, %v1839
      %v1841 = vpop.f32.mrb[0].mxu0
      %v1842 = vpop.f32.mrb[0].mxu0
      %v1843 = vadd.f32 0.0, %v1842
      %v1844 = vpop.f32.mrb[0].mxu0
      %1845 = vmatprep.mubr.bf16.mxu0 0
      %1846 = vmatmul.mubr.bf16.gmra.mrb[0].mxu0 %v1230
      %v1847 = vpop.f32.mrb[0].mxu0
      %v1848 = vadd.f32 0.0, %v1847
      %v1849 = vpop.f32.mrb[0].mxu0
      %v1850 = vpop.f32.mrb[0].mxu0
      %v1851 = vadd.f32 0.0, %v1850
      %v1852 = vpop.f32.mrb[0].mxu0
      %1853 = vmatprep.mubr.bf16.mxu0 0
      %1854 = vmatmul.mubr.bf16.gmra.mrb[0].mxu0 %v1696
      %v1855 = vpop.f32.mrb[0].mxu0
      %v1856 = vadd.f32 0.0, %v1855
      %v1857 = vpop.f32.mrb[0].mxu0
      %v1858 = vpop.f32.mrb[0].mxu0
      %v1859 = vadd.f32 0.0, %v1858
      %v1860 = vpop.f32.mrb[0].mxu0
      %1861 = vdwg.mxu0
      %v1862 = vadd.f32 %v1658, %v1736
      %v1863 = vadd.f32 %v1659, %v1739
      %v1864 = vadd.f32 %v1660, %v1744
      %v1865 = vadd.f32 %v1661, %v1747
      %v1866 = vadd.f32 %v1662, %v1752
      %v1867 = vadd.f32 %v1663, %v1755
      %v1868 = vadd.f32 %v1664, %v1760
      %v1869 = vadd.f32 %v1665, %v1763
      %v1870 = vadd.f32 %v1666, %v1768
      %v1871 = vadd.f32 %v1667, %v1771
      %v1872 = vadd.f32 %v1668, %v1776
      %v1873 = vadd.f32 %v1669, %v1779
      %v1874 = vadd.f32 %v1670, %v1784
      %v1875 = vadd.f32 %v1671, %v1787
      %v1876 = vadd.f32 %v1672, %v1792
      %v1877 = vadd.f32 %v1673, %v1795
      %v1878 = vadd.f32 %v1674, %v1800
      %v1879 = vadd.f32 %v1675, %v1803
      %v1880 = vadd.f32 %v1676, %v1808
      %v1881 = vadd.f32 %v1677, %v1811
      %v1882 = vadd.f32 %v1678, %v1816
      %v1883 = vadd.f32 %v1679, %v1819
      %v1884 = vadd.f32 %v1680, %v1824
      %v1885 = vadd.f32 %v1681, %v1827
      %v1886 = vadd.f32 %v1682, %v1832
      %v1887 = vadd.f32 %v1683, %v1835
      %v1888 = vadd.f32 %v1684, %v1840
      %v1889 = vadd.f32 %v1685, %v1843
      %v1890 = vadd.f32 %v1686, %v1848
      %v1891 = vadd.f32 %v1687, %v1851
      %v1892 = vadd.f32 %v1688, %v1856
      %v1893 = vadd.f32 %v1689, %v1859
      %s1894 = scalar_lea.vmem %s1, 16
      %v1895 = vld [vmem:[%s1894] sm:$0xf]
      %v1896 = vunpack.c.l.b16 %v816
      %v1897 = vunpack.c.l.b16 %v826
      %v1898 = vpack.c.b16 %v1897, %v1896
      %v1900 = vsel %vm922, %v1898, 0
      %v1903 = vsel %vm971, %v1895, 0
      %1905 = vmatprep.subr.bf16.mxu0 0
      %1906 = vmatpush1.bf16.msra.mxu0 %v1903
      %1907 = vmatprep.subr.bf16.mxu0 0
      %1908 = vmatpush1.bf16.msra.mxu0 0
      %1909 = vmatprep.subr.bf16.mxu0 0
      %1910 = vmatpush1.bf16.msra.mxu0 0
      %1911 = vmatprep.subr.bf16.mxu0 0
      %1912 = vmatpush1.bf16.msra.mxu0 0
      %1913 = vmatprep.subr.bf16.mxu0 0
      %1914 = vmatpush1.bf16.msra.mxu0 0
      %1915 = vmatprep.subr.bf16.mxu0 0
      %1916 = vmatpush1.bf16.msra.mxu0 0
      %1917 = vmatprep.subr.bf16.mxu0 0
      %1918 = vmatpush1.bf16.msra.mxu0 0
      %1919 = vmatprep.subr.bf16.mxu0 0
      %1920 = vmatpush1.bf16.msra.mxu0 0
      %1921 = vmatprep.subr.bf16.mxu0 0
      %1922 = vmatpush1.bf16.msra.mxu0 0
      %1923 = vmatprep.subr.bf16.mxu0 0
      %1924 = vmatpush1.bf16.msra.mxu0 0
      %1925 = vmatprep.subr.bf16.mxu0 0
      %1926 = vmatpush1.bf16.msra.mxu0 0
      %1927 = vmatprep.subr.bf16.mxu0 0
      %1928 = vmatpush1.bf16.msra.mxu0 0
      %1929 = vmatprep.subr.bf16.mxu0 0
      %1930 = vmatpush1.bf16.msra.mxu0 0
      %1931 = vmatprep.subr.bf16.mxu0 0
      %1932 = vmatpush1.bf16.msra.mxu0 0
      %1933 = vmatprep.subr.bf16.mxu0 0
      %1934 = vmatpush1.bf16.msra.mxu0 0
      %1935 = vmatprep.subr.bf16.mxu0 0
      %1936 = vmatpush1.bf16.msra.mxu0 0
      %1937 = vmatprep.mubr.bf16.mxu0 0
      %1938 = vmatmul.mubr.bf16.gmra.mrb[0].mxu0 %v927
      %v1939 = vpop.f32.mrb[0].mxu0
      %v1940 = vadd.f32 0.0, %v1939
      %v1941 = vpop.f32.mrb[0].mxu0
      %v1942 = vpop.f32.mrb[0].mxu0
      %v1943 = vadd.f32 0.0, %v1942
      %v1944 = vpop.f32.mrb[0].mxu0
      %1945 = vmatprep.mubr.bf16.mxu0 0
      %1946 = vmatmul.mubr.bf16.gmra.mrb[0].mxu0 %v930
      %v1947 = vpop.f32.mrb[0].mxu0
      %v1948 = vadd.f32 0.0, %v1947
      %v1949 = vpop.f32.mrb[0].mxu0
      %v1950 = vpop.f32.mrb[0].mxu0
      %v1951 = vadd.f32 0.0, %v1950
      %v1952 = vpop.f32.mrb[0].mxu0
      %1953 = vmatprep.mubr.bf16.mxu0 0
      %1954 = vmatmul.mubr.bf16.gmra.mrb[0].mxu0 %v933
      %v1955 = vpop.f32.mrb[0].mxu0
      %v1956 = vadd.f32 0.0, %v1955
      %v1957 = vpop.f32.mrb[0].mxu0
      %v1958 = vpop.f32.mrb[0].mxu0
      %v1959 = vadd.f32 0.0, %v1958
      %v1960 = vpop.f32.mrb[0].mxu0
      %1961 = vmatprep.mubr.bf16.mxu0 0
      %1962 = vmatmul.mubr.bf16.gmra.mrb[0].mxu0 %v936
      %v1963 = vpop.f32.mrb[0].mxu0
      %v1964 = vadd.f32 0.0, %v1963
      %v1965 = vpop.f32.mrb[0].mxu0
      %v1966 = vpop.f32.mrb[0].mxu0
      %v1967 = vadd.f32 0.0, %v1966
      %v1968 = vpop.f32.mrb[0].mxu0
      %1969 = vmatprep.mubr.bf16.mxu0 0
      %1970 = vmatmul.mubr.bf16.gmra.mrb[0].mxu0 %v939
      %v1971 = vpop.f32.mrb[0].mxu0
      %v1972 = vadd.f32 0.0, %v1971
      %v1973 = vpop.f32.mrb[0].mxu0
      %v1974 = vpop.f32.mrb[0].mxu0
      %v1975 = vadd.f32 0.0, %v1974
      %v1976 = vpop.f32.mrb[0].mxu0
      %1977 = vmatprep.mubr.bf16.mxu0 0
      %1978 = vmatmul.mubr.bf16.gmra.mrb[0].mxu0 %v942
      %v1979 = vpop.f32.mrb[0].mxu0
      %v1980 = vadd.f32 0.0, %v1979
      %v1981 = vpop.f32.mrb[0].mxu0
      %v1982 = vpop.f32.mrb[0].mxu0
      %v1983 = vadd.f32 0.0, %v1982
      %v1984 = vpop.f32.mrb[0].mxu0
      %1985 = vmatprep.mubr.bf16.mxu0 0
      %1986 = vmatmul.mubr.bf16.gmra.mrb[0].mxu0 %v945
      %v1987 = vpop.f32.mrb[0].mxu0
      %v1988 = vadd.f32 0.0, %v1987
      %v1989 = vpop.f32.mrb[0].mxu0
      %v1990 = vpop.f32.mrb[0].mxu0
      %v1991 = vadd.f32 0.0, %v1990
      %v1992 = vpop.f32.mrb[0].mxu0
      %1993 = vmatprep.mubr.bf16.mxu0 0
      %1994 = vmatmul.mubr.bf16.gmra.mrb[0].mxu0 %v948
      %v1995 = vpop.f32.mrb[0].mxu0
      %v1996 = vadd.f32 0.0, %v1995
      %v1997 = vpop.f32.mrb[0].mxu0
      %v1998 = vpop.f32.mrb[0].mxu0
      %v1999 = vadd.f32 0.0, %v1998
      %v2000 = vpop.f32.mrb[0].mxu0
      %2001 = vmatprep.mubr.bf16.mxu0 0
      %2002 = vmatmul.mubr.bf16.gmra.mrb[0].mxu0 %v951
      %v2003 = vpop.f32.mrb[0].mxu0
      %v2004 = vadd.f32 0.0, %v2003
      %v2005 = vpop.f32.mrb[0].mxu0
      %v2006 = vpop.f32.mrb[0].mxu0
      %v2007 = vadd.f32 0.0, %v2006
      %v2008 = vpop.f32.mrb[0].mxu0
      %2009 = vmatprep.mubr.bf16.mxu0 0
      %2010 = vmatmul.mubr.bf16.gmra.mrb[0].mxu0 %v954
      %v2011 = vpop.f32.mrb[0].mxu0
      %v2012 = vadd.f32 0.0, %v2011
      %v2013 = vpop.f32.mrb[0].mxu0
      %v2014 = vpop.f32.mrb[0].mxu0
      %v2015 = vadd.f32 0.0, %v2014
      %v2016 = vpop.f32.mrb[0].mxu0
      %2017 = vmatprep.mubr.bf16.mxu0 0
      %2018 = vmatmul.mubr.bf16.gmra.mrb[0].mxu0 %v957
      %v2019 = vpop.f32.mrb[0].mxu0
      %v2020 = vadd.f32 0.0, %v2019
      %v2021 = vpop.f32.mrb[0].mxu0
      %v2022 = vpop.f32.mrb[0].mxu0
      %v2023 = vadd.f32 0.0, %v2022
      %v2024 = vpop.f32.mrb[0].mxu0
      %2025 = vmatprep.mubr.bf16.mxu0 0
      %2026 = vmatmul.mubr.bf16.gmra.mrb[0].mxu0 %v960
      %v2027 = vpop.f32.mrb[0].mxu0
      %v2028 = vadd.f32 0.0, %v2027
      %v2029 = vpop.f32.mrb[0].mxu0
      %v2030 = vpop.f32.mrb[0].mxu0
      %v2031 = vadd.f32 0.0, %v2030
      %v2032 = vpop.f32.mrb[0].mxu0
      %2033 = vmatprep.mubr.bf16.mxu0 0
      %2034 = vmatmul.mubr.bf16.gmra.mrb[0].mxu0 %v963
      %v2035 = vpop.f32.mrb[0].mxu0
      %v2036 = vadd.f32 0.0, %v2035
      %v2037 = vpop.f32.mrb[0].mxu0
      %v2038 = vpop.f32.mrb[0].mxu0
      %v2039 = vadd.f32 0.0, %v2038
      %v2040 = vpop.f32.mrb[0].mxu0
      %2041 = vmatprep.mubr.bf16.mxu0 0
      %2042 = vmatmul.mubr.bf16.gmra.mrb[0].mxu0 %v966
      %v2043 = vpop.f32.mrb[0].mxu0
      %v2044 = vadd.f32 0.0, %v2043
      %v2045 = vpop.f32.mrb[0].mxu0
      %v2046 = vpop.f32.mrb[0].mxu0
      %v2047 = vadd.f32 0.0, %v2046
      %v2048 = vpop.f32.mrb[0].mxu0
      %2049 = vmatprep.mubr.bf16.mxu0 0
      %2050 = vmatmul.mubr.bf16.gmra.mrb[0].mxu0 %v969
      %v2051 = vpop.f32.mrb[0].mxu0
      %v2052 = vadd.f32 0.0, %v2051
      %v2053 = vpop.f32.mrb[0].mxu0
      %v2054 = vpop.f32.mrb[0].mxu0
      %v2055 = vadd.f32 0.0, %v2054
      %v2056 = vpop.f32.mrb[0].mxu0
      %2057 = vmatprep.mubr.bf16.mxu0 0
      %2058 = vmatmul.mubr.bf16.gmra.mrb[0].mxu0 %v1900
      %v2059 = vpop.f32.mrb[0].mxu0
      %v2060 = vadd.f32 0.0, %v2059
      %v2061 = vpop.f32.mrb[0].mxu0
      %v2062 = vpop.f32.mrb[0].mxu0
      %v2063 = vadd.f32 0.0, %v2062
      %v2064 = vpop.f32.mrb[0].mxu0
      %2065 = vdwg.mxu0
      %v2066 = vadd.f32 %v1862, %v1940
      %v2067 = vadd.f32 %v1863, %v1943
      %v2068 = vadd.f32 %v1864, %v1948
      %v2069 = vadd.f32 %v1865, %v1951
      %v2070 = vadd.f32 %v1866, %v1956
      %v2071 = vadd.f32 %v1867, %v1959
      %v2072 = vadd.f32 %v1868, %v1964
      %v2073 = vadd.f32 %v1869, %v1967
      %v2074 = vadd.f32 %v1870, %v1972
      %v2075 = vadd.f32 %v1871, %v1975
      %v2076 = vadd.f32 %v1872, %v1980
      %v2077 = vadd.f32 %v1873, %v1983
      %v2078 = vadd.f32 %v1874, %v1988
      %v2079 = vadd.f32 %v1875, %v1991
      %v2080 = vadd.f32 %v1876, %v1996
      %v2081 = vadd.f32 %v1877, %v1999
      %v2082 = vadd.f32 %v1878, %v2004
      %v2083 = vadd.f32 %v1879, %v2007
      %v2084 = vadd.f32 %v1880, %v2012
      %v2085 = vadd.f32 %v1881, %v2015
      %v2086 = vadd.f32 %v1882, %v2020
      %v2087 = vadd.f32 %v1883, %v2023
      %v2088 = vadd.f32 %v1884, %v2028
      %v2089 = vadd.f32 %v1885, %v2031
      %v2090 = vadd.f32 %v1886, %v2036
      %v2091 = vadd.f32 %v1887, %v2039
      %v2092 = vadd.f32 %v1888, %v2044
      %v2093 = vadd.f32 %v1889, %v2047
      %v2094 = vadd.f32 %v1890, %v2052
      %v2095 = vadd.f32 %v1891, %v2055
      %v2096 = vadd.f32 %v1892, %v2060
      %v2097 = vadd.f32 %v1893, %v2063
      %s2098 = scalar_lea.vmem %s1, 20
      %v2099 = vld [vmem:[%s2098] sm:$0xf]
      %v2100 = vunpack.c.l.b16 %v833
      %v2101 = vunpack.c.l.b16 %v836
      %v2102 = vpack.c.b16 %v2101, %v2100
      %v2104 = vsel %vm922, %v2102, 0
      %v2107 = vsel %vm971, %v2099, 0
      %2109 = vmatprep.subr.bf16.mxu0 0
      %2110 = vmatpush1.bf16.msra.mxu0 %v2107
      %2111 = vmatprep.subr.bf16.mxu0 0
      %2112 = vmatpush1.bf16.msra.mxu0 0
      %2113 = vmatprep.subr.bf16.mxu0 0
      %2114 = vmatpush1.bf16.msra.mxu0 0
      %2115 = vmatprep.subr.bf16.mxu0 0
      %2116 = vmatpush1.bf16.msra.mxu0 0
      %2117 = vmatprep.subr.bf16.mxu0 0
      %2118 = vmatpush1.bf16.msra.mxu0 0
      %2119 = vmatprep.subr.bf16.mxu0 0
      %2120 = vmatpush1.bf16.msra.mxu0 0
      %2121 = vmatprep.subr.bf16.mxu0 0
      %2122 = vmatpush1.bf16.msra.mxu0 0
      %2123 = vmatprep.subr.bf16.mxu0 0
      %2124 = vmatpush1.bf16.msra.mxu0 0
      %2125 = vmatprep.subr.bf16.mxu0 0
      %2126 = vmatpush1.bf16.msra.mxu0 0
      %2127 = vmatprep.subr.bf16.mxu0 0
      %2128 = vmatpush1.bf16.msra.mxu0 0
      %2129 = vmatprep.subr.bf16.mxu0 0
      %2130 = vmatpush1.bf16.msra.mxu0 0
      %2131 = vmatprep.subr.bf16.mxu0 0
      %2132 = vmatpush1.bf16.msra.mxu0 0
      %2133 = vmatprep.subr.bf16.mxu0 0
      %2134 = vmatpush1.bf16.msra.mxu0 0
      %2135 = vmatprep.subr.bf16.mxu0 0
      %2136 = vmatpush1.bf16.msra.mxu0 0
      %2137 = vmatprep.subr.bf16.mxu0 0
      %2138 = vmatpush1.bf16.msra.mxu0 0
      %2139 = vmatprep.subr.bf16.mxu0 0
      %2140 = vmatpush1.bf16.msra.mxu0 0
      %2141 = vmatprep.mubr.bf16.mxu0 0
      %2142 = vmatmul.mubr.bf16.gmra.mrb[0].mxu0 %v1450
      %v2143 = vpop.f32.mrb[0].mxu0
      %v2144 = vadd.f32 0.0, %v2143
      %v2145 = vpop.f32.mrb[0].mxu0
      %v2146 = vpop.f32.mrb[0].mxu0
      %v2147 = vadd.f32 0.0, %v2146
      %v2148 = vpop.f32.mrb[0].mxu0
      %2149 = vmatprep.mubr.bf16.mxu0 0
      %2150 = vmatmul.mubr.bf16.gmra.mrb[0].mxu0 %v1453
      %v2151 = vpop.f32.mrb[0].mxu0
      %v2152 = vadd.f32 0.0, %v2151
      %v2153 = vpop.f32.mrb[0].mxu0
      %v2154 = vpop.f32.mrb[0].mxu0
      %v2155 = vadd.f32 0.0, %v2154
      %v2156 = vpop.f32.mrb[0].mxu0
      %2157 = vmatprep.mubr.bf16.mxu0 0
      %2158 = vmatmul.mubr.bf16.gmra.mrb[0].mxu0 %v1456
      %v2159 = vpop.f32.mrb[0].mxu0
      %v2160 = vadd.f32 0.0, %v2159
      %v2161 = vpop.f32.mrb[0].mxu0
      %v2162 = vpop.f32.mrb[0].mxu0
      %v2163 = vadd.f32 0.0, %v2162
      %v2164 = vpop.f32.mrb[0].mxu0
      %2165 = vmatprep.mubr.bf16.mxu0 0
      %2166 = vmatmul.mubr.bf16.gmra.mrb[0].mxu0 %v1459
      %v2167 = vpop.f32.mrb[0].mxu0
      %v2168 = vadd.f32 0.0, %v2167
      %v2169 = vpop.f32.mrb[0].mxu0
      %v2170 = vpop.f32.mrb[0].mxu0
      %v2171 = vadd.f32 0.0, %v2170
      %v2172 = vpop.f32.mrb[0].mxu0
      %2173 = vmatprep.mubr.bf16.mxu0 0
      %2174 = vmatmul.mubr.bf16.gmra.mrb[0].mxu0 %v1462
      %v2175 = vpop.f32.mrb[0].mxu0
      %v2176 = vadd.f32 0.0, %v2175
      %v2177 = vpop.f32.mrb[0].mxu0
      %v2178 = vpop.f32.mrb[0].mxu0
      %v2179 = vadd.f32 0.0, %v2178
      %v2180 = vpop.f32.mrb[0].mxu0
      %2181 = vmatprep.mubr.bf16.mxu0 0
      %2182 = vmatmul.mubr.bf16.gmra.mrb[0].mxu0 %v1465
      %v2183 = vpop.f32.mrb[0].mxu0
      %v2184 = vadd.f32 0.0, %v2183
      %v2185 = vpop.f32.mrb[0].mxu0
      %v2186 = vpop.f32.mrb[0].mxu0
      %v2187 = vadd.f32 0.0, %v2186
      %v2188 = vpop.f32.mrb[0].mxu0
      %2189 = vmatprep.mubr.bf16.mxu0 0
      %2190 = vmatmul.mubr.bf16.gmra.mrb[0].mxu0 %v1468
      %v2191 = vpop.f32.mrb[0].mxu0
      %v2192 = vadd.f32 0.0, %v2191
      %v2193 = vpop.f32.mrb[0].mxu0
      %v2194 = vpop.f32.mrb[0].mxu0
      %v2195 = vadd.f32 0.0, %v2194
      %v2196 = vpop.f32.mrb[0].mxu0
      %2197 = vmatprep.mubr.bf16.mxu0 0
      %2198 = vmatmul.mubr.bf16.gmra.mrb[0].mxu0 %v1471
      %v2199 = vpop.f32.mrb[0].mxu0
      %v2200 = vadd.f32 0.0, %v2199
      %v2201 = vpop.f32.mrb[0].mxu0
      %v2202 = vpop.f32.mrb[0].mxu0
      %v2203 = vadd.f32 0.0, %v2202
      %v2204 = vpop.f32.mrb[0].mxu0
      %2205 = vmatprep.mubr.bf16.mxu0 0
      %2206 = vmatmul.mubr.bf16.gmra.mrb[0].mxu0 %v1474
      %v2207 = vpop.f32.mrb[0].mxu0
      %v2208 = vadd.f32 0.0, %v2207
      %v2209 = vpop.f32.mrb[0].mxu0
      %v2210 = vpop.f32.mrb[0].mxu0
      %v2211 = vadd.f32 0.0, %v2210
      %v2212 = vpop.f32.mrb[0].mxu0
      %2213 = vmatprep.mubr.bf16.mxu0 0
      %2214 = vmatmul.mubr.bf16.gmra.mrb[0].mxu0 %v1477
      %v2215 = vpop.f32.mrb[0].mxu0
      %v2216 = vadd.f32 0.0, %v2215
      %v2217 = vpop.f32.mrb[0].mxu0
      %v2218 = vpop.f32.mrb[0].mxu0
      %v2219 = vadd.f32 0.0, %v2218
      %v2220 = vpop.f32.mrb[0].mxu0
      %2221 = vmatprep.mubr.bf16.mxu0 0
      %2222 = vmatmul.mubr.bf16.gmra.mrb[0].mxu0 %v1480
      %v2223 = vpop.f32.mrb[0].mxu0
      %v2224 = vadd.f32 0.0, %v2223
      %v2225 = vpop.f32.mrb[0].mxu0
      %v2226 = vpop.f32.mrb[0].mxu0
      %v2227 = vadd.f32 0.0, %v2226
      %v2228 = vpop.f32.mrb[0].mxu0
      %2229 = vmatprep.mubr.bf16.mxu0 0
      %2230 = vmatmul.mubr.bf16.gmra.mrb[0].mxu0 %v1483
      %v2231 = vpop.f32.mrb[0].mxu0
      %v2232 = vadd.f32 0.0, %v2231
      %v2233 = vpop.f32.mrb[0].mxu0
      %v2234 = vpop.f32.mrb[0].mxu0
      %v2235 = vadd.f32 0.0, %v2234
      %v2236 = vpop.f32.mrb[0].mxu0
      %2237 = vmatprep.mubr.bf16.mxu0 0
      %2238 = vmatmul.mubr.bf16.gmra.mrb[0].mxu0 %v1486
      %v2239 = vpop.f32.mrb[0].mxu0
      %v2240 = vadd.f32 0.0, %v2239
      %v2241 = vpop.f32.mrb[0].mxu0
      %v2242 = vpop.f32.mrb[0].mxu0
      %v2243 = vadd.f32 0.0, %v2242
      %v2244 = vpop.f32.mrb[0].mxu0
      %2245 = vmatprep.mubr.bf16.mxu0 0
      %2246 = vmatmul.mubr.bf16.gmra.mrb[0].mxu0 %v1489
      %v2247 = vpop.f32.mrb[0].mxu0
      %v2248 = vadd.f32 0.0, %v2247
      %v2249 = vpop.f32.mrb[0].mxu0
      %v2250 = vpop.f32.mrb[0].mxu0
      %v2251 = vadd.f32 0.0, %v2250
      %v2252 = vpop.f32.mrb[0].mxu0
      %2253 = vmatprep.mubr.bf16.mxu0 0
      %2254 = vmatmul.mubr.bf16.gmra.mrb[0].mxu0 %v1492
      %v2255 = vpop.f32.mrb[0].mxu0
      %v2256 = vadd.f32 0.0, %v2255
      %v2257 = vpop.f32.mrb[0].mxu0
      %v2258 = vpop.f32.mrb[0].mxu0
      %v2259 = vadd.f32 0.0, %v2258
      %v2260 = vpop.f32.mrb[0].mxu0
      %2261 = vmatprep.mubr.bf16.mxu0 0
      %2262 = vmatmul.mubr.bf16.gmra.mrb[0].mxu0 %v2104
      %v2263 = vpop.f32.mrb[0].mxu0
      %v2264 = vadd.f32 0.0, %v2263
      %v2265 = vpop.f32.mrb[0].mxu0
      %v2266 = vpop.f32.mrb[0].mxu0
      %v2267 = vadd.f32 0.0, %v2266
      %v2268 = vpop.f32.mrb[0].mxu0
      %2269 = vdwg.mxu0
      %v2270 = vadd.f32 %v2066, %v2144
      %v2271 = vadd.f32 %v2067, %v2147
      %v2272 = vadd.f32 %v2068, %v2152
      %v2273 = vadd.f32 %v2069, %v2155
      %v2274 = vadd.f32 %v2070, %v2160
      %v2275 = vadd.f32 %v2071, %v2163
      %v2276 = vadd.f32 %v2072, %v2168
      %v2277 = vadd.f32 %v2073, %v2171
      %v2278 = vadd.f32 %v2074, %v2176
      %v2279 = vadd.f32 %v2075, %v2179
      %v2280 = vadd.f32 %v2076, %v2184
      %v2281 = vadd.f32 %v2077, %v2187
      %v2282 = vadd.f32 %v2078, %v2192
      %v2283 = vadd.f32 %v2079, %v2195
      %v2284 = vadd.f32 %v2080, %v2200
      %v2285 = vadd.f32 %v2081, %v2203
      %v2286 = vadd.f32 %v2082, %v2208
      %v2287 = vadd.f32 %v2083, %v2211
      %v2288 = vadd.f32 %v2084, %v2216
      %v2289 = vadd.f32 %v2085, %v2219
      %v2290 = vadd.f32 %v2086, %v2224
      %v2291 = vadd.f32 %v2087, %v2227
      %v2292 = vadd.f32 %v2088, %v2232
      %v2293 = vadd.f32 %v2089, %v2235
      %v2294 = vadd.f32 %v2090, %v2240
      %v2295 = vadd.f32 %v2091, %v2243
      %v2296 = vadd.f32 %v2092, %v2248
      %v2297 = vadd.f32 %v2093, %v2251
      %v2298 = vadd.f32 %v2094, %v2256
      %v2299 = vadd.f32 %v2095, %v2259
      %v2300 = vadd.f32 %v2096, %v2264
      %v2301 = vadd.f32 %v2097, %v2267
      %s2302 = scalar_lea.vmem %s1, 24
      %v2303 = vld [vmem:[%s2302] sm:$0xf]
      %v2304 = vunpack.c.l.b16 %v250
      %v2305 = vunpack.c.l.b16 %v251
      %v2306 = vpack.c.b16 %v2305, %v2304
      %v2308 = vsel %vm922, %v2306, 0
      %v2311 = vsel %vm971, %v2303, 0
      %2313 = vmatprep.subr.bf16.mxu0 0
      %2314 = vmatpush1.bf16.msra.mxu0 %v2311
      %2315 = vmatprep.subr.bf16.mxu0 0
      %2316 = vmatpush1.bf16.msra.mxu0 0
      %2317 = vmatprep.subr.bf16.mxu0 0
      %2318 = vmatpush1.bf16.msra.mxu0 0
      %2319 = vmatprep.subr.bf16.mxu0 0
      %2320 = vmatpush1.bf16.msra.mxu0 0
      %2321 = vmatprep.subr.bf16.mxu0 0
      %2322 = vmatpush1.bf16.msra.mxu0 0
      %2323 = vmatprep.subr.bf16.mxu0 0
      %2324 = vmatpush1.bf16.msra.mxu0 0
      %2325 = vmatprep.subr.bf16.mxu0 0
      %2326 = vmatpush1.bf16.msra.mxu0 0
      %2327 = vmatprep.subr.bf16.mxu0 0
      %2328 = vmatpush1.bf16.msra.mxu0 0
      %2329 = vmatprep.subr.bf16.mxu0 0
      %2330 = vmatpush1.bf16.msra.mxu0 0
      %2331 = vmatprep.subr.bf16.mxu0 0
      %2332 = vmatpush1.bf16.msra.mxu0 0
      %2333 = vmatprep.subr.bf16.mxu0 0
      %2334 = vmatpush1.bf16.msra.mxu0 0
      %2335 = vmatprep.subr.bf16.mxu0 0
      %2336 = vmatpush1.bf16.msra.mxu0 0
      %2337 = vmatprep.subr.bf16.mxu0 0
      %2338 = vmatpush1.bf16.msra.mxu0 0
      %2339 = vmatprep.subr.bf16.mxu0 0
      %2340 = vmatpush1.bf16.msra.mxu0 0
      %2341 = vmatprep.subr.bf16.mxu0 0
      %2342 = vmatpush1.bf16.msra.mxu0 0
      %2343 = vmatprep.subr.bf16.mxu0 0
      %2344 = vmatpush1.bf16.msra.mxu0 0
      %2345 = vmatprep.mubr.bf16.mxu0 0
      %2346 = vmatmul.mubr.bf16.gmra.mrb[0].mxu0 %v1191
      %v2347 = vpop.f32.mrb[0].mxu0
      %v2348 = vadd.f32 0.0, %v2347
      %v2349 = vpop.f32.mrb[0].mxu0
      %v2350 = vpop.f32.mrb[0].mxu0
      %v2351 = vadd.f32 0.0, %v2350
      %v2352 = vpop.f32.mrb[0].mxu0
      %2353 = vmatprep.mubr.bf16.mxu0 0
      %2354 = vmatmul.mubr.bf16.gmra.mrb[0].mxu0 %v1194
      %v2355 = vpop.f32.mrb[0].mxu0
      %v2356 = vadd.f32 0.0, %v2355
      %v2357 = vpop.f32.mrb[0].mxu0
      %v2358 = vpop.f32.mrb[0].mxu0
      %v2359 = vadd.f32 0.0, %v2358
      %v2360 = vpop.f32.mrb[0].mxu0
      %2361 = vmatprep.mubr.bf16.mxu0 0
      %2362 = vmatmul.mubr.bf16.gmra.mrb[0].mxu0 %v1197
      %v2363 = vpop.f32.mrb[0].mxu0
      %v2364 = vadd.f32 0.0, %v2363
      %v2365 = vpop.f32.mrb[0].mxu0
      %v2366 = vpop.f32.mrb[0].mxu0
      %v2367 = vadd.f32 0.0, %v2366
      %v2368 = vpop.f32.mrb[0].mxu0
      %2369 = vmatprep.mubr.bf16.mxu0 0
      %2370 = vmatmul.mubr.bf16.gmra.mrb[0].mxu0 %v1200
      %v2371 = vpop.f32.mrb[0].mxu0
      %v2372 = vadd.f32 0.0, %v2371
      %v2373 = vpop.f32.mrb[0].mxu0
      %v2374 = vpop.f32.mrb[0].mxu0
      %v2375 = vadd.f32 0.0, %v2374
      %v2376 = vpop.f32.mrb[0].mxu0
      %2377 = vmatprep.mubr.bf16.mxu0 0
      %2378 = vmatmul.mubr.bf16.gmra.mrb[0].mxu0 %v1203
      %v2379 = vpop.f32.mrb[0].mxu0
      %v2380 = vadd.f32 0.0, %v2379
      %v2381 = vpop.f32.mrb[0].mxu0
      %v2382 = vpop.f32.mrb[0].mxu0
      %v2383 = vadd.f32 0.0, %v2382
      %v2384 = vpop.f32.mrb[0].mxu0
      %2385 = vmatprep.mubr.bf16.mxu0 0
      %2386 = vmatmul.mubr.bf16.gmra.mrb[0].mxu0 %v1206
      %v2387 = vpop.f32.mrb[0].mxu0
      %v2388 = vadd.f32 0.0, %v2387
      %v2389 = vpop.f32.mrb[0].mxu0
      %v2390 = vpop.f32.mrb[0].mxu0
      %v2391 = vadd.f32 0.0, %v2390
      %v2392 = vpop.f32.mrb[0].mxu0
      %2393 = vmatprep.mubr.bf16.mxu0 0
      %2394 = vmatmul.mubr.bf16.gmra.mrb[0].mxu0 %v1209
      %v2395 = vpop.f32.mrb[0].mxu0
      %v2396 = vadd.f32 0.0, %v2395
      %v2397 = vpop.f32.mrb[0].mxu0
      %v2398 = vpop.f32.mrb[0].mxu0
      %v2399 = vadd.f32 0.0, %v2398
      %v2400 = vpop.f32.mrb[0].mxu0
      %2401 = vmatprep.mubr.bf16.mxu0 0
      %2402 = vmatmul.mubr.bf16.gmra.mrb[0].mxu0 %v1212
      %v2403 = vpop.f32.mrb[0].mxu0
      %v2404 = vadd.f32 0.0, %v2403
      %v2405 = vpop.f32.mrb[0].mxu0
      %v2406 = vpop.f32.mrb[0].mxu0
      %v2407 = vadd.f32 0.0, %v2406
      %v2408 = vpop.f32.mrb[0].mxu0
      %2409 = vmatprep.mubr.bf16.mxu0 0
      %2410 = vmatmul.mubr.bf16.gmra.mrb[0].mxu0 %v1215
      %v2411 = vpop.f32.mrb[0].mxu0
      %v2412 = vadd.f32 0.0, %v2411
      %v2413 = vpop.f32.mrb[0].mxu0
      %v2414 = vpop.f32.mrb[0].mxu0
      %v2415 = vadd.f32 0.0, %v2414
      %v2416 = vpop.f32.mrb[0].mxu0
      %2417 = vmatprep.mubr.bf16.mxu0 0
      %2418 = vmatmul.mubr.bf16.gmra.mrb[0].mxu0 %v1218
      %v2419 = vpop.f32.mrb[0].mxu0
      %v2420 = vadd.f32 0.0, %v2419
      %v2421 = vpop.f32.mrb[0].mxu0
      %v2422 = vpop.f32.mrb[0].mxu0
      %v2423 = vadd.f32 0.0, %v2422
      %v2424 = vpop.f32.mrb[0].mxu0
      %2425 = vmatprep.mubr.bf16.mxu0 0
      %2426 = vmatmul.mubr.bf16.gmra.mrb[0].mxu0 %v1221
      %v2427 = vpop.f32.mrb[0].mxu0
      %v2428 = vadd.f32 0.0, %v2427
      %v2429 = vpop.f32.mrb[0].mxu0
      %v2430 = vpop.f32.mrb[0].mxu0
      %v2431 = vadd.f32 0.0, %v2430
      %v2432 = vpop.f32.mrb[0].mxu0
      %2433 = vmatprep.mubr.bf16.mxu0 0
      %2434 = vmatmul.mubr.bf16.gmra.mrb[0].mxu0 %v1224
      %v2435 = vpop.f32.mrb[0].mxu0
      %v2436 = vadd.f32 0.0, %v2435
      %v2437 = vpop.f32.mrb[0].mxu0
      %v2438 = vpop.f32.mrb[0].mxu0
      %v2439 = vadd.f32 0.0, %v2438
      %v2440 = vpop.f32.mrb[0].mxu0
      %2441 = vmatprep.mubr.bf16.mxu0 0
      %2442 = vmatmul.mubr.bf16.gmra.mrb[0].mxu0 %v1227
      %v2443 = vpop.f32.mrb[0].mxu0
      %v2444 = vadd.f32 0.0, %v2443
      %v2445 = vpop.f32.mrb[0].mxu0
      %v2446 = vpop.f32.mrb[0].mxu0
      %v2447 = vadd.f32 0.0, %v2446
      %v2448 = vpop.f32.mrb[0].mxu0
      %2449 = vmatprep.mubr.bf16.mxu0 0
      %2450 = vmatmul.mubr.bf16.gmra.mrb[0].mxu0 %v1230
      %v2451 = vpop.f32.mrb[0].mxu0
      %v2452 = vadd.f32 0.0, %v2451
      %v2453 = vpop.f32.mrb[0].mxu0
      %v2454 = vpop.f32.mrb[0].mxu0
      %v2455 = vadd.f32 0.0, %v2454
      %v2456 = vpop.f32.mrb[0].mxu0
      %2457 = vmatprep.mubr.bf16.mxu0 0
      %2458 = vmatmul.mubr.bf16.gmra.mrb[0].mxu0 %v1696
      %v2459 = vpop.f32.mrb[0].mxu0
      %v2460 = vadd.f32 0.0, %v2459
      %v2461 = vpop.f32.mrb[0].mxu0
      %v2462 = vpop.f32.mrb[0].mxu0
      %v2463 = vadd.f32 0.0, %v2462
      %v2464 = vpop.f32.mrb[0].mxu0
      %2465 = vmatprep.mubr.bf16.mxu0 0
      %2466 = vmatmul.mubr.bf16.gmra.mrb[0].mxu0 %v2308
      %v2467 = vpop.f32.mrb[0].mxu0
      %v2468 = vadd.f32 0.0, %v2467
      %v2469 = vpop.f32.mrb[0].mxu0
      %v2470 = vpop.f32.mrb[0].mxu0
      %v2471 = vadd.f32 0.0, %v2470
      %v2472 = vpop.f32.mrb[0].mxu0
      %2473 = vdwg.mxu0
      %v2474 = vadd.f32 %v2270, %v2348
      %v2475 = vadd.f32 %v2271, %v2351
      %v2476 = vadd.f32 %v2272, %v2356
      %v2477 = vadd.f32 %v2273, %v2359
      %v2478 = vadd.f32 %v2274, %v2364
      %v2479 = vadd.f32 %v2275, %v2367
      %v2480 = vadd.f32 %v2276, %v2372
      %v2481 = vadd.f32 %v2277, %v2375
      %v2482 = vadd.f32 %v2278, %v2380
      %v2483 = vadd.f32 %v2279, %v2383
      %v2484 = vadd.f32 %v2280, %v2388
      %v2485 = vadd.f32 %v2281, %v2391
      %v2486 = vadd.f32 %v2282, %v2396
      %v2487 = vadd.f32 %v2283, %v2399
      %v2488 = vadd.f32 %v2284, %v2404
      %v2489 = vadd.f32 %v2285, %v2407
      %v2490 = vadd.f32 %v2286, %v2412
      %v2491 = vadd.f32 %v2287, %v2415
      %v2492 = vadd.f32 %v2288, %v2420
      %v2493 = vadd.f32 %v2289, %v2423
      %v2494 = vadd.f32 %v2290, %v2428
      %v2495 = vadd.f32 %v2291, %v2431
      %v2496 = vadd.f32 %v2292, %v2436
      %v2497 = vadd.f32 %v2293, %v2439
      %v2498 = vadd.f32 %v2294, %v2444
      %v2499 = vadd.f32 %v2295, %v2447
      %v2500 = vadd.f32 %v2296, %v2452
      %v2501 = vadd.f32 %v2297, %v2455
      %v2502 = vadd.f32 %v2298, %v2460
      %v2503 = vadd.f32 %v2299, %v2463
      %v2504 = vadd.f32 %v2300, %v2468
      %v2505 = vadd.f32 %v2301, %v2471
      %s2506 = scalar_lea.vmem %s1, 28
      %v2507 = vld [vmem:[%s2506] sm:$0xf]
      %v2508 = vunpack.c.l.b16 %v850
      %v2509 = vunpack.c.l.b16 %v860
      %v2510 = vpack.c.b16 %v2509, %v2508
      %v2512 = vsel %vm922, %v2510, 0
      %v2515 = vsel %vm971, %v2507, 0
      %2517 = vmatprep.subr.bf16.mxu0 0
      %2518 = vmatpush1.bf16.msra.mxu0 %v2515
      %2519 = vmatprep.subr.bf16.mxu0 0
      %2520 = vmatpush1.bf16.msra.mxu0 0
      %2521 = vmatprep.subr.bf16.mxu0 0
      %2522 = vmatpush1.bf16.msra.mxu0 0
      %2523 = vmatprep.subr.bf16.mxu0 0
      %2524 = vmatpush1.bf16.msra.mxu0 0
      %2525 = vmatprep.subr.bf16.mxu0 0
      %2526 = vmatpush1.bf16.msra.mxu0 0
      %2527 = vmatprep.subr.bf16.mxu0 0
      %2528 = vmatpush1.bf16.msra.mxu0 0
      %2529 = vmatprep.subr.bf16.mxu0 0
      %2530 = vmatpush1.bf16.msra.mxu0 0
      %2531 = vmatprep.subr.bf16.mxu0 0
      %2532 = vmatpush1.bf16.msra.mxu0 0
      %2533 = vmatprep.subr.bf16.mxu0 0
      %2534 = vmatpush1.bf16.msra.mxu0 0
      %2535 = vmatprep.subr.bf16.mxu0 0
      %2536 = vmatpush1.bf16.msra.mxu0 0
      %2537 = vmatprep.subr.bf16.mxu0 0
      %2538 = vmatpush1.bf16.msra.mxu0 0
      %2539 = vmatprep.subr.bf16.mxu0 0
      %2540 = vmatpush1.bf16.msra.mxu0 0
      %2541 = vmatprep.subr.bf16.mxu0 0
      %2542 = vmatpush1.bf16.msra.mxu0 0
      %2543 = vmatprep.subr.bf16.mxu0 0
      %2544 = vmatpush1.bf16.msra.mxu0 0
      %2545 = vmatprep.subr.bf16.mxu0 0
      %2546 = vmatpush1.bf16.msra.mxu0 0
      %2547 = vmatprep.subr.bf16.mxu0 0
      %2548 = vmatpush1.bf16.msra.mxu0 0
      %2549 = vmatprep.mubr.bf16.mxu0 0
      %2550 = vmatmul.mubr.bf16.gmra.mrb[0].mxu0 %v930
      %v2551 = vpop.f32.mrb[0].mxu0
      %v2552 = vadd.f32 0.0, %v2551
      %v2553 = vpop.f32.mrb[0].mxu0
      %v2554 = vpop.f32.mrb[0].mxu0
      %v2555 = vadd.f32 0.0, %v2554
      %v2556 = vpop.f32.mrb[0].mxu0
      %2557 = vmatprep.mubr.bf16.mxu0 0
      %2558 = vmatmul.mubr.bf16.gmra.mrb[0].mxu0 %v933
      %v2559 = vpop.f32.mrb[0].mxu0
      %v2560 = vadd.f32 0.0, %v2559
      %v2561 = vpop.f32.mrb[0].mxu0
      %v2562 = vpop.f32.mrb[0].mxu0
      %v2563 = vadd.f32 0.0, %v2562
      %v2564 = vpop.f32.mrb[0].mxu0
      %2565 = vmatprep.mubr.bf16.mxu0 0
      %2566 = vmatmul.mubr.bf16.gmra.mrb[0].mxu0 %v936
      %v2567 = vpop.f32.mrb[0].mxu0
      %v2568 = vadd.f32 0.0, %v2567
      %v2569 = vpop.f32.mrb[0].mxu0
      %v2570 = vpop.f32.mrb[0].mxu0
      %v2571 = vadd.f32 0.0, %v2570
      %v2572 = vpop.f32.mrb[0].mxu0
      %2573 = vmatprep.mubr.bf16.mxu0 0
      %2574 = vmatmul.mubr.bf16.gmra.mrb[0].mxu0 %v939
      %v2575 = vpop.f32.mrb[0].mxu0
      %v2576 = vadd.f32 0.0, %v2575
      %v2577 = vpop.f32.mrb[0].mxu0
      %v2578 = vpop.f32.mrb[0].mxu0
      %v2579 = vadd.f32 0.0, %v2578
      %v2580 = vpop.f32.mrb[0].mxu0
      %2581 = vmatprep.mubr.bf16.mxu0 0
      %2582 = vmatmul.mubr.bf16.gmra.mrb[0].mxu0 %v942
      %v2583 = vpop.f32.mrb[0].mxu0
      %v2584 = vadd.f32 0.0, %v2583
      %v2585 = vpop.f32.mrb[0].mxu0
      %v2586 = vpop.f32.mrb[0].mxu0
      %v2587 = vadd.f32 0.0, %v2586
      %v2588 = vpop.f32.mrb[0].mxu0
      %2589 = vmatprep.mubr.bf16.mxu0 0
      %2590 = vmatmul.mubr.bf16.gmra.mrb[0].mxu0 %v945
      %v2591 = vpop.f32.mrb[0].mxu0
      %v2592 = vadd.f32 0.0, %v2591
      %v2593 = vpop.f32.mrb[0].mxu0
      %v2594 = vpop.f32.mrb[0].mxu0
      %v2595 = vadd.f32 0.0, %v2594
      %v2596 = vpop.f32.mrb[0].mxu0
      %2597 = vmatprep.mubr.bf16.mxu0 0
      %2598 = vmatmul.mubr.bf16.gmra.mrb[0].mxu0 %v948
      %v2599 = vpop.f32.mrb[0].mxu0
      %v2600 = vadd.f32 0.0, %v2599
      %v2601 = vpop.f32.mrb[0].mxu0
      %v2602 = vpop.f32.mrb[0].mxu0
      %v2603 = vadd.f32 0.0, %v2602
      %v2604 = vpop.f32.mrb[0].mxu0
      %2605 = vmatprep.mubr.bf16.mxu0 0
      %2606 = vmatmul.mubr.bf16.gmra.mrb[0].mxu0 %v951
      %v2607 = vpop.f32.mrb[0].mxu0
      %v2608 = vadd.f32 0.0, %v2607
      %v2609 = vpop.f32.mrb[0].mxu0
      %v2610 = vpop.f32.mrb[0].mxu0
      %v2611 = vadd.f32 0.0, %v2610
      %v2612 = vpop.f32.mrb[0].mxu0
      %2613 = vmatprep.mubr.bf16.mxu0 0
      %2614 = vmatmul.mubr.bf16.gmra.mrb[0].mxu0 %v954
      %v2615 = vpop.f32.mrb[0].mxu0
      %v2616 = vadd.f32 0.0, %v2615
      %v2617 = vpop.f32.mrb[0].mxu0
      %v2618 = vpop.f32.mrb[0].mxu0
      %v2619 = vadd.f32 0.0, %v2618
      %v2620 = vpop.f32.mrb[0].mxu0
      %2621 = vmatprep.mubr.bf16.mxu0 0
      %2622 = vmatmul.mubr.bf16.gmra.mrb[0].mxu0 %v957
      %v2623 = vpop.f32.mrb[0].mxu0
      %v2624 = vadd.f32 0.0, %v2623
      %v2625 = vpop.f32.mrb[0].mxu0
      %v2626 = vpop.f32.mrb[0].mxu0
      %v2627 = vadd.f32 0.0, %v2626
      %v2628 = vpop.f32.mrb[0].mxu0
      %2629 = vmatprep.mubr.bf16.mxu0 0
      %2630 = vmatmul.mubr.bf16.gmra.mrb[0].mxu0 %v960
      %v2631 = vpop.f32.mrb[0].mxu0
      %v2632 = vadd.f32 0.0, %v2631
      %v2633 = vpop.f32.mrb[0].mxu0
      %v2634 = vpop.f32.mrb[0].mxu0
      %v2635 = vadd.f32 0.0, %v2634
      %v2636 = vpop.f32.mrb[0].mxu0
      %2637 = vmatprep.mubr.bf16.mxu0 0
      %2638 = vmatmul.mubr.bf16.gmra.mrb[0].mxu0 %v963
      %v2639 = vpop.f32.mrb[0].mxu0
      %v2640 = vadd.f32 0.0, %v2639
      %v2641 = vpop.f32.mrb[0].mxu0
      %v2642 = vpop.f32.mrb[0].mxu0
      %v2643 = vadd.f32 0.0, %v2642
      %v2644 = vpop.f32.mrb[0].mxu0
      %2645 = vmatprep.mubr.bf16.mxu0 0
      %2646 = vmatmul.mubr.bf16.gmra.mrb[0].mxu0 %v966
      %v2647 = vpop.f32.mrb[0].mxu0
      %v2648 = vadd.f32 0.0, %v2647
      %v2649 = vpop.f32.mrb[0].mxu0
      %v2650 = vpop.f32.mrb[0].mxu0
      %v2651 = vadd.f32 0.0, %v2650
      %v2652 = vpop.f32.mrb[0].mxu0
      %2653 = vmatprep.mubr.bf16.mxu0 0
      %2654 = vmatmul.mubr.bf16.gmra.mrb[0].mxu0 %v969
      %v2655 = vpop.f32.mrb[0].mxu0
      %v2656 = vadd.f32 0.0, %v2655
      %v2657 = vpop.f32.mrb[0].mxu0
      %v2658 = vpop.f32.mrb[0].mxu0
      %v2659 = vadd.f32 0.0, %v2658
      %v2660 = vpop.f32.mrb[0].mxu0
      %2661 = vmatprep.mubr.bf16.mxu0 0
      %2662 = vmatmul.mubr.bf16.gmra.mrb[0].mxu0 %v1900
      %v2663 = vpop.f32.mrb[0].mxu0
      %v2664 = vadd.f32 0.0, %v2663
      %v2665 = vpop.f32.mrb[0].mxu0
      %v2666 = vpop.f32.mrb[0].mxu0
      %v2667 = vadd.f32 0.0, %v2666
      %v2668 = vpop.f32.mrb[0].mxu0
      %2669 = vmatprep.mubr.bf16.mxu0 0
      %2670 = vmatmul.mubr.bf16.gmra.mrb[0].mxu0 %v2512
      %v2671 = vpop.f32.mrb[0].mxu0
      %v2672 = vadd.f32 0.0, %v2671
      %v2673 = vpop.f32.mrb[0].mxu0
      %v2674 = vpop.f32.mrb[0].mxu0
      %v2675 = vadd.f32 0.0, %v2674
      %v2676 = vpop.f32.mrb[0].mxu0
      %2677 = vdwg.mxu0
      %v2678 = vadd.f32 %v2474, %v2552
      %v2679 = vadd.f32 %v2475, %v2555
      %v2680 = vadd.f32 %v2476, %v2560
      %v2681 = vadd.f32 %v2477, %v2563
      %v2682 = vadd.f32 %v2478, %v2568
      %v2683 = vadd.f32 %v2479, %v2571
      %v2684 = vadd.f32 %v2480, %v2576
      %v2685 = vadd.f32 %v2481, %v2579
      %v2686 = vadd.f32 %v2482, %v2584
      %v2687 = vadd.f32 %v2483, %v2587
      %v2688 = vadd.f32 %v2484, %v2592
      %v2689 = vadd.f32 %v2485, %v2595
      %v2690 = vadd.f32 %v2486, %v2600
      %v2691 = vadd.f32 %v2487, %v2603
      %v2692 = vadd.f32 %v2488, %v2608
      %v2693 = vadd.f32 %v2489, %v2611
      %v2694 = vadd.f32 %v2490, %v2616
      %v2695 = vadd.f32 %v2491, %v2619
      %v2696 = vadd.f32 %v2492, %v2624
      %v2697 = vadd.f32 %v2493, %v2627
      %v2698 = vadd.f32 %v2494, %v2632
      %v2699 = vadd.f32 %v2495, %v2635
      %v2700 = vadd.f32 %v2496, %v2640
      %v2701 = vadd.f32 %v2497, %v2643
      %v2702 = vadd.f32 %v2498, %v2648
      %v2703 = vadd.f32 %v2499, %v2651
      %v2704 = vadd.f32 %v2500, %v2656
      %v2705 = vadd.f32 %v2501, %v2659
      %v2706 = vadd.f32 %v2502, %v2664
      %v2707 = vadd.f32 %v2503, %v2667
      %v2708 = vadd.f32 %v2504, %v2672
      %v2709 = vadd.f32 %v2505, %v2675
      %s2710 = scalar_lea.vmem %s1, 32
      %v2711 = vld [vmem:[%s2710] sm:$0xf]
      %v2712 = vunpack.c.l.b16 %v867
      %v2713 = vunpack.c.l.b16 %v870
      %v2714 = vpack.c.b16 %v2713, %v2712
      %v2716 = vsel %vm922, %v2714, 0
      %v2719 = vsel %vm971, %v2711, 0
      %2721 = vmatprep.subr.bf16.mxu0 0
      %2722 = vmatpush1.bf16.msra.mxu0 %v2719
      %2723 = vmatprep.subr.bf16.mxu0 0
      %2724 = vmatpush1.bf16.msra.mxu0 0
      %2725 = vmatprep.subr.bf16.mxu0 0
      %2726 = vmatpush1.bf16.msra.mxu0 0
      %2727 = vmatprep.subr.bf16.mxu0 0
      %2728 = vmatpush1.bf16.msra.mxu0 0
      %2729 = vmatprep.subr.bf16.mxu0 0
      %2730 = vmatpush1.bf16.msra.mxu0 0
      %2731 = vmatprep.subr.bf16.mxu0 0
      %2732 = vmatpush1.bf16.msra.mxu0 0
      %2733 = vmatprep.subr.bf16.mxu0 0
      %2734 = vmatpush1.bf16.msra.mxu0 0
      %2735 = vmatprep.subr.bf16.mxu0 0
      %2736 = vmatpush1.bf16.msra.mxu0 0
      %2737 = vmatprep.subr.bf16.mxu0 0
      %2738 = vmatpush1.bf16.msra.mxu0 0
      %2739 = vmatprep.subr.bf16.mxu0 0
      %2740 = vmatpush1.bf16.msra.mxu0 0
      %2741 = vmatprep.subr.bf16.mxu0 0
      %2742 = vmatpush1.bf16.msra.mxu0 0
      %2743 = vmatprep.subr.bf16.mxu0 0
      %2744 = vmatpush1.bf16.msra.mxu0 0
      %2745 = vmatprep.subr.bf16.mxu0 0
      %2746 = vmatpush1.bf16.msra.mxu0 0
      %2747 = vmatprep.subr.bf16.mxu0 0
      %2748 = vmatpush1.bf16.msra.mxu0 0
      %2749 = vmatprep.subr.bf16.mxu0 0
      %2750 = vmatpush1.bf16.msra.mxu0 0
      %2751 = vmatprep.subr.bf16.mxu0 0
      %2752 = vmatpush1.bf16.msra.mxu0 0
      %2753 = vmatprep.mubr.bf16.mxu0 0
      %2754 = vmatmul.mubr.bf16.gmra.mrb[0].mxu0 %v1453
      %v2755 = vpop.f32.mrb[0].mxu0
      %v2756 = vadd.f32 0.0, %v2755
      %v2757 = vpop.f32.mrb[0].mxu0
      %v2758 = vpop.f32.mrb[0].mxu0
      %v2759 = vadd.f32 0.0, %v2758
      %v2760 = vpop.f32.mrb[0].mxu0
      %2761 = vmatprep.mubr.bf16.mxu0 0
      %2762 = vmatmul.mubr.bf16.gmra.mrb[0].mxu0 %v1456
      %v2763 = vpop.f32.mrb[0].mxu0
      %v2764 = vadd.f32 0.0, %v2763
      %v2765 = vpop.f32.mrb[0].mxu0
      %v2766 = vpop.f32.mrb[0].mxu0
      %v2767 = vadd.f32 0.0, %v2766
      %v2768 = vpop.f32.mrb[0].mxu0
      %2769 = vmatprep.mubr.bf16.mxu0 0
      %2770 = vmatmul.mubr.bf16.gmra.mrb[0].mxu0 %v1459
      %v2771 = vpop.f32.mrb[0].mxu0
      %v2772 = vadd.f32 0.0, %v2771
      %v2773 = vpop.f32.mrb[0].mxu0
      %v2774 = vpop.f32.mrb[0].mxu0
      %v2775 = vadd.f32 0.0, %v2774
      %v2776 = vpop.f32.mrb[0].mxu0
      %2777 = vmatprep.mubr.bf16.mxu0 0
      %2778 = vmatmul.mubr.bf16.gmra.mrb[0].mxu0 %v1462
      %v2779 = vpop.f32.mrb[0].mxu0
      %v2780 = vadd.f32 0.0, %v2779
      %v2781 = vpop.f32.mrb[0].mxu0
      %v2782 = vpop.f32.mrb[0].mxu0
      %v2783 = vadd.f32 0.0, %v2782
      %v2784 = vpop.f32.mrb[0].mxu0
      %2785 = vmatprep.mubr.bf16.mxu0 0
      %2786 = vmatmul.mubr.bf16.gmra.mrb[0].mxu0 %v1465
      %v2787 = vpop.f32.mrb[0].mxu0
      %v2788 = vadd.f32 0.0, %v2787
      %v2789 = vpop.f32.mrb[0].mxu0
      %v2790 = vpop.f32.mrb[0].mxu0
      %v2791 = vadd.f32 0.0, %v2790
      %v2792 = vpop.f32.mrb[0].mxu0
      %2793 = vmatprep.mubr.bf16.mxu0 0
      %2794 = vmatmul.mubr.bf16.gmra.mrb[0].mxu0 %v1468
      %v2795 = vpop.f32.mrb[0].mxu0
      %v2796 = vadd.f32 0.0, %v2795
      %v2797 = vpop.f32.mrb[0].mxu0
      %v2798 = vpop.f32.mrb[0].mxu0
      %v2799 = vadd.f32 0.0, %v2798
      %v2800 = vpop.f32.mrb[0].mxu0
      %2801 = vmatprep.mubr.bf16.mxu0 0
      %2802 = vmatmul.mubr.bf16.gmra.mrb[0].mxu0 %v1471
      %v2803 = vpop.f32.mrb[0].mxu0
      %v2804 = vadd.f32 0.0, %v2803
      %v2805 = vpop.f32.mrb[0].mxu0
      %v2806 = vpop.f32.mrb[0].mxu0
      %v2807 = vadd.f32 0.0, %v2806
      %v2808 = vpop.f32.mrb[0].mxu0
      %2809 = vmatprep.mubr.bf16.mxu0 0
      %2810 = vmatmul.mubr.bf16.gmra.mrb[0].mxu0 %v1474
      %v2811 = vpop.f32.mrb[0].mxu0
      %v2812 = vadd.f32 0.0, %v2811
      %v2813 = vpop.f32.mrb[0].mxu0
      %v2814 = vpop.f32.mrb[0].mxu0
      %v2815 = vadd.f32 0.0, %v2814
      %v2816 = vpop.f32.mrb[0].mxu0
      %2817 = vmatprep.mubr.bf16.mxu0 0
      %2818 = vmatmul.mubr.bf16.gmra.mrb[0].mxu0 %v1477
      %v2819 = vpop.f32.mrb[0].mxu0
      %v2820 = vadd.f32 0.0, %v2819
      %v2821 = vpop.f32.mrb[0].mxu0
      %v2822 = vpop.f32.mrb[0].mxu0
      %v2823 = vadd.f32 0.0, %v2822
      %v2824 = vpop.f32.mrb[0].mxu0
      %2825 = vmatprep.mubr.bf16.mxu0 0
      %2826 = vmatmul.mubr.bf16.gmra.mrb[0].mxu0 %v1480
      %v2827 = vpop.f32.mrb[0].mxu0
      %v2828 = vadd.f32 0.0, %v2827
      %v2829 = vpop.f32.mrb[0].mxu0
      %v2830 = vpop.f32.mrb[0].mxu0
      %v2831 = vadd.f32 0.0, %v2830
      %v2832 = vpop.f32.mrb[0].mxu0
      %2833 = vmatprep.mubr.bf16.mxu0 0
      %2834 = vmatmul.mubr.bf16.gmra.mrb[0].mxu0 %v1483
      %v2835 = vpop.f32.mrb[0].mxu0
      %v2836 = vadd.f32 0.0, %v2835
      %v2837 = vpop.f32.mrb[0].mxu0
      %v2838 = vpop.f32.mrb[0].mxu0
      %v2839 = vadd.f32 0.0, %v2838
      %v2840 = vpop.f32.mrb[0].mxu0
      %2841 = vmatprep.mubr.bf16.mxu0 0
      %2842 = vmatmul.mubr.bf16.gmra.mrb[0].mxu0 %v1486
      %v2843 = vpop.f32.mrb[0].mxu0
      %v2844 = vadd.f32 0.0, %v2843
      %v2845 = vpop.f32.mrb[0].mxu0
      %v2846 = vpop.f32.mrb[0].mxu0
      %v2847 = vadd.f32 0.0, %v2846
      %v2848 = vpop.f32.mrb[0].mxu0
      %2849 = vmatprep.mubr.bf16.mxu0 0
      %2850 = vmatmul.mubr.bf16.gmra.mrb[0].mxu0 %v1489
      %v2851 = vpop.f32.mrb[0].mxu0
      %v2852 = vadd.f32 0.0, %v2851
      %v2853 = vpop.f32.mrb[0].mxu0
      %v2854 = vpop.f32.mrb[0].mxu0
      %v2855 = vadd.f32 0.0, %v2854
      %v2856 = vpop.f32.mrb[0].mxu0
      %2857 = vmatprep.mubr.bf16.mxu0 0
      %2858 = vmatmul.mubr.bf16.gmra.mrb[0].mxu0 %v1492
      %v2859 = vpop.f32.mrb[0].mxu0
      %v2860 = vadd.f32 0.0, %v2859
      %v2861 = vpop.f32.mrb[0].mxu0
      %v2862 = vpop.f32.mrb[0].mxu0
      %v2863 = vadd.f32 0.0, %v2862
      %v2864 = vpop.f32.mrb[0].mxu0
      %2865 = vmatprep.mubr.bf16.mxu0 0
      %2866 = vmatmul.mubr.bf16.gmra.mrb[0].mxu0 %v2104
      %v2867 = vpop.f32.mrb[0].mxu0
      %v2868 = vadd.f32 0.0, %v2867
      %v2869 = vpop.f32.mrb[0].mxu0
      %v2870 = vpop.f32.mrb[0].mxu0
      %v2871 = vadd.f32 0.0, %v2870
      %v2872 = vpop.f32.mrb[0].mxu0
      %2873 = vmatprep.mubr.bf16.mxu0 0
      %2874 = vmatmul.mubr.bf16.gmra.mrb[0].mxu0 %v2716
      %v2875 = vpop.f32.mrb[0].mxu0
      %v2876 = vadd.f32 0.0, %v2875
      %v2877 = vpop.f32.mrb[0].mxu0
      %v2878 = vpop.f32.mrb[0].mxu0
      %v2879 = vadd.f32 0.0, %v2878
      %v2880 = vpop.f32.mrb[0].mxu0
      %2881 = vdwg.mxu0
      %v2882 = vadd.f32 %v2678, %v2756
      %v2883 = vadd.f32 %v2679, %v2759
      %v2884 = vadd.f32 %v2680, %v2764
      %v2885 = vadd.f32 %v2681, %v2767
      %v2886 = vadd.f32 %v2682, %v2772
      %v2887 = vadd.f32 %v2683, %v2775
      %v2888 = vadd.f32 %v2684, %v2780
      %v2889 = vadd.f32 %v2685, %v2783
      %v2890 = vadd.f32 %v2686, %v2788
      %v2891 = vadd.f32 %v2687, %v2791
      %v2892 = vadd.f32 %v2688, %v2796
      %v2893 = vadd.f32 %v2689, %v2799
      %v2894 = vadd.f32 %v2690, %v2804
      %v2895 = vadd.f32 %v2691, %v2807
      %v2896 = vadd.f32 %v2692, %v2812
      %v2897 = vadd.f32 %v2693, %v2815
      %v2898 = vadd.f32 %v2694, %v2820
      %v2899 = vadd.f32 %v2695, %v2823
      %v2900 = vadd.f32 %v2696, %v2828
      %v2901 = vadd.f32 %v2697, %v2831
      %v2902 = vadd.f32 %v2698, %v2836
      %v2903 = vadd.f32 %v2699, %v2839
      %v2904 = vadd.f32 %v2700, %v2844
      %v2905 = vadd.f32 %v2701, %v2847
      %v2906 = vadd.f32 %v2702, %v2852
      %v2907 = vadd.f32 %v2703, %v2855
      %v2908 = vadd.f32 %v2704, %v2860
      %v2909 = vadd.f32 %v2705, %v2863
      %v2910 = vadd.f32 %v2706, %v2868
      %v2911 = vadd.f32 %v2707, %v2871
      %v2912 = vadd.f32 %v2708, %v2876
      %v2913 = vadd.f32 %v2709, %v2879
      %v2914 = vld [vmem:[%s2] sm:$0x1]
      %v2916 = vlaneseq
      %v2917 = vshrl.u32 %v2916, 7
      %v2918 = vsub.s32 0, %v2917
      %v2919 = vrot.slane %v2914, %v2918
      %v2921 = vadd.f32 %v2882, %v2919
      %v2922 = vadd.f32 %v2883, %v2919
      %v2923 = vadd.f32 %v2884, %v2919
      %v2924 = vadd.f32 %v2885, %v2919
      %v2925 = vadd.f32 %v2886, %v2919
      %v2926 = vadd.f32 %v2887, %v2919
      %v2927 = vadd.f32 %v2888, %v2919
      %v2928 = vadd.f32 %v2889, %v2919
      %v2929 = vadd.f32 %v2890, %v2919
      %v2930 = vadd.f32 %v2891, %v2919
      %v2931 = vadd.f32 %v2892, %v2919
      %v2932 = vadd.f32 %v2893, %v2919
      %v2933 = vadd.f32 %v2894, %v2919
      %v2934 = vadd.f32 %v2895, %v2919
      %v2935 = vadd.f32 %v2896, %v2919
      %v2936 = vadd.f32 %v2897, %v2919
      %v2937 = vadd.f32 %v2898, %v2919
      %v2938 = vadd.f32 %v2899, %v2919
      %v2939 = vadd.f32 %v2900, %v2919
      %v2940 = vadd.f32 %v2901, %v2919
      %v2941 = vadd.f32 %v2902, %v2919
      %v2942 = vadd.f32 %v2903, %v2919
      %v2943 = vadd.f32 %v2904, %v2919
      %v2944 = vadd.f32 %v2905, %v2919
      %v2945 = vadd.f32 %v2906, %v2919
      %v2946 = vadd.f32 %v2907, %v2919
      %v2947 = vadd.f32 %v2908, %v2919
      %v2948 = vadd.f32 %v2909, %v2919
      %v2949 = vadd.f32 %v2910, %v2919
      %v2950 = vadd.f32 %v2911, %v2919
      %v2951 = vadd.f32 %v2912, %v2919
      %v2952 = vadd.f32 %v2913, %v2919
      %vm2953 = vcmp.ge.f32.partialorder %v2921, 0.0
      %vm2954 = vcmp.ge.f32.partialorder %v2922, 0.0
      %vm2955 = vcmp.ge.f32.partialorder %v2923, 0.0
      %vm2956 = vcmp.ge.f32.partialorder %v2924, 0.0
      %vm2957 = vcmp.ge.f32.partialorder %v2925, 0.0
      %vm2958 = vcmp.ge.f32.partialorder %v2926, 0.0
      %vm2959 = vcmp.ge.f32.partialorder %v2927, 0.0
      %vm2960 = vcmp.ge.f32.partialorder %v2928, 0.0
      %vm2961 = vcmp.ge.f32.partialorder %v2929, 0.0
      %vm2962 = vcmp.ge.f32.partialorder %v2930, 0.0
      %vm2963 = vcmp.ge.f32.partialorder %v2931, 0.0
      %vm2964 = vcmp.ge.f32.partialorder %v2932, 0.0
      %vm2965 = vcmp.ge.f32.partialorder %v2933, 0.0
      %vm2966 = vcmp.ge.f32.partialorder %v2934, 0.0
      %vm2967 = vcmp.ge.f32.partialorder %v2935, 0.0
      %vm2968 = vcmp.ge.f32.partialorder %v2936, 0.0
      %vm2969 = vcmp.ge.f32.partialorder %v2937, 0.0
      %vm2970 = vcmp.ge.f32.partialorder %v2938, 0.0
      %vm2971 = vcmp.ge.f32.partialorder %v2939, 0.0
      %vm2972 = vcmp.ge.f32.partialorder %v2940, 0.0
      %vm2973 = vcmp.ge.f32.partialorder %v2941, 0.0
      %vm2974 = vcmp.ge.f32.partialorder %v2942, 0.0
      %vm2975 = vcmp.ge.f32.partialorder %v2943, 0.0
      %vm2976 = vcmp.ge.f32.partialorder %v2944, 0.0
      %vm2977 = vcmp.ge.f32.partialorder %v2945, 0.0
      %vm2978 = vcmp.ge.f32.partialorder %v2946, 0.0
      %vm2979 = vcmp.ge.f32.partialorder %v2947, 0.0
      %vm2980 = vcmp.ge.f32.partialorder %v2948, 0.0
      %vm2981 = vcmp.ge.f32.partialorder %v2949, 0.0
      %vm2982 = vcmp.ge.f32.partialorder %v2950, 0.0
      %vm2983 = vcmp.ge.f32.partialorder %v2951, 0.0
      %vm2984 = vcmp.ge.f32.partialorder %v2952, 0.0
      %v2985 = vld [vmem:[%s3] sm:$0x1]
      %v2987 = vlaneseq
      %v2988 = vshrl.u32 %v2987, 7
      %v2989 = vsub.s32 0, %v2988
      %v2990 = vrot.slane %v2985, %v2989
      %v2992 = vmul.f32 %v2921, %v2990
      %v2993 = vmul.f32 %v2922, %v2990
      %v2994 = vmul.f32 %v2923, %v2990
      %v2995 = vmul.f32 %v2924, %v2990
      %v2996 = vmul.f32 %v2925, %v2990
      %v2997 = vmul.f32 %v2926, %v2990
      %v2998 = vmul.f32 %v2927, %v2990
      %v2999 = vmul.f32 %v2928, %v2990
      %v3000 = vmul.f32 %v2929, %v2990
      %v3001 = vmul.f32 %v2930, %v2990
      %v3002 = vmul.f32 %v2931, %v2990
      %v3003 = vmul.f32 %v2932, %v2990
      %v3004 = vmul.f32 %v2933, %v2990
      %v3005 = vmul.f32 %v2934, %v2990
      %v3006 = vmul.f32 %v2935, %v2990
      %v3007 = vmul.f32 %v2936, %v2990
      %v3008 = vmul.f32 %v2937, %v2990
      %v3009 = vmul.f32 %v2938, %v2990
      %v3010 = vmul.f32 %v2939, %v2990
      %v3011 = vmul.f32 %v2940, %v2990
      %v3012 = vmul.f32 %v2941, %v2990
      %v3013 = vmul.f32 %v2942, %v2990
      %v3014 = vmul.f32 %v2943, %v2990
      %v3015 = vmul.f32 %v2944, %v2990
      %v3016 = vmul.f32 %v2945, %v2990
      %v3017 = vmul.f32 %v2946, %v2990
      %v3018 = vmul.f32 %v2947, %v2990
      %v3019 = vmul.f32 %v2948, %v2990
      %v3020 = vmul.f32 %v2949, %v2990
      %v3021 = vmul.f32 %v2950, %v2990
      %v3022 = vmul.f32 %v2951, %v2990
      %v3023 = vmul.f32 %v2952, %v2990
      %v3024 = vsel %vm2953, %v2921, %v2992
      %v3025 = vsel %vm2954, %v2922, %v2993
      %v3026 = vsel %vm2955, %v2923, %v2994
      %v3027 = vsel %vm2956, %v2924, %v2995
      %v3028 = vsel %vm2957, %v2925, %v2996
      %v3029 = vsel %vm2958, %v2926, %v2997
      %v3030 = vsel %vm2959, %v2927, %v2998
      %v3031 = vsel %vm2960, %v2928, %v2999
      %v3032 = vsel %vm2961, %v2929, %v3000
      %v3033 = vsel %vm2962, %v2930, %v3001
      %v3034 = vsel %vm2963, %v2931, %v3002
      %v3035 = vsel %vm2964, %v2932, %v3003
      %v3036 = vsel %vm2965, %v2933, %v3004
      %v3037 = vsel %vm2966, %v2934, %v3005
      %v3038 = vsel %vm2967, %v2935, %v3006
      %v3039 = vsel %vm2968, %v2936, %v3007
      %v3040 = vsel %vm2969, %v2937, %v3008
      %v3041 = vsel %vm2970, %v2938, %v3009
      %v3042 = vsel %vm2971, %v2939, %v3010
      %v3043 = vsel %vm2972, %v2940, %v3011
      %v3044 = vsel %vm2973, %v2941, %v3012
      %v3045 = vsel %vm2974, %v2942, %v3013
      %v3046 = vsel %vm2975, %v2943, %v3014
      %v3047 = vsel %vm2976, %v2944, %v3015
      %v3048 = vsel %vm2977, %v2945, %v3016
      %v3049 = vsel %vm2978, %v2946, %v3017
      %v3050 = vsel %vm2979, %v2947, %v3018
      %v3051 = vsel %vm2980, %v2948, %v3019
      %v3052 = vsel %vm2981, %v2949, %v3020
      %v3053 = vsel %vm2982, %v2950, %v3021
      %v3054 = vsel %vm2983, %v2951, %v3022
      %v3055 = vsel %vm2984, %v2952, %v3023
      %v3056 = vpack.c.bf16 %v3025, %v3024
      %v3057 = vpack.c.bf16 %v3027, %v3026
      %v3058 = vpack.c.bf16 %v3029, %v3028
      %v3059 = vpack.c.bf16 %v3031, %v3030
      %v3060 = vpack.c.bf16 %v3033, %v3032
      %v3061 = vpack.c.bf16 %v3035, %v3034
      %v3062 = vpack.c.bf16 %v3037, %v3036
      %v3063 = vpack.c.bf16 %v3039, %v3038
      %v3064 = vpack.c.bf16 %v3041, %v3040
      %v3065 = vpack.c.bf16 %v3043, %v3042
      %v3066 = vpack.c.bf16 %v3045, %v3044
      %v3067 = vpack.c.bf16 %v3047, %v3046
      %v3068 = vpack.c.bf16 %v3049, %v3048
      %v3069 = vpack.c.bf16 %v3051, %v3050
      %v3070 = vpack.c.bf16 %v3053, %v3052
      %v3071 = vpack.c.bf16 %v3055, %v3054
      %v3088 = vunpack.c.l.b16 %v3056
      %v3089 = vunpack.c.h.b16 %v3056
      %v3090 = vunpack.c.l.b16 %v3057
      %v3091 = vunpack.c.h.b16 %v3057
      %v3092 = vunpack.c.l.b16 %v3058
      %v3093 = vunpack.c.h.b16 %v3058
      %v3094 = vunpack.c.l.b16 %v3059
      %v3095 = vunpack.c.h.b16 %v3059
      %v3096 = vunpack.c.l.b16 %v3060
      %v3097 = vunpack.c.h.b16 %v3060
      %v3098 = vunpack.c.l.b16 %v3061
      %v3099 = vunpack.c.h.b16 %v3061
      %v3100 = vunpack.c.l.b16 %v3062
      %v3101 = vunpack.c.h.b16 %v3062
      %v3102 = vunpack.c.l.b16 %v3063
      %v3103 = vunpack.c.h.b16 %v3063
      %v3104 = vunpack.c.l.b16 %v3064
      %v3105 = vunpack.c.h.b16 %v3064
      %v3106 = vunpack.c.l.b16 %v3065
      %v3107 = vunpack.c.h.b16 %v3065
      %v3108 = vunpack.c.l.b16 %v3066
      %v3109 = vunpack.c.h.b16 %v3066
      %v3110 = vunpack.c.l.b16 %v3067
      %v3111 = vunpack.c.h.b16 %v3067
      %v3112 = vunpack.c.l.b16 %v3068
      %v3113 = vunpack.c.h.b16 %v3068
      %v3114 = vunpack.c.l.b16 %v3069
      %v3115 = vunpack.c.h.b16 %v3069
      %v3116 = vunpack.c.l.b16 %v3070
      %v3117 = vunpack.c.h.b16 %v3070
      %v3118 = vunpack.c.l.b16 %v3071
      %v3119 = vunpack.c.h.b16 %v3071
      %v3120 = vpack.c.b16 %v3088, %v3088
      %v3121 = vpack.c.b16 %v3089, %v3089
      %v3122 = vpack.c.b16 %v3090, %v3090
      %v3123 = vpack.c.b16 %v3091, %v3091
      %v3124 = vpack.c.b16 %v3092, %v3092
      %v3125 = vpack.c.b16 %v3093, %v3093
      %v3126 = vpack.c.b16 %v3094, %v3094
      %v3127 = vpack.c.b16 %v3095, %v3095
      %v3128 = vpack.c.b16 %v3096, %v3096
      %v3129 = vpack.c.b16 %v3097, %v3097
      %v3130 = vpack.c.b16 %v3098, %v3098
      %v3131 = vpack.c.b16 %v3099, %v3099
      %v3132 = vpack.c.b16 %v3100, %v3100
      %v3133 = vpack.c.b16 %v3101, %v3101
      %v3134 = vpack.c.b16 %v3102, %v3102
      %v3135 = vpack.c.b16 %v3103, %v3103
      %v3136 = vpack.c.b16 %v3104, %v3104
      %v3137 = vpack.c.b16 %v3105, %v3105
      %v3138 = vpack.c.b16 %v3106, %v3106
      %v3139 = vpack.c.b16 %v3107, %v3107
      %v3140 = vpack.c.b16 %v3108, %v3108
      %v3141 = vpack.c.b16 %v3109, %v3109
      %v3142 = vpack.c.b16 %v3110, %v3110
      %v3143 = vpack.c.b16 %v3111, %v3111
      %v3144 = vpack.c.b16 %v3112, %v3112
      %v3145 = vpack.c.b16 %v3113, %v3113
      %v3146 = vpack.c.b16 %v3114, %v3114
      %v3147 = vpack.c.b16 %v3115, %v3115
      %v3148 = vpack.c.b16 %v3116, %v3116
      %v3149 = vpack.c.b16 %v3117, %v3117
      %v3150 = vpack.c.b16 %v3118, %v3118
      %v3151 = vpack.c.b16 %v3119, %v3119
      %vm3184 = vcmask 125952
      %3185 = vst.msk [vmem:[%s197] sm:$0xf] %vm3184, %v3120
      %3186 = vst.msk [vmem:[%s197 + $0x4] sm:$0xf] %vm3184, %v3121
      %3187 = vst.msk [vmem:[%s197 + $0x8] sm:$0xf] %vm3184, %v3122
      %3188 = vst.msk [vmem:[%s197 + $0xc] sm:$0xf] %vm3184, %v3123
      %3189 = vst.msk [vmem:[%s197 + $0x10] sm:$0xf] %vm3184, %v3124
      %3190 = vst.msk [vmem:[%s197 + $0x14] sm:$0xf] %vm3184, %v3125
      %3191 = vst.msk [vmem:[%s197 + $0x18] sm:$0xf] %vm3184, %v3126
      %3192 = vst.msk [vmem:[%s197 + $0x1c] sm:$0xf] %vm3184, %v3127
      %3193 = vst.msk [vmem:[%s197 + $0x20] sm:$0xf] %vm3184, %v3128
      %3194 = vst.msk [vmem:[%s197 + $0x24] sm:$0xf] %vm3184, %v3129
      %3195 = vst.msk [vmem:[%s197 + $0x28] sm:$0xf] %vm3184, %v3130
      %3196 = vst.msk [vmem:[%s197 + $0x2c] sm:$0xf] %vm3184, %v3131
      %3197 = vst.msk [vmem:[%s197 + $0x30] sm:$0xf] %vm3184, %v3132
      %3198 = vst.msk [vmem:[%s197 + $0x34] sm:$0xf] %vm3184, %v3133
      %3199 = vst.msk [vmem:[%s197 + $0x38] sm:$0xf] %vm3184, %v3134
      %3200 = vst.msk [vmem:[%s197 + $0x3c] sm:$0xf] %vm3184, %v3135
      %3201 = vst.msk [vmem:[%s197 + $0x40] sm:$0xf] %vm3184, %v3136
      %3202 = vst.msk [vmem:[%s197 + $0x44] sm:$0xf] %vm3184, %v3137
      %3203 = vst.msk [vmem:[%s197 + $0x48] sm:$0xf] %vm3184, %v3138
      %3204 = vst.msk [vmem:[%s197 + $0x4c] sm:$0xf] %vm3184, %v3139
      %3205 = vst.msk [vmem:[%s197 + $0x50] sm:$0xf] %vm3184, %v3140
      %3206 = vst.msk [vmem:[%s197 + $0x54] sm:$0xf] %vm3184, %v3141
      %3207 = vst.msk [vmem:[%s197 + $0x58] sm:$0xf] %vm3184, %v3142
      %3208 = vst.msk [vmem:[%s197 + $0x5c] sm:$0xf] %vm3184, %v3143
      %3209 = vst.msk [vmem:[%s197 + $0x60] sm:$0xf] %vm3184, %v3144
      %3210 = vst.msk [vmem:[%s197 + $0x64] sm:$0xf] %vm3184, %v3145
      %3211 = vst.msk [vmem:[%s197 + $0x68] sm:$0xf] %vm3184, %v3146
      %3212 = vst.msk [vmem:[%s197 + $0x6c] sm:$0xf] %vm3184, %v3147
      %3213 = vst.msk [vmem:[%s197 + $0x70] sm:$0xf] %vm3184, %v3148
      %3214 = vst.msk [vmem:[%s197 + $0x74] sm:$0xf] %vm3184, %v3149
      %3215 = vst.msk [vmem:[%s197 + $0x78] sm:$0xf] %vm3184, %v3150
      %3216 = vst.msk [vmem:[%s197 + $0x7c] sm:$0xf] %vm3184, %v3151
      %p3217 = scmp.lt.s32.totalorder %s15, 1
      %s3218 = scalar_select %p3217, %s15, 1
      %s3219 = smul.addr %s3218, 32
      %s3220 = smul.addr %s3219, 4
      %s3221 = scalar_lea.vmem %s4, %s3220
      // Predicated region
      $region37: #{_lambda_.2} parent=35 // pred_check
        %p3222 = pneg %p122
      $region38: #{_lambda_.2} parent=35 // pred_check_branch
        %3224 = sbr.rel (%p3222) target = $region40
      $region39: #{_lambda_.2} parent=35 // pred_region
        _
      $region40: #{_lambda_.2} parent=35 // pred_fallthru
        _
    $region36: #{_lambda_.2} parent=5 // pred_fallthru
      _
    %p3225 = scmp.le.s32.totalorder 2, %s10
    // Predicated region
    $region41: #{_lambda_.2} parent=5 // pred_check
      %p3226 = pneg %p3225
    $region42: #{_lambda_.2} parent=5 // pred_check_branch
      %3228 = sbr.rel (%p3226) target = $region44
    $region43: #{_lambda_.2} parent=5 // pred_region
      %s3229 = ssub.s32 %s10, 2
      // Predicated region
      $region45: #{_lambda_.2} parent=43 // pred_check
        %p3230 = pneg %p128
      $region46: #{_lambda_.2} parent=43 // pred_check_branch
        %3232 = sbr.rel (%p3230) target = $region48
      $region47: #{_lambda_.2} parent=43 // pred_region
        %p3233 = scmp.lt.s32.totalorder %s16, 1
        %s3234 = scalar_select %p3233, %s16, 1
        %s3235 = smul.addr %s3234, 32
        %s3236 = smul.addr %s3235, 4
        %s3237 = scalar_lea.vmem %s4, %s3236
      $region48: #{_lambda_.2} parent=43 // pred_fallthru
        _
    $region44: #{_lambda_.2} parent=5 // pred_fallthru
      _
  $region6: #{_lambda_.2} parent=0 // loop_footer
    %s14 = sadd.s32 1, %s10
  $region7: #{_lambda_.2} parent=0 // loop_footer_branch
    %9 = sbr.rel target = $region3
  $region8: #{_lambda_.2} parent=0 // loop_exit
    _

</llo_original>
